<compile_context>
chip_gen: v7x
topology: tpu7x:2x2x1
jax: 0.10.0
libtpu: 0.0.40
codegen_flags: <defaults>
</compile_context>

<pallas_src>
import functools

import jax
import jax.numpy as jnp
from jax import lax
from jax.experimental import pallas as pl
from jax.experimental.pallas import tpu as pltpu

LRELU_SLOPE = 0.1


def _resblock1_kernel(x_hbm, w_ref, b_ref, o_ref, xbuf, pad, sem, *,
                      dilations, kernel_size, t_tile, halo, maxpad, t_total):
    # x_hbm : [B, T + 2*halo, C] f32 in HBM (manual halo'd DMA windows)
    # w_ref : [2*len(dilations), K, C_in, C_out] bf16, VMEM-resident
    # b_ref : [2*len(dilations), 1, C] f32, VMEM-resident
    # o_ref : [1, t_tile, C]
    # xbuf  : [2, t_ext, C] f32 double-buffered input window
    # pad   : [t_ext + 2*maxpad, C] f32 zero-halo'd conv-input scratch
    b = pl.program_id(0)
    t = pl.program_id(1)
    nt = pl.num_programs(1)

    t_ext = t_tile + 2 * halo
    C = o_ref.shape[-1]
    half = (kernel_size - 1) // 2

    def copy_desc(tile_idx, slot):
        start = tile_idx * t_tile
        return pltpu.make_async_copy(
            x_hbm.at[b, pl.ds(start, t_ext), :], xbuf.at[slot], sem.at[slot])

    # Prime the double buffer at the first time-tile of every batch row
    # (correct under any megacore sharding of the parallel batch axis).
    @pl.when(t == 0)
    def _():
        copy_desc(0, 0).start()

    slot = t % 2

    # Zero the tap-halo rows of the conv-input scratch: a zero conv input is
    # exactly the module's zero "same" padding (and lrelu(0) == 0).
    zrows = jnp.zeros((maxpad, C), jnp.float32)
    pad[pl.ds(0, maxpad), :] = zrows
    pad[pl.ds(maxpad + t_ext, maxpad), :] = zrows

    # Rows of this extended tile lying outside the real sequence must act as
    # zero padding for every conv (only matters on the first / last tile).
    row = lax.broadcasted_iota(jnp.int32, (t_ext, 1), 0) + t * t_tile
    valid = jnp.logical_and(row >= halo, row < t_total + halo)

    # Wait for this tile's window, then prefetch the next one.
    copy_desc(t, slot).wait()

    @pl.when(t + 1 < nt)
    def _():
        copy_desc(t + 1, 1 - slot).start()

    def lrelu(v):
        # slope < 1  =>  max(v, slope*v) == leaky_relu(v, slope)
        return jnp.maximum(v, LRELU_SLOPE * v)

    def conv_same(layer, d):
        # out = sum_k shift(act, (k-half)*d) @ W[layer, k] + bias
        # bf16 MXU operands, f32 accumulation; shifts are free scratch slices.
        acc = None
        for k in range(kernel_size):
            tap = pad[pl.ds(maxpad + (k - half) * d, t_ext), :]
            p = jnp.dot(tap.astype(jnp.bfloat16), w_ref[layer, k],
                        preferred_element_type=jnp.float32)
            acc = p if acc is None else acc + p
        return acc + b_ref[layer]          # [1, C] broadcasts over rows

    xcur = xbuf[slot]                      # [t_ext, C] f32 residual stream
    for i, d in enumerate(dilations):
        a = lrelu(xcur)
        pad[pl.ds(maxpad, t_ext), :] = jnp.where(valid, a, 0.0)
        h = conv_same(2 * i, d)            # convs1[i], dilation d
        a = lrelu(h)
        pad[pl.ds(maxpad, t_ext), :] = jnp.where(valid, a, 0.0)
        h = conv_same(2 * i + 1, 1)        # convs2[i], dilation 1
        xcur = xcur + h                    # residual
    # TODO(synk): for very large t_tile stage the residual stream through a VMEM
    # scratch ref between stages to bound vreg spill traffic.

    o_ref[0] = xcur[halo:halo + t_tile, :].astype(o_ref.dtype)


def resblock1_forward(x_btc, w_stacked_bf16, b_stacked, dilations=(1, 3, 5),
                      t_tile=64):
    """Fused ResBlock1 forward.

    x_btc          : [B, T, C] f32, channels-last layout (transpose of PyTorch's
                     [B, C, T]; keep the surrounding model channels-last).
    w_stacked_bf16 : [2*len(dilations), K, C_in, C_out] effective (post weight/
                     spectral norm) conv weights in bf16, layer order
                     c1_0, c2_0, c1_1, c2_1, c1_2, c2_2.
    b_stacked      : [2*len(dilations), 1, C] f32 biases.
    t_tile         : time tile (multiple of 8, divides T).  For real shapes pick
                     the largest tile fitting the per-generation VMEM budget
                     (~48 MiB usable on v7x's 64 MiB, up to ~100 MiB on v5e/v6e).
    """
    B, T, C = x_btc.shape
    n_layers, K = w_stacked_bf16.shape[0], w_stacked_bf16.shape[1]
    half = (K - 1) // 2
    # Receptive field of the whole block per side: sum_i half*(d_i + 1) = 12.
    halo = sum(half * (d + 1) for d in dilations)
    max_reach = half * max(max(dilations), 1)
    maxpad = ((max_reach + 7) // 8) * 8      # sublane-aligned tap halo
    assert T % t_tile == 0 and t_tile % 8 == 0
    nt = T // t_tile
    t_ext = t_tile + 2 * halo

    # Zero-padded HBM copy so every tile's halo'd DMA window is in bounds and
    # sequence edges see zeros.
    x_pad = jnp.pad(x_btc, ((0, 0), (halo, halo), (0, 0)))

    kernel = functools.partial(
        _resblock1_kernel, dilations=tuple(dilations), kernel_size=K,
        t_tile=t_tile, halo=halo, maxpad=maxpad, t_total=T)

    flops = 2 * B * T * C * C * K * n_layers
    bytes_accessed = (4 * 2 * B * T * C          # x in + out (f32)
                      + 2 * n_layers * K * C * C  # bf16 weights, fetched once
                      + 4 * n_layers * C)         # biases

    return pl.pallas_call(
        kernel,
        out_shape=jax.ShapeDtypeStruct((B, T, C), x_btc.dtype),
        grid_spec=pltpu.PrefetchScalarGridSpec(
            num_scalar_prefetch=0,
            grid=(B, nt),
            in_specs=[
                pl.BlockSpec(memory_space=pl.ANY),                       # x (HBM)
                pl.BlockSpec((n_layers, K, C, C), lambda b, t: (0, 0, 0, 0)),  # W resident
                pl.BlockSpec((n_layers, 1, C), lambda b, t: (0, 0, 0)),        # bias resident
            ],
            out_specs=pl.BlockSpec((1, t_tile, C), lambda b, t: (b, t, 0)),
            scratch_shapes=[
                pltpu.VMEM((2, t_ext, C), jnp.float32),             # halo'd x window (double buffer)
                pltpu.VMEM((t_ext + 2 * maxpad, C), jnp.float32),   # zero-halo'd conv-input scratch
                pltpu.SemaphoreType.DMA((2,)),
            ]),
        compiler_params=pltpu.CompilerParams(
            # batch parallel (megacore); time sequential because of the
            # cross-step prefetch.  For B==1 on v7x flip time to "parallel"
            # and fetch per-step.
            dimension_semantics=("parallel", "arbitrary"),
            vmem_limit_bytes=64 * 1024 * 1024,  # re-derive t_tile per generation
        ),
        cost_estimate=pl.CostEstimate(
            flops=flops, transcendentals=0, bytes_accessed=bytes_accessed),
    )(x_pad, w_stacked_bf16, b_stacked)


if __name__ == "__main__":
    key = jax.random.PRNGKey(0)
    B, C, T = 2, 128, 128         # small demo; C lane-dense (multiple of 128)
    K = 3
    dilations = (1, 3, 5)
    n_layers = 2 * len(dilations)

    keys = jax.random.split(key, 1 + 2 * n_layers)
    # Channels-last activations (transpose of PyTorch's [B, C, T]).
    x = jax.random.normal(keys[0], (B, T, C), dtype=jnp.float32)

    # Deterministic effective (post weight-norm) conv params, PyTorch layout:
    # weight [C_out, C_in, K] with init std=0.01 (init_weights), bias [C].
    ws, bs = [], []
    for l in range(n_layers):
        ws.append(jax.random.normal(keys[1 + 2 * l], (C, C, K), jnp.float32) * 0.01)
        bs.append(jax.random.normal(keys[2 + 2 * l], (C,), jnp.float32) * 0.01)

    # Pack for the kernel: [C_out, C_in, K] -> [K, C_in, C_out]; bf16 MXU weights.
    w_stacked_f32 = jnp.stack([jnp.transpose(w, (2, 1, 0)) for w in ws], axis=0)
    w_stacked = w_stacked_f32.astype(jnp.bfloat16)
    b_stacked = jnp.stack(bs, axis=0).reshape(n_layers, 1, C)

    out = resblock1_forward(x, w_stacked, b_stacked, dilations, t_tile=64)
    out = jax.block_until_ready(out)

    # Independent reference: XLA dilated convolutions, f32 / HIGHEST precision,
    # same channels-last layout.
    def ref_forward(xi):
        def conv(v, w_kio, bias, d):
            p = d * (K - 1) // 2
            y = lax.conv_general_dilated(
                v, w_kio, window_strides=(1,), padding=[(p, p)],
                rhs_dilation=(d,), dimension_numbers=("NHC", "HIO", "NHC"),
                precision=lax.Precision.HIGHEST)
            return y + bias[None, None, :]

        o = xi
        for i, d in enumerate(dilations):
            xt = jnp.maximum(o, LRELU_SLOPE * o)
            xt = conv(xt, w_stacked_f32[2 * i], bs[2 * i], d)
            xt = jnp.maximum(xt, LRELU_SLOPE * xt)
            xt = conv(xt, w_stacked_f32[2 * i + 1], bs[2 * i + 1], 1)
            o = xt + o
        return o

    ref = ref_forward(x)
    assert out.shape == (B, T, C)
    max_err = jnp.max(jnp.abs(out - ref))
    # bf16 MXU operands with f32 accumulation -> loosened tolerance vs f32 ref.
    assert jnp.allclose(out, ref, atol=3e-2, rtol=3e-2), (
        f"mismatch vs reference, max abs err {max_err}")
    print("KERNEL_OK")
</pallas_src>

<mosaic_0001>
module attributes {stable_mosaic.version = 11 : i64} {
  func.func @_resblock1_kernel(%arg0: i32, %arg1: i32, %arg2: memref<2x152x128xf32, #tpu.memory_space<any>>, %arg3: memref<6x3x128x128xbf16, #tpu.memory_space<vmem>>, %arg4: memref<6x1x128xf32, #tpu.memory_space<vmem>>, %arg5: memref<1x64x128xf32, #tpu.memory_space<vmem>>, %arg6: memref<2x88x128xf32, #tpu.memory_space<vmem>>, %arg7: memref<104x128xf32, #tpu.memory_space<vmem>>, %arg8: memref<2x!tpu.dma_semaphore, #tpu.memory_space<semaphore_mem>>) attributes {dimension_semantics = [#tpu.dimension_semantics<parallel>, #tpu.dimension_semantics<arbitrary>], iteration_bounds = array<i64: 2, 2>, scalar_prefetch = 0 : i64, scratch_operands = 3 : i64, tpu.core_type = #tpu.core_type<tc>, window_params = [{}, {pipeline_mode = #tpu.pipeline_mode<synchronous>, transform_indices = @transform_1, window_bounds = array<i64: 6, 3, 128, 128>}, {pipeline_mode = #tpu.pipeline_mode<synchronous>, transform_indices = @transform_2, window_bounds = array<i64: 6, 1, 128>}, {transform_indices = @transform_3, window_bounds = array<i64: 1, 64, 128>}]} {
    %c0_i32 = arith.constant 0 : i32
    %0 = arith.cmpi eq, %arg1, %c0_i32 : i32
    %1 = arith.extui %0 : i1 to i32
    %c0_i32_0 = arith.constant 0 : i32
    %2 = arith.cmpi ne, %1, %c0_i32_0 : i32
    scf.if %2 {
      %c0_i32_177 = arith.constant 0 : i32
      %c0_i32_178 = arith.constant 0 : i32
      %c0_i32_179 = arith.constant 0 : i32
      %c0_i32_180 = arith.constant 0 : i32
      %220 = tpu.memref_slice %arg2[%arg0, %c0_i32_179, %c0_i32_180] : memref<2x152x128xf32, #tpu.memory_space<any>> -> memref<1x88x128xf32, #tpu.memory_space<any>>
      %221 = tpu.memref_squeeze %220 : memref<1x88x128xf32, #tpu.memory_space<any>> -> memref<88x128xf32, #tpu.memory_space<any>>
      %c0_i32_181 = arith.constant 0 : i32
      %c0_i32_182 = arith.constant 0 : i32
      %222 = tpu.memref_slice %arg6[%c0_i32_177, %c0_i32_181, %c0_i32_182] : memref<2x88x128xf32, #tpu.memory_space<vmem>> -> memref<1x88x128xf32, #tpu.memory_space<vmem>>
      %223 = tpu.memref_squeeze %222 : memref<1x88x128xf32, #tpu.memory_space<vmem>> -> memref<88x128xf32, #tpu.memory_space<vmem>>
      %224 = tpu.memref_slice %arg8[%c0_i32_178] : memref<2x!tpu.dma_semaphore, #tpu.memory_space<semaphore_mem>> -> memref<1x!tpu.dma_semaphore, #tpu.memory_space<semaphore_mem>>
      %225 = tpu.memref_squeeze %224 : memref<1x!tpu.dma_semaphore, #tpu.memory_space<semaphore_mem>> -> memref<!tpu.dma_semaphore, #tpu.memory_space<semaphore_mem>>
      tpu.enqueue_dma source(%221 : memref<88x128xf32, #tpu.memory_space<any>>) target(%223 : memref<88x128xf32, #tpu.memory_space<vmem>>) target_semaphore(%225 : memref<!tpu.dma_semaphore, #tpu.memory_space<semaphore_mem>>)
    } else {
    }
    %c2_i32 = arith.constant 2 : i32
    %c0_i32_1 = arith.constant 0 : i32
    %3 = arith.cmpi eq, %c2_i32, %c0_i32_1 : i32
    %c1_i32 = arith.constant 1 : i32
    %4 = arith.select %3, %c1_i32, %c2_i32 : i32
    %5 = arith.remsi %arg1, %4 : i32
    %c0_i32_2 = arith.constant 0 : i32
    %6 = arith.cmpi ne, %5, %c0_i32_2 : i32
    %c0_i32_3 = arith.constant 0 : i32
    %7 = arith.cmpi slt, %5, %c0_i32_3 : i32
    %c0_i32_4 = arith.constant 0 : i32
    %8 = arith.cmpi slt, %4, %c0_i32_4 : i32
    %9 = arith.xori %7, %8 : i1
    %10 = arith.andi %9, %6 : i1
    %11 = arith.addi %5, %4 : i32
    %12 = arith.select %10, %11, %5 : i32
    %cst = arith.constant 0.000000e+00 : f32
    %13 = vector.broadcast %cst : f32 to vector<8x128xf32>
    %c0 = arith.constant 0 : index
    %c0_5 = arith.constant 0 : index
    %14 = vector.load %arg7[%c0, %c0_5] : memref<104x128xf32, #tpu.memory_space<vmem>>, vector<8x128xf32>
    tpu.vector_store %arg7[%c0, %c0_5], %13 {strides = array<i32>} : memref<104x128xf32, #tpu.memory_space<vmem>>, vector<8x128xf32>,
    %c96 = arith.constant 96 : index
    %c0_6 = arith.constant 0 : index
    %15 = vector.load %arg7[%c96, %c0_6] : memref<104x128xf32, #tpu.memory_space<vmem>>, vector<8x128xf32>
    tpu.vector_store %arg7[%c96, %c0_6], %13 {strides = array<i32>} : memref<104x128xf32, #tpu.memory_space<vmem>>, vector<8x128xf32>,
    %16 = tpu.iota {dimensions = array<i32: 0>} : vector<88x1xi32>
    %c64_i32 = arith.constant 64 : i32
    %17 = arith.muli %arg1, %c64_i32 : i32
    %18 = vector.broadcast %17 : i32 to vector<88x1xi32>
    %19 = arith.addi %16, %18 : vector<88x1xi32>
    %c12_i32 = arith.constant 12 : i32
    %20 = vector.broadcast %c12_i32 : i32 to vector<88x1xi32>
    %21 = arith.cmpi sge, %19, %20 : vector<88x1xi32>
    %c140_i32 = arith.constant 140 : i32
    %22 = vector.broadcast %c140_i32 : i32 to vector<88x1xi32>
    %23 = arith.cmpi slt, %19, %22 : vector<88x1xi32>
    %24 = arith.andi %21, %23 : vector<88x1xi1>
    %c64_i32_7 = arith.constant 64 : i32
    %25 = arith.muli %arg1, %c64_i32_7 : i32
    %c0_i32_8 = arith.constant 0 : i32
    %26 = tpu.memref_slice %arg2[%arg0, %25, %c0_i32_8] : memref<2x152x128xf32, #tpu.memory_space<any>> -> memref<1x88x128xf32, #tpu.memory_space<any>>
    %27 = tpu.memref_squeeze %26 : memref<1x88x128xf32, #tpu.memory_space<any>> -> memref<88x128xf32, #tpu.memory_space<any>>
    %c0_i32_9 = arith.constant 0 : i32
    %c0_i32_10 = arith.constant 0 : i32
    %28 = tpu.memref_slice %arg6[%12, %c0_i32_9, %c0_i32_10] : memref<2x88x128xf32, #tpu.memory_space<vmem>> -> memref<1x88x128xf32, #tpu.memory_space<vmem>>
    %29 = tpu.memref_squeeze %28 : memref<1x88x128xf32, #tpu.memory_space<vmem>> -> memref<88x128xf32, #tpu.memory_space<vmem>>
    %30 = tpu.memref_slice %arg8[%12] : memref<2x!tpu.dma_semaphore, #tpu.memory_space<semaphore_mem>> -> memref<1x!tpu.dma_semaphore, #tpu.memory_space<semaphore_mem>>
    %31 = tpu.memref_squeeze %30 : memref<1x!tpu.dma_semaphore, #tpu.memory_space<semaphore_mem>> -> memref<!tpu.dma_semaphore, #tpu.memory_space<semaphore_mem>>
    tpu.wait_dma2 semaphore(%31 : memref<!tpu.dma_semaphore, #tpu.memory_space<semaphore_mem>>) src(%27 : memref<88x128xf32, #tpu.memory_space<any>>) dst(%29 : memref<88x128xf32, #tpu.memory_space<vmem>>)
    %c1_i32_11 = arith.constant 1 : i32
    %32 = arith.addi %arg1, %c1_i32_11 : i32
    %c2_i32_12 = arith.constant 2 : i32
    %33 = arith.cmpi slt, %32, %c2_i32_12 : i32
    %34 = arith.extui %33 : i1 to i32
    %c0_i32_13 = arith.constant 0 : i32
    %35 = arith.cmpi ne, %34, %c0_i32_13 : i32
    scf.if %35 {
      %c1_i32_177 = arith.constant 1 : i32
      %220 = arith.addi %arg1, %c1_i32_177 : i32
      %c1_i32_178 = arith.constant 1 : i32
      %221 = arith.subi %c1_i32_178, %12 : i32
      %c64_i32_179 = arith.constant 64 : i32
      %222 = arith.muli %220, %c64_i32_179 : i32
      %c0_i32_180 = arith.constant 0 : i32
      %223 = tpu.memref_slice %arg2[%arg0, %222, %c0_i32_180] : memref<2x152x128xf32, #tpu.memory_space<any>> -> memref<1x88x128xf32, #tpu.memory_space<any>>
      %224 = tpu.memref_squeeze %223 : memref<1x88x128xf32, #tpu.memory_space<any>> -> memref<88x128xf32, #tpu.memory_space<any>>
      %c0_i32_181 = arith.constant 0 : i32
      %c0_i32_182 = arith.constant 0 : i32
      %225 = tpu.memref_slice %arg6[%221, %c0_i32_181, %c0_i32_182] : memref<2x88x128xf32, #tpu.memory_space<vmem>> -> memref<1x88x128xf32, #tpu.memory_space<vmem>>
      %226 = tpu.memref_squeeze %225 : memref<1x88x128xf32, #tpu.memory_space<vmem>> -> memref<88x128xf32, #tpu.memory_space<vmem>>
      %227 = tpu.memref_slice %arg8[%221] : memref<2x!tpu.dma_semaphore, #tpu.memory_space<semaphore_mem>> -> memref<1x!tpu.dma_semaphore, #tpu.memory_space<semaphore_mem>>
      %228 = tpu.memref_squeeze %227 : memref<1x!tpu.dma_semaphore, #tpu.memory_space<semaphore_mem>> -> memref<!tpu.dma_semaphore, #tpu.memory_space<semaphore_mem>>
      tpu.enqueue_dma source(%224 : memref<88x128xf32, #tpu.memory_space<any>>) target(%226 : memref<88x128xf32, #tpu.memory_space<vmem>>) target_semaphore(%228 : memref<!tpu.dma_semaphore, #tpu.memory_space<semaphore_mem>>)
    } else {
    }
    %36 = arith.index_cast %12 : i32 to index
    %c0_14 = arith.constant 0 : index
    %c0_15 = arith.constant 0 : index
    %37 = vector.load %arg6[%36, %c0_14, %c0_15] : memref<2x88x128xf32, #tpu.memory_space<vmem>>, vector<1x88x128xf32>
    %38 = vector.shape_cast %37 : vector<1x88x128xf32> to vector<88x128xf32>
    %cst_16 = arith.constant 1.000000e-01 : f32
    %39 = vector.broadcast %cst_16 : f32 to vector<88x128xf32>
    %40 = arith.mulf %39, %38 : vector<88x128xf32>
    %41 = arith.maximumf %38, %40 : vector<88x128xf32>
    %cst_17 = arith.constant 0.000000e+00 : f32
    %42 = vector.shape_cast %24 : vector<88x1xi1> to vector<88x1xi1>
    %43 = vector.broadcast %42 : vector<88x1xi1> to vector<88x128xi1>
    %44 = vector.broadcast %cst_17 : f32 to vector<88x128xf32>
    %45 = arith.select %43, %41, %44 : vector<88x128xi1>, vector<88x128xf32>
    %c8 = arith.constant 8 : index
    %c0_18 = arith.constant 0 : index
    %46 = vector.load %arg7[%c8, %c0_18] : memref<104x128xf32, #tpu.memory_space<vmem>>, vector<88x128xf32>
    tpu.vector_store %arg7[%c8, %c0_18], %45 {strides = array<i32>} : memref<104x128xf32, #tpu.memory_space<vmem>>, vector<88x128xf32>,
    %c7 = arith.constant 7 : index
    %c0_19 = arith.constant 0 : index
    %47 = vector.load %arg7[%c7, %c0_19] : memref<104x128xf32, #tpu.memory_space<vmem>>, vector<88x128xf32>
    %48 = arith.truncf %47 : vector<88x128xf32> to vector<88x128xbf16>
    %c0_20 = arith.constant 0 : index
    %c0_21 = arith.constant 0 : index
    %c0_22 = arith.constant 0 : index
    %c0_23 = arith.constant 0 : index
    %49 = vector.load %arg3[%c0_20, %c0_21, %c0_22, %c0_23] : memref<6x3x128x128xbf16, #tpu.memory_space<vmem>>, vector<1x1x128x128xbf16>
    %50 = vector.shape_cast %49 : vector<1x1x128x128xbf16> to vector<128x128xbf16>
    %cst_24 = arith.constant dense<0.000000e+00> : vector<88x128xf32>
    %51 = tpu.matmul %48, %50, %cst_24 {dimension_numbers = #tpu.dot_dimension_numbers<[1], [0], [0], [1], [0, 0, 1, 1], [], []>} : vector<88x128xbf16>, vector<128x128xbf16>, vector<88x128xf32> -> vector<88x128xf32>
    %c8_25 = arith.constant 8 : index
    %c0_26 = arith.constant 0 : index
    %52 = vector.load %arg7[%c8_25, %c0_26] : memref<104x128xf32, #tpu.memory_space<vmem>>, vector<88x128xf32>
    %53 = arith.truncf %52 : vector<88x128xf32> to vector<88x128xbf16>
    %c0_27 = arith.constant 0 : index
    %c1 = arith.constant 1 : index
    %c0_28 = arith.constant 0 : index
    %c0_29 = arith.constant 0 : index
    %54 = vector.load %arg3[%c0_27, %c1, %c0_28, %c0_29] : memref<6x3x128x128xbf16, #tpu.memory_space<vmem>>, vector<1x1x128x128xbf16>
    %55 = vector.shape_cast %54 : vector<1x1x128x128xbf16> to vector<128x128xbf16>
    %cst_30 = arith.constant dense<0.000000e+00> : vector<88x128xf32>
    %56 = tpu.matmul %53, %55, %cst_30 {dimension_numbers = #tpu.dot_dimension_numbers<[1], [0], [0], [1], [0, 0, 1, 1], [], []>} : vector<88x128xbf16>, vector<128x128xbf16>, vector<88x128xf32> -> vector<88x128xf32>
    %57 = arith.addf %51, %56 : vector<88x128xf32>
    %c9 = arith.constant 9 : index
    %c0_31 = arith.constant 0 : index
    %58 = vector.load %arg7[%c9, %c0_31] : memref<104x128xf32, #tpu.memory_space<vmem>>, vector<88x128xf32>
    %59 = arith.truncf %58 : vector<88x128xf32> to vector<88x128xbf16>
    %c0_32 = arith.constant 0 : index
    %c2 = arith.constant 2 : index
    %c0_33 = arith.constant 0 : index
    %c0_34 = arith.constant 0 : index
    %60 = vector.load %arg3[%c0_32, %c2, %c0_33, %c0_34] : memref<6x3x128x128xbf16, #tpu.memory_space<vmem>>, vector<1x1x128x128xbf16>
    %61 = vector.shape_cast %60 : vector<1x1x128x128xbf16> to vector<128x128xbf16>
    %cst_35 = arith.constant dense<0.000000e+00> : vector<88x128xf32>
    %62 = tpu.matmul %59, %61, %cst_35 {dimension_numbers = #tpu.dot_dimension_numbers<[1], [0], [0], [1], [0, 0, 1, 1], [], []>} : vector<88x128xbf16>, vector<128x128xbf16>, vector<88x128xf32> -> vector<88x128xf32>
    %63 = arith.addf %57, %62 : vector<88x128xf32>
    %c0_36 = arith.constant 0 : index
    %c0_37 = arith.constant 0 : index
    %c0_38 = arith.constant 0 : index
    %64 = vector.load %arg4[%c0_36, %c0_37, %c0_38] : memref<6x1x128xf32, #tpu.memory_space<vmem>>, vector<1x1x128xf32>
    %65 = vector.shape_cast %64 : vector<1x1x128xf32> to vector<1x128xf32>
    %66 = vector.broadcast %65 : vector<1x128xf32> to vector<88x128xf32>
    %67 = arith.addf %63, %66 : vector<88x128xf32>
    %cst_39 = arith.constant 1.000000e-01 : f32
    %68 = vector.broadcast %cst_39 : f32 to vector<88x128xf32>
    %69 = arith.mulf %68, %67 : vector<88x128xf32>
    %70 = arith.maximumf %67, %69 : vector<88x128xf32>
    %cst_40 = arith.constant 0.000000e+00 : f32
    %71 = vector.shape_cast %24 : vector<88x1xi1> to vector<88x1xi1>
    %72 = vector.broadcast %71 : vector<88x1xi1> to vector<88x128xi1>
    %73 = vector.broadcast %cst_40 : f32 to vector<88x128xf32>
    %74 = arith.select %72, %70, %73 : vector<88x128xi1>, vector<88x128xf32>
    %c8_41 = arith.constant 8 : index
    %c0_42 = arith.constant 0 : index
    %75 = vector.load %arg7[%c8_41, %c0_42] : memref<104x128xf32, #tpu.memory_space<vmem>>, vector<88x128xf32>
    tpu.vector_store %arg7[%c8_41, %c0_42], %74 {strides = array<i32>} : memref<104x128xf32, #tpu.memory_space<vmem>>, vector<88x128xf32>,
    %c7_43 = arith.constant 7 : index
    %c0_44 = arith.constant 0 : index
    %76 = vector.load %arg7[%c7_43, %c0_44] : memref<104x128xf32, #tpu.memory_space<vmem>>, vector<88x128xf32>
    %77 = arith.truncf %76 : vector<88x128xf32> to vector<88x128xbf16>
    %c1_45 = arith.constant 1 : index
    %c0_46 = arith.constant 0 : index
    %c0_47 = arith.constant 0 : index
    %c0_48 = arith.constant 0 : index
    %78 = vector.load %arg3[%c1_45, %c0_46, %c0_47, %c0_48] : memref<6x3x128x128xbf16, #tpu.memory_space<vmem>>, vector<1x1x128x128xbf16>
    %79 = vector.shape_cast %78 : vector<1x1x128x128xbf16> to vector<128x128xbf16>
    %cst_49 = arith.constant dense<0.000000e+00> : vector<88x128xf32>
    %80 = tpu.matmul %77, %79, %cst_49 {dimension_numbers = #tpu.dot_dimension_numbers<[1], [0], [0], [1], [0, 0, 1, 1], [], []>} : vector<88x128xbf16>, vector<128x128xbf16>, vector<88x128xf32> -> vector<88x128xf32>
    %c8_50 = arith.constant 8 : index
    %c0_51 = arith.constant 0 : index
    %81 = vector.load %arg7[%c8_50, %c0_51] : memref<104x128xf32, #tpu.memory_space<vmem>>, vector<88x128xf32>
    %82 = arith.truncf %81 : vector<88x128xf32> to vector<88x128xbf16>
    %c1_52 = arith.constant 1 : index
    %c1_53 = arith.constant 1 : index
    %c0_54 = arith.constant 0 : index
    %c0_55 = arith.constant 0 : index
    %83 = vector.load %arg3[%c1_52, %c1_53, %c0_54, %c0_55] : memref<6x3x128x128xbf16, #tpu.memory_space<vmem>>, vector<1x1x128x128xbf16>
    %84 = vector.shape_cast %83 : vector<1x1x128x128xbf16> to vector<128x128xbf16>
    %cst_56 = arith.constant dense<0.000000e+00> : vector<88x128xf32>
    %85 = tpu.matmul %82, %84, %cst_56 {dimension_numbers = #tpu.dot_dimension_numbers<[1], [0], [0], [1], [0, 0, 1, 1], [], []>} : vector<88x128xbf16>, vector<128x128xbf16>, vector<88x128xf32> -> vector<88x128xf32>
    %86 = arith.addf %80, %85 : vector<88x128xf32>
    %c9_57 = arith.constant 9 : index
    %c0_58 = arith.constant 0 : index
    %87 = vector.load %arg7[%c9_57, %c0_58] : memref<104x128xf32, #tpu.memory_space<vmem>>, vector<88x128xf32>
    %88 = arith.truncf %87 : vector<88x128xf32> to vector<88x128xbf16>
    %c1_59 = arith.constant 1 : index
    %c2_60 = arith.constant 2 : index
    %c0_61 = arith.constant 0 : index
    %c0_62 = arith.constant 0 : index
    %89 = vector.load %arg3[%c1_59, %c2_60, %c0_61, %c0_62] : memref<6x3x128x128xbf16, #tpu.memory_space<vmem>>, vector<1x1x128x128xbf16>
    %90 = vector.shape_cast %89 : vector<1x1x128x128xbf16> to vector<128x128xbf16>
    %cst_63 = arith.constant dense<0.000000e+00> : vector<88x128xf32>
    %91 = tpu.matmul %88, %90, %cst_63 {dimension_numbers = #tpu.dot_dimension_numbers<[1], [0], [0], [1], [0, 0, 1, 1], [], []>} : vector<88x128xbf16>, vector<128x128xbf16>, vector<88x128xf32> -> vector<88x128xf32>
    %92 = arith.addf %86, %91 : vector<88x128xf32>
    %c1_64 = arith.constant 1 : index
    %c0_65 = arith.constant 0 : index
    %c0_66 = arith.constant 0 : index
    %93 = vector.load %arg4[%c1_64, %c0_65, %c0_66] : memref<6x1x128xf32, #tpu.memory_space<vmem>>, vector<1x1x128xf32>
    %94 = vector.shape_cast %93 : vector<1x1x128xf32> to vector<1x128xf32>
    %95 = vector.broadcast %94 : vector<1x128xf32> to vector<88x128xf32>
    %96 = arith.addf %92, %95 : vector<88x128xf32>
    %97 = arith.addf %38, %96 : vector<88x128xf32>
    %cst_67 = arith.constant 1.000000e-01 : f32
    %98 = vector.broadcast %cst_67 : f32 to vector<88x128xf32>
    %99 = arith.mulf %98, %97 : vector<88x128xf32>
    %100 = arith.maximumf %97, %99 : vector<88x128xf32>
    %cst_68 = arith.constant 0.000000e+00 : f32
    %101 = vector.shape_cast %24 : vector<88x1xi1> to vector<88x1xi1>
    %102 = vector.broadcast %101 : vector<88x1xi1> to vector<88x128xi1>
    %103 = vector.broadcast %cst_68 : f32 to vector<88x128xf32>
    %104 = arith.select %102, %100, %103 : vector<88x128xi1>, vector<88x128xf32>
    %c8_69 = arith.constant 8 : index
    %c0_70 = arith.constant 0 : index
    %105 = vector.load %arg7[%c8_69, %c0_70] : memref<104x128xf32, #tpu.memory_space<vmem>>, vector<88x128xf32>
    tpu.vector_store %arg7[%c8_69, %c0_70], %104 {strides = array<i32>} : memref<104x128xf32, #tpu.memory_space<vmem>>, vector<88x128xf32>,
    %c5 = arith.constant 5 : index
    %c0_71 = arith.constant 0 : index
    %106 = vector.load %arg7[%c5, %c0_71] : memref<104x128xf32, #tpu.memory_space<vmem>>, vector<88x128xf32>
    %107 = arith.truncf %106 : vector<88x128xf32> to vector<88x128xbf16>
    %c2_72 = arith.constant 2 : index
    %c0_73 = arith.constant 0 : index
    %c0_74 = arith.constant 0 : index
    %c0_75 = arith.constant 0 : index
    %108 = vector.load %arg3[%c2_72, %c0_73, %c0_74, %c0_75] : memref<6x3x128x128xbf16, #tpu.memory_space<vmem>>, vector<1x1x128x128xbf16>
    %109 = vector.shape_cast %108 : vector<1x1x128x128xbf16> to vector<128x128xbf16>
    %cst_76 = arith.constant dense<0.000000e+00> : vector<88x128xf32>
    %110 = tpu.matmul %107, %109, %cst_76 {dimension_numbers = #tpu.dot_dimension_numbers<[1], [0], [0], [1], [0, 0, 1, 1], [], []>} : vector<88x128xbf16>, vector<128x128xbf16>, vector<88x128xf32> -> vector<88x128xf32>
    %c8_77 = arith.constant 8 : index
    %c0_78 = arith.constant 0 : index
    %111 = vector.load %arg7[%c8_77, %c0_78] : memref<104x128xf32, #tpu.memory_space<vmem>>, vector<88x128xf32>
    %112 = arith.truncf %111 : vector<88x128xf32> to vector<88x128xbf16>
    %c2_79 = arith.constant 2 : index
    %c1_80 = arith.constant 1 : index
    %c0_81 = arith.constant 0 : index
    %c0_82 = arith.constant 0 : index
    %113 = vector.load %arg3[%c2_79, %c1_80, %c0_81, %c0_82] : memref<6x3x128x128xbf16, #tpu.memory_space<vmem>>, vector<1x1x128x128xbf16>
    %114 = vector.shape_cast %113 : vector<1x1x128x128xbf16> to vector<128x128xbf16>
    %cst_83 = arith.constant dense<0.000000e+00> : vector<88x128xf32>
    %115 = tpu.matmul %112, %114, %cst_83 {dimension_numbers = #tpu.dot_dimension_numbers<[1], [0], [0], [1], [0, 0, 1, 1], [], []>} : vector<88x128xbf16>, vector<128x128xbf16>, vector<88x128xf32> -> vector<88x128xf32>
    %116 = arith.addf %110, %115 : vector<88x128xf32>
    %c11 = arith.constant 11 : index
    %c0_84 = arith.constant 0 : index
    %117 = vector.load %arg7[%c11, %c0_84] : memref<104x128xf32, #tpu.memory_space<vmem>>, vector<88x128xf32>
    %118 = arith.truncf %117 : vector<88x128xf32> to vector<88x128xbf16>
    %c2_85 = arith.constant 2 : index
    %c2_86 = arith.constant 2 : index
    %c0_87 = arith.constant 0 : index
    %c0_88 = arith.constant 0 : index
    %119 = vector.load %arg3[%c2_85, %c2_86, %c0_87, %c0_88] : memref<6x3x128x128xbf16, #tpu.memory_space<vmem>>, vector<1x1x128x128xbf16>
    %120 = vector.shape_cast %119 : vector<1x1x128x128xbf16> to vector<128x128xbf16>
    %cst_89 = arith.constant dense<0.000000e+00> : vector<88x128xf32>
    %121 = tpu.matmul %118, %120, %cst_89 {dimension_numbers = #tpu.dot_dimension_numbers<[1], [0], [0], [1], [0, 0, 1, 1], [], []>} : vector<88x128xbf16>, vector<128x128xbf16>, vector<88x128xf32> -> vector<88x128xf32>
    %122 = arith.addf %116, %121 : vector<88x128xf32>
    %c2_90 = arith.constant 2 : index
    %c0_91 = arith.constant 0 : index
    %c0_92 = arith.constant 0 : index
    %123 = vector.load %arg4[%c2_90, %c0_91, %c0_92] : memref<6x1x128xf32, #tpu.memory_space<vmem>>, vector<1x1x128xf32>
    %124 = vector.shape_cast %123 : vector<1x1x128xf32> to vector<1x128xf32>
    %125 = vector.broadcast %124 : vector<1x128xf32> to vector<88x128xf32>
    %126 = arith.addf %122, %125 : vector<88x128xf32>
    %cst_93 = arith.constant 1.000000e-01 : f32
    %127 = vector.broadcast %cst_93 : f32 to vector<88x128xf32>
    %128 = arith.mulf %127, %126 : vector<88x128xf32>
    %129 = arith.maximumf %126, %128 : vector<88x128xf32>
    %cst_94 = arith.constant 0.000000e+00 : f32
    %130 = vector.shape_cast %24 : vector<88x1xi1> to vector<88x1xi1>
    %131 = vector.broadcast %130 : vector<88x1xi1> to vector<88x128xi1>
    %132 = vector.broadcast %cst_94 : f32 to vector<88x128xf32>
    %133 = arith.select %131, %129, %132 : vector<88x128xi1>, vector<88x128xf32>
    %c8_95 = arith.constant 8 : index
    %c0_96 = arith.constant 0 : index
    %134 = vector.load %arg7[%c8_95, %c0_96] : memref<104x128xf32, #tpu.memory_space<vmem>>, vector<88x128xf32>
    tpu.vector_store %arg7[%c8_95, %c0_96], %133 {strides = array<i32>} : memref<104x128xf32, #tpu.memory_space<vmem>>, vector<88x128xf32>,
    %c7_97 = arith.constant 7 : index
    %c0_98 = arith.constant 0 : index
    %135 = vector.load %arg7[%c7_97, %c0_98] : memref<104x128xf32, #tpu.memory_space<vmem>>, vector<88x128xf32>
    %136 = arith.truncf %135 : vector<88x128xf32> to vector<88x128xbf16>
    %c3 = arith.constant 3 : index
    %c0_99 = arith.constant 0 : index
    %c0_100 = arith.constant 0 : index
    %c0_101 = arith.constant 0 : index
    %137 = vector.load %arg3[%c3, %c0_99, %c0_100, %c0_101] : memref<6x3x128x128xbf16, #tpu.memory_space<vmem>>, vector<1x1x128x128xbf16>
    %138 = vector.shape_cast %137 : vector<1x1x128x128xbf16> to vector<128x128xbf16>
    %cst_102 = arith.constant dense<0.000000e+00> : vector<88x128xf32>
    %139 = tpu.matmul %136, %138, %cst_102 {dimension_numbers = #tpu.dot_dimension_numbers<[1], [0], [0], [1], [0, 0, 1, 1], [], []>} : vector<88x128xbf16>, vector<128x128xbf16>, vector<88x128xf32> -> vector<88x128xf32>
    %c8_103 = arith.constant 8 : index
    %c0_104 = arith.constant 0 : index
    %140 = vector.load %arg7[%c8_103, %c0_104] : memref<104x128xf32, #tpu.memory_space<vmem>>, vector<88x128xf32>
    %141 = arith.truncf %140 : vector<88x128xf32> to vector<88x128xbf16>
    %c3_105 = arith.constant 3 : index
    %c1_106 = arith.constant 1 : index
    %c0_107 = arith.constant 0 : index
    %c0_108 = arith.constant 0 : index
    %142 = vector.load %arg3[%c3_105, %c1_106, %c0_107, %c0_108] : memref<6x3x128x128xbf16, #tpu.memory_space<vmem>>, vector<1x1x128x128xbf16>
    %143 = vector.shape_cast %142 : vector<1x1x128x128xbf16> to vector<128x128xbf16>
    %cst_109 = arith.constant dense<0.000000e+00> : vector<88x128xf32>
    %144 = tpu.matmul %141, %143, %cst_109 {dimension_numbers = #tpu.dot_dimension_numbers<[1], [0], [0], [1], [0, 0, 1, 1], [], []>} : vector<88x128xbf16>, vector<128x128xbf16>, vector<88x128xf32> -> vector<88x128xf32>
    %145 = arith.addf %139, %144 : vector<88x128xf32>
    %c9_110 = arith.constant 9 : index
    %c0_111 = arith.constant 0 : index
    %146 = vector.load %arg7[%c9_110, %c0_111] : memref<104x128xf32, #tpu.memory_space<vmem>>, vector<88x128xf32>
    %147 = arith.truncf %146 : vector<88x128xf32> to vector<88x128xbf16>
    %c3_112 = arith.constant 3 : index
    %c2_113 = arith.constant 2 : index
    %c0_114 = arith.constant 0 : index
    %c0_115 = arith.constant 0 : index
    %148 = vector.load %arg3[%c3_112, %c2_113, %c0_114, %c0_115] : memref<6x3x128x128xbf16, #tpu.memory_space<vmem>>, vector<1x1x128x128xbf16>
    %149 = vector.shape_cast %148 : vector<1x1x128x128xbf16> to vector<128x128xbf16>
    %cst_116 = arith.constant dense<0.000000e+00> : vector<88x128xf32>
    %150 = tpu.matmul %147, %149, %cst_116 {dimension_numbers = #tpu.dot_dimension_numbers<[1], [0], [0], [1], [0, 0, 1, 1], [], []>} : vector<88x128xbf16>, vector<128x128xbf16>, vector<88x128xf32> -> vector<88x128xf32>
    %151 = arith.addf %145, %150 : vector<88x128xf32>
    %c3_117 = arith.constant 3 : index
    %c0_118 = arith.constant 0 : index
    %c0_119 = arith.constant 0 : index
    %152 = vector.load %arg4[%c3_117, %c0_118, %c0_119] : memref<6x1x128xf32, #tpu.memory_space<vmem>>, vector<1x1x128xf32>
    %153 = vector.shape_cast %152 : vector<1x1x128xf32> to vector<1x128xf32>
    %154 = vector.broadcast %153 : vector<1x128xf32> to vector<88x128xf32>
    %155 = arith.addf %151, %154 : vector<88x128xf32>
    %156 = arith.addf %97, %155 : vector<88x128xf32>
    %cst_120 = arith.constant 1.000000e-01 : f32
    %157 = vector.broadcast %cst_120 : f32 to vector<88x128xf32>
    %158 = arith.mulf %157, %156 : vector<88x128xf32>
    %159 = arith.maximumf %156, %158 : vector<88x128xf32>
    %cst_121 = arith.constant 0.000000e+00 : f32
    %160 = vector.shape_cast %24 : vector<88x1xi1> to vector<88x1xi1>
    %161 = vector.broadcast %160 : vector<88x1xi1> to vector<88x128xi1>
    %162 = vector.broadcast %cst_121 : f32 to vector<88x128xf32>
    %163 = arith.select %161, %159, %162 : vector<88x128xi1>, vector<88x128xf32>
    %c8_122 = arith.constant 8 : index
    %c0_123 = arith.constant 0 : index
    %164 = vector.load %arg7[%c8_122, %c0_123] : memref<104x128xf32, #tpu.memory_space<vmem>>, vector<88x128xf32>
    tpu.vector_store %arg7[%c8_122, %c0_123], %163 {strides = array<i32>} : memref<104x128xf32, #tpu.memory_space<vmem>>, vector<88x128xf32>,
    %c3_124 = arith.constant 3 : index
    %c0_125 = arith.constant 0 : index
    %165 = vector.load %arg7[%c3_124, %c0_125] : memref<104x128xf32, #tpu.memory_space<vmem>>, vector<88x128xf32>
    %166 = arith.truncf %165 : vector<88x128xf32> to vector<88x128xbf16>
    %c4 = arith.constant 4 : index
    %c0_126 = arith.constant 0 : index
    %c0_127 = arith.constant 0 : index
    %c0_128 = arith.constant 0 : index
    %167 = vector.load %arg3[%c4, %c0_126, %c0_127, %c0_128] : memref<6x3x128x128xbf16, #tpu.memory_space<vmem>>, vector<1x1x128x128xbf16>
    %168 = vector.shape_cast %167 : vector<1x1x128x128xbf16> to vector<128x128xbf16>
    %cst_129 = arith.constant dense<0.000000e+00> : vector<88x128xf32>
    %169 = tpu.matmul %166, %168, %cst_129 {dimension_numbers = #tpu.dot_dimension_numbers<[1], [0], [0], [1], [0, 0, 1, 1], [], []>} : vector<88x128xbf16>, vector<128x128xbf16>, vector<88x128xf32> -> vector<88x128xf32>
    %c8_130 = arith.constant 8 : index
    %c0_131 = arith.constant 0 : index
    %170 = vector.load %arg7[%c8_130, %c0_131] : memref<104x128xf32, #tpu.memory_space<vmem>>, vector<88x128xf32>
    %171 = arith.truncf %170 : vector<88x128xf32> to vector<88x128xbf16>
    %c4_132 = arith.constant 4 : index
    %c1_133 = arith.constant 1 : index
    %c0_134 = arith.constant 0 : index
    %c0_135 = arith.constant 0 : index
    %172 = vector.load %arg3[%c4_132, %c1_133, %c0_134, %c0_135] : memref<6x3x128x128xbf16, #tpu.memory_space<vmem>>, vector<1x1x128x128xbf16>
    %173 = vector.shape_cast %172 : vector<1x1x128x128xbf16> to vector<128x128xbf16>
    %cst_136 = arith.constant dense<0.000000e+00> : vector<88x128xf32>
    %174 = tpu.matmul %171, %173, %cst_136 {dimension_numbers = #tpu.dot_dimension_numbers<[1], [0], [0], [1], [0, 0, 1, 1], [], []>} : vector<88x128xbf16>, vector<128x128xbf16>, vector<88x128xf32> -> vector<88x128xf32>
    %175 = arith.addf %169, %174 : vector<88x128xf32>
    %c13 = arith.constant 13 : index
    %c0_137 = arith.constant 0 : index
    %176 = vector.load %arg7[%c13, %c0_137] : memref<104x128xf32, #tpu.memory_space<vmem>>, vector<88x128xf32>
    %177 = arith.truncf %176 : vector<88x128xf32> to vector<88x128xbf16>
    %c4_138 = arith.constant 4 : index
    %c2_139 = arith.constant 2 : index
    %c0_140 = arith.constant 0 : index
    %c0_141 = arith.constant 0 : index
    %178 = vector.load %arg3[%c4_138, %c2_139, %c0_140, %c0_141] : memref<6x3x128x128xbf16, #tpu.memory_space<vmem>>, vector<1x1x128x128xbf16>
    %179 = vector.shape_cast %178 : vector<1x1x128x128xbf16> to vector<128x128xbf16>
    %cst_142 = arith.constant dense<0.000000e+00> : vector<88x128xf32>
    %180 = tpu.matmul %177, %179, %cst_142 {dimension_numbers = #tpu.dot_dimension_numbers<[1], [0], [0], [1], [0, 0, 1, 1], [], []>} : vector<88x128xbf16>, vector<128x128xbf16>, vector<88x128xf32> -> vector<88x128xf32>
    %181 = arith.addf %175, %180 : vector<88x128xf32>
    %c4_143 = arith.constant 4 : index
    %c0_144 = arith.constant 0 : index
    %c0_145 = arith.constant 0 : index
    %182 = vector.load %arg4[%c4_143, %c0_144, %c0_145] : memref<6x1x128xf32, #tpu.memory_space<vmem>>, vector<1x1x128xf32>
    %183 = vector.shape_cast %182 : vector<1x1x128xf32> to vector<1x128xf32>
    %184 = vector.broadcast %183 : vector<1x128xf32> to vector<88x128xf32>
    %185 = arith.addf %181, %184 : vector<88x128xf32>
    %cst_146 = arith.constant 1.000000e-01 : f32
    %186 = vector.broadcast %cst_146 : f32 to vector<88x128xf32>
    %187 = arith.mulf %186, %185 : vector<88x128xf32>
    %188 = arith.maximumf %185, %187 : vector<88x128xf32>
    %cst_147 = arith.constant 0.000000e+00 : f32
    %189 = vector.shape_cast %24 : vector<88x1xi1> to vector<88x1xi1>
    %190 = vector.broadcast %189 : vector<88x1xi1> to vector<88x128xi1>
    %191 = vector.broadcast %cst_147 : f32 to vector<88x128xf32>
    %192 = arith.select %190, %188, %191 : vector<88x128xi1>, vector<88x128xf32>
    %c8_148 = arith.constant 8 : index
    %c0_149 = arith.constant 0 : index
    %193 = vector.load %arg7[%c8_148, %c0_149] : memref<104x128xf32, #tpu.memory_space<vmem>>, vector<88x128xf32>
    tpu.vector_store %arg7[%c8_148, %c0_149], %192 {strides = array<i32>} : memref<104x128xf32, #tpu.memory_space<vmem>>, vector<88x128xf32>,
    %c7_150 = arith.constant 7 : index
    %c0_151 = arith.constant 0 : index
    %194 = vector.load %arg7[%c7_150, %c0_151] : memref<104x128xf32, #tpu.memory_space<vmem>>, vector<88x128xf32>
    %195 = arith.truncf %194 : vector<88x128xf32> to vector<88x128xbf16>
    %c5_152 = arith.constant 5 : index
    %c0_153 = arith.constant 0 : index
    %c0_154 = arith.constant 0 : index
    %c0_155 = arith.constant 0 : index
    %196 = vector.load %arg3[%c5_152, %c0_153, %c0_154, %c0_155] : memref<6x3x128x128xbf16, #tpu.memory_space<vmem>>, vector<1x1x128x128xbf16>
    %197 = vector.shape_cast %196 : vector<1x1x128x128xbf16> to vector<128x128xbf16>
    %cst_156 = arith.constant dense<0.000000e+00> : vector<88x128xf32>
    %198 = tpu.matmul %195, %197, %cst_156 {dimension_numbers = #tpu.dot_dimension_numbers<[1], [0], [0], [1], [0, 0, 1, 1], [], []>} : vector<88x128xbf16>, vector<128x128xbf16>, vector<88x128xf32> -> vector<88x128xf32>
    %c8_157 = arith.constant 8 : index
    %c0_158 = arith.constant 0 : index
    %199 = vector.load %arg7[%c8_157, %c0_158] : memref<104x128xf32, #tpu.memory_space<vmem>>, vector<88x128xf32>
    %200 = arith.truncf %199 : vector<88x128xf32> to vector<88x128xbf16>
    %c5_159 = arith.constant 5 : index
    %c1_160 = arith.constant 1 : index
    %c0_161 = arith.constant 0 : index
    %c0_162 = arith.constant 0 : index
    %201 = vector.load %arg3[%c5_159, %c1_160, %c0_161, %c0_162] : memref<6x3x128x128xbf16, #tpu.memory_space<vmem>>, vector<1x1x128x128xbf16>
    %202 = vector.shape_cast %201 : vector<1x1x128x128xbf16> to vector<128x128xbf16>
    %cst_163 = arith.constant dense<0.000000e+00> : vector<88x128xf32>
    %203 = tpu.matmul %200, %202, %cst_163 {dimension_numbers = #tpu.dot_dimension_numbers<[1], [0], [0], [1], [0, 0, 1, 1], [], []>} : vector<88x128xbf16>, vector<128x128xbf16>, vector<88x128xf32> -> vector<88x128xf32>
    %204 = arith.addf %198, %203 : vector<88x128xf32>
    %c9_164 = arith.constant 9 : index
    %c0_165 = arith.constant 0 : index
    %205 = vector.load %arg7[%c9_164, %c0_165] : memref<104x128xf32, #tpu.memory_space<vmem>>, vector<88x128xf32>
    %206 = arith.truncf %205 : vector<88x128xf32> to vector<88x128xbf16>
    %c5_166 = arith.constant 5 : index
    %c2_167 = arith.constant 2 : index
    %c0_168 = arith.constant 0 : index
    %c0_169 = arith.constant 0 : index
    %207 = vector.load %arg3[%c5_166, %c2_167, %c0_168, %c0_169] : memref<6x3x128x128xbf16, #tpu.memory_space<vmem>>, vector<1x1x128x128xbf16>
    %208 = vector.shape_cast %207 : vector<1x1x128x128xbf16> to vector<128x128xbf16>
    %cst_170 = arith.constant dense<0.000000e+00> : vector<88x128xf32>
    %209 = tpu.matmul %206, %208, %cst_170 {dimension_numbers = #tpu.dot_dimension_numbers<[1], [0], [0], [1], [0, 0, 1, 1], [], []>} : vector<88x128xbf16>, vector<128x128xbf16>, vector<88x128xf32> -> vector<88x128xf32>
    %210 = arith.addf %204, %209 : vector<88x128xf32>
    %c5_171 = arith.constant 5 : index
    %c0_172 = arith.constant 0 : index
    %c0_173 = arith.constant 0 : index
    %211 = vector.load %arg4[%c5_171, %c0_172, %c0_173] : memref<6x1x128xf32, #tpu.memory_space<vmem>>, vector<1x1x128xf32>
    %212 = vector.shape_cast %211 : vector<1x1x128xf32> to vector<1x128xf32>
    %213 = vector.broadcast %212 : vector<1x128xf32> to vector<88x128xf32>
    %214 = arith.addf %210, %213 : vector<88x128xf32>
    %215 = arith.addf %156, %214 : vector<88x128xf32>
    %216 = vector.extract_strided_slice %215 {offsets = [12, 0], sizes = [64, 128], strides = [1, 1]} : vector<88x128xf32> to vector<64x128xf32>
    %c0_174 = arith.constant 0 : index
    %c0_175 = arith.constant 0 : index
    %c0_176 = arith.constant 0 : index
    %217 = vector.load %arg5[%c0_174, %c0_175, %c0_176] : memref<1x64x128xf32, #tpu.memory_space<vmem>>, vector<1x64x128xf32>
    %218 = vector.shape_cast %217 : vector<1x64x128xf32> to vector<64x128xf32>
    %219 = vector.shape_cast %216 : vector<64x128xf32> to vector<1x64x128xf32>
    tpu.vector_store %arg5[%c0_174, %c0_175, %c0_176], %219 {strides = array<i32>} : memref<1x64x128xf32, #tpu.memory_space<vmem>>, vector<1x64x128xf32>,
    return
  }
  func.func @transform_1(%arg0: i32, %arg1: i32) -> (i32, i32, i32, i32) {
    %c0_i32 = arith.constant 0 : i32
    %c0_i32_0 = arith.constant 0 : i32
    %c0_i32_1 = arith.constant 0 : i32
    %c0_i32_2 = arith.constant 0 : i32
    %c0_i32_3 = arith.constant 0 : i32
    return %c0_i32, %c0_i32_0, %c0_i32_1, %c0_i32_2 : i32, i32, i32, i32
  }
  func.func @transform_2(%arg0: i32, %arg1: i32) -> (i32, i32, i32) {
    %c0_i32 = arith.constant 0 : i32
    %c0_i32_0 = arith.constant 0 : i32
    %c0_i32_1 = arith.constant 0 : i32
    %c0_i32_2 = arith.constant 0 : i32
    return %c0_i32, %c0_i32_0, %c0_i32_1 : i32, i32, i32
  }
  func.func @transform_3(%arg0: i32, %arg1: i32) -> (i32, i32, i32) {
    %c0_i32 = arith.constant 0 : i32
    %c0_i32_0 = arith.constant 0 : i32
    return %arg0, %arg1, %c0_i32 : i32, i32, i32
  }
}

</mosaic_0001>

<llo_original>
// kernel: tpu_custom_call.1
$region0: #{tpu_custom_call.1}
  #allocation0 [shape = 'u32[]', space=smem, size = 0x4, offset = 0x4, fixed_abs, tag = 'smem constant byte address 0x4 - core index']
  #allocation1 [shape = 'u32[144,128]{1,0:T(1,128)}', space=vmem, size = 0x12000, scoped, tag = 'internal scratch']
  #allocation2 [shape = 'f32[2,88,128]{2,1,0:T(8,128)}', space=vmem, size = 0x16000, scoped, tag = 'scratch operand']
  #allocation3 [shape = 'f32[104,128]{1,0:T(8,128)}', space=vmem, size = 0xd000, scoped, tag = 'scratch operand']
  #allocation4 [shape = 's32[2]{0}', space=sflag, size = 0x8, scoped, tag = 'scratch operand']
  #allocation11 [shape = 's32[]', space=sflag, size = 0x4, offset = 0, fixed_abs, tag = 'sflag constant byte address 0x0 - dummy sync flag']
  #allocation12 [shape = 's32[]', space=sflag, size = 0x4, offset = 0, fixed_abs, tag = 'sflag constant byte address 0x0 - dummy sync flag']
  #allocation13 [shape = 'u32[]', space=smem, size = 0x4, offset = 0x44, fixed_abs, tag = 'smem constant byte address 0x44 - assertion arg 0']
  #allocation14 [shape = 'u32[]', space=smem, size = 0x4, offset = 0x48, fixed_abs, tag = 'smem constant byte address 0x48 - assertion arg 1']
  #allocation15 [shape = 's32[]', space=sflag, size = 0x4, offset = 0, fixed_abs, tag = 'sflag constant byte address 0x0 - dummy sync flag']
  #allocation16 [shape = 's32[]', space=sflag, size = 0x4, offset = 0, fixed_abs, tag = 'sflag constant byte address 0x0 - dummy sync flag']
  %s0 = inlined_call_operand.hbm [shape: f32[2,152,128], index: 0, kind: input, shape index: {}]
  %s1 = inlined_call_operand.hbm [shape: bf16[6,3,128,128], index: 1, kind: input, shape index: {}]
  %s2 = inlined_call_operand.hbm [shape: f32[6,1,128], index: 2, kind: input, shape index: {}]
  %s3 = inlined_call_operand.hbm [shape: f32[2,128,128], index: 3, kind: output, shape index: {}]
  %s4 = sld [smem:[#allocation0]]
  $region65: #{tpu_custom_call.1} parent=0
    _
  %s6 = ssub.s32 1, %s4
  %s7 = scalar_select 0, %s6, %s4
  $region1: #{tpu_custom_call.1} parent=0
    #allocation5 [shape = 'u8[589824]{0}', space=vmem, size = 0x90000, scoped, tag = 'input window, operand 1, single buffered']
    #allocation6 [shape = 's32[2]{0}', space=sflag, size = 0x8, scoped, tag = 'scoped memory for tpu_custom_call.1']
    #allocation7 [shape = 's32[2]{0}', space=sflag, size = 0x8, scoped, tag = 'scoped memory for tpu_custom_call.1']
    #allocation8 [shape = 'u8[3072]{0}', space=vmem, size = 0xc00, scoped, tag = 'input window, operand 2, single buffered']
    #allocation9 [shape = 's32[1]{0}', space=sflag, size = 0x4, scoped, tag = 'scoped memory for tpu_custom_call.1']
    #allocation10 [shape = 'u8[65536]{0}', space=vmem, size = 0x10000, scoped, tag = 'output window, operand 0']
    %8 = vsyncpa [#allocation6], 0
    %9 = vsyncpa [#allocation9], 0
    %10 = vsyncpa [#allocation7], 0
    %s11 = scalar_lea.sflag [#allocation7], 1
    %12 = vsyncpa %s11, 0
    loop: start=0, step=1, limit=6
    $region2: #{tpu_custom_call.1} parent=1 // loop_pre_header
      _
    $region3: #{tpu_custom_call.1} parent=1 // loop_header
      %s14 = sphi 0, %s18
      %p15 = scmp.ge.s32.totalorder %s14, 6
      %s21 = sphi 0, %s33
      %s22 = sphi 0, %s29
      %s23 = sphi 0, %s21
      %s24 = sphi 0, %s22
      %s25 = sphi 0, %s23
      %s26 = sphi 0, %s24
      %s34 = sphi 0, %s34
      %s36 = sphi 0, %s34
      %s37 = sphi 0, %s36
      %s51 = sphi 0, %s37
      %s55 = sphi 0, %s55
      %s57 = sphi 0, %s55
      %s58 = sphi 0, %s57
      %s72 = sphi 0, %s58
      %s80 = sphi 0, %s82
      %s83 = sphi 0, %s80
      %s84 = sphi 0, %s83
      %s100 = sphi 0, %s84
    $region4: #{tpu_custom_call.1} parent=1 // loop_header_branch
      %17 = sbr.rel (%p15) target = $region8
    $region5: #{tpu_custom_call.1} parent=1 // loop_body
      %s19 = ssub.s32 %s14, 1
      %s20 = ssub.s32 %s14, 2
      %s27 = sadd.s32 1, %s22
      %p28 = scmp.ge.s32.totalorder %s27, 2
      %s29 = scalar_select %p28, 0, %s27
      %s30 = sadd.s32 1, %s21
      %s31 = scalar_select %p28, %s30, %s21
      %p32 = scmp.ge.s32.totalorder %s31, 2
      %s33 = scalar_select %p32, 0, %s31
      %s35 = sadd.s32 %s34, 1
      %p38 = scmp.eq.s32.totalorder %s14, 3
      %p39 = scmp.ne.s32.totalorder %s34, %s36
      %p40 = scmp.eq.s32.totalorder %s14, 0
      %p41 = por %p39, %p40
      %p42 = scmp.ne.s32.totalorder %s34, %s36
      %p43 = scmp.eq.s32.totalorder %s19, 3
      %p44 = por %p42, %p43
      %p45 = scmp.ne.s32.totalorder %s36, %s37
      %p46 = scmp.eq.s32.totalorder %s19, 0
      %p47 = por %p45, %p46
      %p48 = scmp.ne.s32.totalorder %s36, %s37
      %p49 = scmp.eq.s32.totalorder %s20, 3
      %p50 = por %p48, %p49
      %p52 = scmp.ne.s32.totalorder %s37, %s51
      %p53 = scmp.eq.s32.totalorder %s20, 0
      %p54 = por %p52, %p53
      %s56 = sadd.s32 %s55, 1
      %p59 = scmp.eq.s32.totalorder %s14, 3
      %p60 = scmp.ne.s32.totalorder %s55, %s57
      %p61 = scmp.eq.s32.totalorder %s14, 0
      %p62 = por %p60, %p61
      %p63 = scmp.ne.s32.totalorder %s55, %s57
      %p64 = scmp.eq.s32.totalorder %s19, 3
      %p65 = por %p63, %p64
      %p66 = scmp.ne.s32.totalorder %s57, %s58
      %p67 = scmp.eq.s32.totalorder %s19, 0
      %p68 = por %p66, %p67
      %p69 = scmp.ne.s32.totalorder %s57, %s58
      %p70 = scmp.eq.s32.totalorder %s20, 3
      %p71 = por %p69, %p70
      %p73 = scmp.ne.s32.totalorder %s58, %s72
      %p74 = scmp.eq.s32.totalorder %s20, 0
      %p75 = por %p73, %p74
      %s76 = ssub.s32 %s21, %s33
      %s77 = ssub.s32 %s22, %s29
      %s78 = sor.u32 %s76, %s77
      %p79 = scmp.eq.s32.totalorder %s78, 0
      %s81 = sadd.s32 %s80, 1
      %s82 = scalar_select %p79, %s80, %s81
      %p85 = pneg %p79
      %p86 = scmp.eq.s32.totalorder %s14, 3
      %p87 = por %p85, %p86
      %p88 = scmp.ne.s32.totalorder %s80, %s83
      %p89 = scmp.eq.s32.totalorder %s14, 0
      %p90 = por %p88, %p89
      %p91 = scmp.ne.s32.totalorder %s80, %s83
      %p92 = scmp.eq.s32.totalorder %s19, 3
      %p93 = por %p91, %p92
      %p94 = scmp.ne.s32.totalorder %s83, %s84
      %p95 = scmp.eq.s32.totalorder %s19, 0
      %p96 = por %p94, %p95
      %p97 = scmp.ne.s32.totalorder %s83, %s84
      %p98 = scmp.eq.s32.totalorder %s20, 3
      %p99 = por %p97, %p98
      %p101 = scmp.ne.s32.totalorder %s84, %s100
      %p102 = scmp.eq.s32.totalorder %s20, 0
      %p103 = por %p101, %p102
      %p104 = scmp.le.s32.totalorder 1, %s14
      %p105 = scmp.lt.s32.totalorder %s14, 5
      %p106 = pnand %p104, %p105
      %p107 = pneg %p106
      // Predicated region
      $region9: #{tpu_custom_call.1} parent=5 // pred_check
        _
      $region10: #{tpu_custom_call.1} parent=5 // pred_check_branch
        %109 = sbr.rel (%p106) target = $region12
      $region11: #{tpu_custom_call.1} parent=5 // pred_region
        %s110 = ssub.s32 %s14, 1
        // Predicated region
        $region13: #{tpu_custom_call.1} parent=11 // pred_check
          %p111 = pneg %p47
        $region14: #{tpu_custom_call.1} parent=11 // pred_check_branch
          %113 = sbr.rel (%p111) target = $region16
        $region15: #{tpu_custom_call.1} parent=11 // pred_region
          %s115 = ssub.s32 18432, 18432
          %116 = vsyncadd [#allocation6], %s115
          %s117 = sshll.u32 [#allocation5], 4
          %s118 = int_to_ptr.vmem [resolvable:$true] %s117
          %123 = dma.hbm_to_vmem [thread:$0]  %s1, 18432, %s118, [#allocation6], 64, 64, 4
        $region16: #{tpu_custom_call.1} parent=11 // pred_fallthru
          _
        // Predicated region
        $region17: #{tpu_custom_call.1} parent=11 // pred_check
          %p124 = pneg %p68
        $region18: #{tpu_custom_call.1} parent=11 // pred_check_branch
          %126 = sbr.rel (%p124) target = $region20
        $region19: #{tpu_custom_call.1} parent=11 // pred_region
          %s128 = ssub.s32 96, 96
          %129 = vsyncadd [#allocation9], %s128
          %s130 = sshll.u32 [#allocation8], 4
          %s131 = int_to_ptr.vmem [resolvable:$true] %s130
          %136 = dma.hbm_to_vmem [thread:$0]  %s2, 96, %s131, [#allocation9], 16, 16, 1
        $region20: #{tpu_custom_call.1} parent=11 // pred_fallthru
          _
      $region12: #{tpu_custom_call.1} parent=5 // pred_fallthru
        _
      %p137 = scmp.lt.s32.totalorder %s14, 4
      // Predicated region
      $region21: #{tpu_custom_call.1} parent=5 // pred_check
        %p138 = pneg %p137
      $region22: #{tpu_custom_call.1} parent=5 // pred_check_branch
        %140 = sbr.rel (%p138) target = $region24
      $region23: #{tpu_custom_call.1} parent=5 // pred_region
        _
      $region24: #{tpu_custom_call.1} parent=5 // pred_fallthru
        _
      %p141 = scmp.le.s32.totalorder 1, %s14
      %p142 = scmp.lt.s32.totalorder %s14, 5
      %p143 = pnand %p141, %p142
      %p144 = pneg %p143
      // Predicated region
      $region25: #{tpu_custom_call.1} parent=5 // pred_check
        _
      $region26: #{tpu_custom_call.1} parent=5 // pred_check_branch
        %146 = sbr.rel (%p143) target = $region28
      $region27: #{tpu_custom_call.1} parent=5 // pred_region
        %s147 = ssub.s32 %s14, 1
        // Predicated region
        $region29: #{tpu_custom_call.1} parent=27 // pred_check
          %p148 = pneg %p47
        $region30: #{tpu_custom_call.1} parent=27 // pred_check_branch
          %150 = sbr.rel (%p148) target = $region32
        $region31: #{tpu_custom_call.1} parent=27 // pred_region
          %151 = dma.done [#allocation6], 18432
        $region32: #{tpu_custom_call.1} parent=27 // pred_fallthru
          _
        // Predicated region
        $region33: #{tpu_custom_call.1} parent=27 // pred_check
          %p152 = pneg %p68
        $region34: #{tpu_custom_call.1} parent=27 // pred_check_branch
          %154 = sbr.rel (%p152) target = $region36
        $region35: #{tpu_custom_call.1} parent=27 // pred_region
          %155 = dma.done [#allocation9], 96
        $region36: #{tpu_custom_call.1} parent=27 // pred_fallthru
          _
        %p156 = pneg %p47
        %p157 = pneg %p44
        %p158 = pneg %p68
        %p159 = pneg %p65
        %p160 = pneg %p96
        %p161 = pneg %p93
        %s162 = sand.u32 %s83, 1
        %s163 = scalar_lea.sflag [#allocation7], %s162
        %s164 = sand.u32 %s83, 1
        %s165 = smul.addr %s164, 64
        %s166 = scalar_lea.vmem [#allocation10], %s165
        %s167 = smul.u32 8, %s24
        %p169 = scmp.eq.s32.totalorder %s24, 0
        // Predicated region
        $region37: #{tpu_custom_call.1} parent=27 // pred_check
          %p170 = pneg %p169
        $region38: #{tpu_custom_call.1} parent=27 // pred_check_branch
          %172 = sbr.rel (%p170) target = $region40
        $region39: #{tpu_custom_call.1} parent=27 // pred_region
          %s173 = smul.u32 %s23, 152
          %s174 = smul.addr %s173, 16
          %s175 = scalar_lea.hbm %s0, %s174
          // Predicated region
          $region41: #{tpu_custom_call.1} parent=39 // pred_check
            _
          $region42: #{tpu_custom_call.1} parent=39 // pred_check_branch
            %177 = sbr.rel target = $region44
          $region43: #{tpu_custom_call.1} parent=39 // pred_region
            %178 = sst [smem:[#allocation13]] [#allocation12]
            %179 = sst [smem:[#allocation14]] [#allocation11]
          $region44: #{tpu_custom_call.1} parent=39 // pred_fallthru
            _
          %181 = shalt.err (0)
          %s183 = sshll.u32 [#allocation2], 4
          %s184 = int_to_ptr.vmem [resolvable:$true] %s183
          %186 = dma.hbm_to_vmem [thread:$0]  %s175, 1408, %s184, [#allocation4]
        $region40: #{tpu_custom_call.1} parent=27 // pred_fallthru
          _
        %p187 = scmp.lt.s32.totalorder %s24, 0
        %s188 = ssub.s32 0, %s24
        %s189 = scalar_select %p187, %s188, %s24
        %s190 = sand.u32 %s189, 1
        %s191 = ssub.s32 0, %s190
        %s192 = scalar_select %p187, %s191, %s190
        %p193 = scmp.ne.s32.totalorder %s192, 0
        %p194 = scmp.lt.s32.totalorder %s192, 0
        %p195 = pnand %p194, %p193
        %p196 = pneg %p195
        %s197 = sadd.s32 %s192, 2
        %s198 = scalar_select %p196, %s197, %s192
        %199 = vst [vmem:[#allocation3] sm:$0xff] 0.0
        %200 = vst [vmem:[#allocation3 + $0x60] sm:$0xff] 0.0
        %v201 = vlaneseq
        %v202 = vshrl.u32 %v201, 7
        %v203 = vadd.s32 %v202, 8
        %v204 = vadd.s32 %v202, 16
        %v205 = vadd.s32 %v202, 24
        %v206 = vadd.s32 %v202, 32
        %v207 = vadd.s32 %v202, 40
        %v208 = vadd.s32 %v202, 48
        %v209 = vadd.s32 %v202, 56
        %v210 = vadd.s32 %v202, 64
        %v211 = vadd.s32 %v202, 72
        %v212 = vadd.s32 %v202, 80
        %s213 = smul.u32 %s24, 64
        %v214 = vstv %s213
        %v215 = vadd.s32 %v202, %v214
        %v216 = vadd.s32 %v203, %v214
        %v217 = vadd.s32 %v204, %v214
        %v218 = vadd.s32 %v205, %v214
        %v219 = vadd.s32 %v206, %v214
        %v220 = vadd.s32 %v207, %v214
        %v221 = vadd.s32 %v208, %v214
        %v222 = vadd.s32 %v209, %v214
        %v223 = vadd.s32 %v210, %v214
        %v224 = vadd.s32 %v211, %v214
        %v225 = vadd.s32 %v212, %v214
        %vm226 = vcmp.ge.s32.totalorder %v215, 12
        %vm227 = vcmp.ge.s32.totalorder %v216, 12
        %vm228 = vcmp.ge.s32.totalorder %v217, 12
        %vm229 = vcmp.ge.s32.totalorder %v218, 12
        %vm230 = vcmp.ge.s32.totalorder %v219, 12
        %vm231 = vcmp.ge.s32.totalorder %v220, 12
        %vm232 = vcmp.ge.s32.totalorder %v221, 12
        %vm233 = vcmp.ge.s32.totalorder %v222, 12
        %vm234 = vcmp.ge.s32.totalorder %v223, 12
        %vm235 = vcmp.ge.s32.totalorder %v224, 12
        %vm236 = vcmp.ge.s32.totalorder %v225, 12
        %vm237 = vcmp.lt.s32.totalorder %v215, 140
        %vm238 = vcmp.lt.s32.totalorder %v216, 140
        %vm239 = vcmp.lt.s32.totalorder %v217, 140
        %vm240 = vcmp.lt.s32.totalorder %v218, 140
        %vm241 = vcmp.lt.s32.totalorder %v219, 140
        %vm242 = vcmp.lt.s32.totalorder %v220, 140
        %vm243 = vcmp.lt.s32.totalorder %v221, 140
        %vm244 = vcmp.lt.s32.totalorder %v222, 140
        %vm245 = vcmp.lt.s32.totalorder %v223, 140
        %vm246 = vcmp.lt.s32.totalorder %v224, 140
        %vm247 = vcmp.lt.s32.totalorder %v225, 140
        %vm248 = vmand %vm226, %vm237
        %vm249 = vmand %vm227, %vm238
        %vm250 = vmand %vm228, %vm239
        %vm251 = vmand %vm229, %vm240
        %vm252 = vmand %vm230, %vm241
        %vm253 = vmand %vm231, %vm242
        %vm254 = vmand %vm232, %vm243
        %vm255 = vmand %vm233, %vm244
        %vm256 = vmand %vm234, %vm245
        %vm257 = vmand %vm235, %vm246
        %vm258 = vmand %vm236, %vm247
        %s259 = smul.u32 %s198, 88
        %s260 = scalar_lea.vmem [#allocation2], %s259
        %s261 = scalar_lea.sflag [#allocation4], %s198
        %s262 = smul.u32 88, 1
        %s263 = sshll.u32 %s262, 4
        %264 = dma.done %s261, %s263
        %s265 = sadd.s32 %s24, 1
        %p266 = scmp.lt.s32.totalorder %s265, 2
        // Predicated region
        $region45: #{tpu_custom_call.1} parent=27 // pred_check
          %p267 = pneg %p266
        $region46: #{tpu_custom_call.1} parent=27 // pred_check_branch
          %269 = sbr.rel (%p267) target = $region48
        $region47: #{tpu_custom_call.1} parent=27 // pred_region
          %s270 = ssub.s32 1, %s198
          %s271 = smul.u32 %s265, 64
          %s272 = smul.u32 %s23, 152
          %s273 = sadd.s32 %s271, %s272
          %s274 = smul.addr %s273, 16
          %s275 = scalar_lea.hbm %s0, %s274
          %s276 = smul.u32 %s270, 88
          %s277 = scalar_lea.vmem [#allocation2], %s276
          %s278 = scalar_lea.sflag [#allocation4], %s270
          // Predicated region
          $region49: #{tpu_custom_call.1} parent=47 // pred_check
            _
          $region50: #{tpu_custom_call.1} parent=47 // pred_check_branch
            %280 = sbr.rel target = $region52
          $region51: #{tpu_custom_call.1} parent=47 // pred_region
            %281 = sst [smem:[#allocation13]] [#allocation16]
            %282 = sst [smem:[#allocation14]] [#allocation15]
          $region52: #{tpu_custom_call.1} parent=47 // pred_fallthru
            _
          %284 = shalt.err (0)
          %s286 = sshll.u32 %s277, 4
          %s287 = int_to_ptr.vmem [resolvable:$true] %s286
          %289 = dma.hbm_to_vmem [thread:$0]  %s275, 1408, %s287, %s278
        $region48: #{tpu_custom_call.1} parent=27 // pred_fallthru
          _
        %v290 = vld [vmem:[%s260] sm:$0xff]
        %v291 = vld [vmem:[%s260 + $0x8] sm:$0xff]
        %v292 = vld [vmem:[%s260 + $0x10] sm:$0xff]
        %v293 = vld [vmem:[%s260 + $0x18] sm:$0xff]
        %v294 = vld [vmem:[%s260 + $0x20] sm:$0xff]
        %v295 = vld [vmem:[%s260 + $0x28] sm:$0xff]
        %v296 = vld [vmem:[%s260 + $0x30] sm:$0xff]
        %v297 = vld [vmem:[%s260 + $0x38] sm:$0xff]
        %v298 = vld [vmem:[%s260 + $0x40] sm:$0xff]
        %v299 = vld [vmem:[%s260 + $0x48] sm:$0xff]
        %v300 = vld [vmem:[%s260 + $0x50] sm:$0xff]
        %v301 = vmul.f32 %v290, 0.1
        %v302 = vmul.f32 %v291, 0.1
        %v303 = vmul.f32 %v292, 0.1
        %v304 = vmul.f32 %v293, 0.1
        %v305 = vmul.f32 %v294, 0.1
        %v306 = vmul.f32 %v295, 0.1
        %v307 = vmul.f32 %v296, 0.1
        %v308 = vmul.f32 %v297, 0.1
        %v309 = vmul.f32 %v298, 0.1
        %v310 = vmul.f32 %v299, 0.1
        %v311 = vmul.f32 %v300, 0.1
        %v312 = vmax.f32 %v290, %v301
        %v313 = vmax.f32 %v291, %v302
        %v314 = vmax.f32 %v292, %v303
        %v315 = vmax.f32 %v293, %v304
        %v316 = vmax.f32 %v294, %v305
        %v317 = vmax.f32 %v295, %v306
        %v318 = vmax.f32 %v296, %v307
        %v319 = vmax.f32 %v297, %v308
        %v320 = vmax.f32 %v298, %v309
        %v321 = vmax.f32 %v299, %v310
        %v322 = vmax.f32 %v300, %v311
        %v323 = vsel %vm248, 1, 0
        %v324 = vsel %vm249, 1, 0
        %v325 = vsel %vm250, 1, 0
        %v326 = vsel %vm251, 1, 0
        %v327 = vsel %vm252, 1, 0
        %v328 = vsel %vm253, 1, 0
        %v329 = vsel %vm254, 1, 0
        %v330 = vsel %vm255, 1, 0
        %v331 = vsel %vm256, 1, 0
        %v332 = vsel %vm257, 1, 0
        %v333 = vsel %vm258, 1, 0
        %vm334 = vcmp.eq.s32.totalorder %v323, 1
        %vm335 = vcmp.eq.s32.totalorder %v324, 1
        %vm336 = vcmp.eq.s32.totalorder %v325, 1
        %vm337 = vcmp.eq.s32.totalorder %v326, 1
        %vm338 = vcmp.eq.s32.totalorder %v327, 1
        %vm339 = vcmp.eq.s32.totalorder %v328, 1
        %vm340 = vcmp.eq.s32.totalorder %v329, 1
        %vm341 = vcmp.eq.s32.totalorder %v330, 1
        %vm342 = vcmp.eq.s32.totalorder %v331, 1
        %vm343 = vcmp.eq.s32.totalorder %v332, 1
        %vm344 = vcmp.eq.s32.totalorder %v333, 1
        %v345 = vsel %vm334, %v312, 0.0
        %v346 = vsel %vm335, %v313, 0.0
        %v347 = vsel %vm336, %v314, 0.0
        %v348 = vsel %vm337, %v315, 0.0
        %v349 = vsel %vm338, %v316, 0.0
        %v350 = vsel %vm339, %v317, 0.0
        %v351 = vsel %vm340, %v318, 0.0
        %v352 = vsel %vm341, %v319, 0.0
        %v353 = vsel %vm342, %v320, 0.0
        %v354 = vsel %vm343, %v321, 0.0
        %v355 = vsel %vm344, %v322, 0.0
        %356 = vst [vmem:[#allocation3 + $0x8] sm:$0xff] %v345
        %357 = vst [vmem:[#allocation3 + $0x10] sm:$0xff] %v346
        %358 = vst [vmem:[#allocation3 + $0x18] sm:$0xff] %v347
        %359 = vst [vmem:[#allocation3 + $0x20] sm:$0xff] %v348
        %360 = vst [vmem:[#allocation3 + $0x28] sm:$0xff] %v349
        %361 = vst [vmem:[#allocation3 + $0x30] sm:$0xff] %v350
        %362 = vst [vmem:[#allocation3 + $0x38] sm:$0xff] %v351
        %363 = vst [vmem:[#allocation3 + $0x40] sm:$0xff] %v352
        %364 = vst [vmem:[#allocation3 + $0x48] sm:$0xff] %v353
        %365 = vst [vmem:[#allocation3 + $0x50] sm:$0xff] %v354
        %366 = vst [vmem:[#allocation3 + $0x58] sm:$0xff] %v355
        %v367 = vld [vmem:[#allocation3 + $0x7] sm:$0xff]
        %v368 = vld [vmem:[#allocation3 + $0xf] sm:$0xff]
        %v369 = vld [vmem:[#allocation3 + $0x17] sm:$0xff]
        %v370 = vld [vmem:[#allocation3 + $0x1f] sm:$0xff]
        %v371 = vld [vmem:[#allocation3 + $0x27] sm:$0xff]
        %v372 = vld [vmem:[#allocation3 + $0x2f] sm:$0xff]
        %v373 = vld [vmem:[#allocation3 + $0x37] sm:$0xff]
        %v374 = vld [vmem:[#allocation3 + $0x3f] sm:$0xff]
        %v375 = vld [vmem:[#allocation3 + $0x47] sm:$0xff]
        %v376 = vld [vmem:[#allocation3 + $0x4f] sm:$0xff]
        %v377 = vld [vmem:[#allocation3 + $0x57] sm:$0xff]
        %v378 = vpack.c.bf16 %v368, %v367
        %v379 = vpack.c.bf16 %v370, %v369
        %v380 = vpack.c.bf16 %v372, %v371
        %v381 = vpack.c.bf16 %v374, %v373
        %v382 = vpack.c.bf16 %v376, %v375
        %v383 = vpack.c.bf16 %v377, %v377
        %v384 = vld [vmem:[#allocation5] sm:$0xf]
        %v385 = vld [vmem:[#allocation5 + $0x4] sm:$0xf]
        %v386 = vld [vmem:[#allocation5 + $0x8] sm:$0xf]
        %v387 = vld [vmem:[#allocation5 + $0xc] sm:$0xf]
        %v388 = vld [vmem:[#allocation5 + $0x10] sm:$0xf]
        %v389 = vld [vmem:[#allocation5 + $0x14] sm:$0xf]
        %v390 = vld [vmem:[#allocation5 + $0x18] sm:$0xf]
        %v391 = vld [vmem:[#allocation5 + $0x1c] sm:$0xf]
        %v392 = vld [vmem:[#allocation5 + $0x20] sm:$0xf]
        %v393 = vld [vmem:[#allocation5 + $0x24] sm:$0xf]
        %v394 = vld [vmem:[#allocation5 + $0x28] sm:$0xf]
        %v395 = vld [vmem:[#allocation5 + $0x2c] sm:$0xf]
        %v396 = vld [vmem:[#allocation5 + $0x30] sm:$0xf]
        %v397 = vld [vmem:[#allocation5 + $0x34] sm:$0xf]
        %v398 = vld [vmem:[#allocation5 + $0x38] sm:$0xf]
        %v399 = vld [vmem:[#allocation5 + $0x3c] sm:$0xf]
        %v400 = vld [vmem:[#allocation3 + $0x8] sm:$0xff]
        %v401 = vld [vmem:[#allocation3 + $0x10] sm:$0xff]
        %v402 = vld [vmem:[#allocation3 + $0x18] sm:$0xff]
        %v403 = vld [vmem:[#allocation3 + $0x20] sm:$0xff]
        %v404 = vld [vmem:[#allocation3 + $0x28] sm:$0xff]
        %v405 = vld [vmem:[#allocation3 + $0x30] sm:$0xff]
        %v406 = vld [vmem:[#allocation3 + $0x38] sm:$0xff]
        %v407 = vld [vmem:[#allocation3 + $0x40] sm:$0xff]
        %v408 = vld [vmem:[#allocation3 + $0x48] sm:$0xff]
        %v409 = vld [vmem:[#allocation3 + $0x50] sm:$0xff]
        %v410 = vld [vmem:[#allocation3 + $0x58] sm:$0xff]
        %v411 = vpack.c.bf16 %v401, %v400
        %v412 = vpack.c.bf16 %v403, %v402
        %v413 = vpack.c.bf16 %v405, %v404
        %v414 = vpack.c.bf16 %v407, %v406
        %v415 = vpack.c.bf16 %v409, %v408
        %v416 = vpack.c.bf16 %v410, %v410
        %s417 = scalar_lea.vmem [#allocation5], 64
        %v418 = vld [vmem:[%s417] sm:$0xf]
        %v419 = vld [vmem:[%s417 + $0x4] sm:$0xf]
        %v420 = vld [vmem:[%s417 + $0x8] sm:$0xf]
        %v421 = vld [vmem:[%s417 + $0xc] sm:$0xf]
        %v422 = vld [vmem:[%s417 + $0x10] sm:$0xf]
        %v423 = vld [vmem:[%s417 + $0x14] sm:$0xf]
        %v424 = vld [vmem:[%s417 + $0x18] sm:$0xf]
        %v425 = vld [vmem:[%s417 + $0x1c] sm:$0xf]
        %v426 = vld [vmem:[%s417 + $0x20] sm:$0xf]
        %v427 = vld [vmem:[%s417 + $0x24] sm:$0xf]
        %v428 = vld [vmem:[%s417 + $0x28] sm:$0xf]
        %v429 = vld [vmem:[%s417 + $0x2c] sm:$0xf]
        %v430 = vld [vmem:[%s417 + $0x30] sm:$0xf]
        %v431 = vld [vmem:[%s417 + $0x34] sm:$0xf]
        %v432 = vld [vmem:[%s417 + $0x38] sm:$0xf]
        %v433 = vld [vmem:[%s417 + $0x3c] sm:$0xf]
        %v450 = vunpack.c.l.b16 %v418
        %v451 = vunpack.c.l.b16 %v419
        %v452 = vunpack.c.l.b16 %v420
        %v453 = vunpack.c.l.b16 %v421
        %v454 = vunpack.c.l.b16 %v422
        %v455 = vunpack.c.l.b16 %v423
        %v456 = vunpack.c.l.b16 %v424
        %v457 = vunpack.c.l.b16 %v425
        %v458 = vunpack.c.l.b16 %v426
        %v459 = vunpack.c.l.b16 %v427
        %v460 = vunpack.c.l.b16 %v428
        %v461 = vunpack.c.l.b16 %v429
        %v462 = vunpack.c.l.b16 %v430
        %v463 = vunpack.c.l.b16 %v431
        %v464 = vunpack.c.l.b16 %v432
        %v465 = vunpack.c.l.b16 %v433
        %v466 = vpack.c.b16 %v451, %v450
        %v467 = vpack.c.b16 %v453, %v452
        %v468 = vpack.c.b16 %v455, %v454
        %v469 = vpack.c.b16 %v457, %v456
        %v470 = vpack.c.b16 %v459, %v458
        %v471 = vpack.c.b16 %v461, %v460
        %v472 = vpack.c.b16 %v463, %v462
        %v473 = vpack.c.b16 %v465, %v464
        %482 = vmatprep.subr.bf16.mxu0 0
        %483 = vmatpush1.bf16.msra.mxu0 %v466
        %484 = vmatprep.subr.bf16.mxu0 0
        %485 = vmatpush1.bf16.msra.mxu0 %v467
        %486 = vmatprep.subr.bf16.mxu0 0
        %487 = vmatpush1.bf16.msra.mxu0 %v468
        %488 = vmatprep.subr.bf16.mxu0 0
        %489 = vmatpush1.bf16.msra.mxu0 %v469
        %490 = vmatprep.subr.bf16.mxu0 0
        %491 = vmatpush1.bf16.msra.mxu0 %v470
        %492 = vmatprep.subr.bf16.mxu0 0
        %493 = vmatpush1.bf16.msra.mxu0 %v471
        %494 = vmatprep.subr.bf16.mxu0 0
        %495 = vmatpush1.bf16.msra.mxu0 %v472
        %496 = vmatprep.subr.bf16.mxu0 0
        %497 = vmatpush1.bf16.msra.mxu0 %v473
        %498 = vmatprep.subr.bf16.mxu0 0
        %499 = vmatpush1.bf16.msra.mxu0 0
        %500 = vmatprep.subr.bf16.mxu0 0
        %501 = vmatpush1.bf16.msra.mxu0 0
        %502 = vmatprep.subr.bf16.mxu0 0
        %503 = vmatpush1.bf16.msra.mxu0 0
        %504 = vmatprep.subr.bf16.mxu0 0
        %505 = vmatpush1.bf16.msra.mxu0 0
        %506 = vmatprep.subr.bf16.mxu0 0
        %507 = vmatpush1.bf16.msra.mxu0 0
        %508 = vmatprep.subr.bf16.mxu0 0
        %509 = vmatpush1.bf16.msra.mxu0 0
        %510 = vmatprep.subr.bf16.mxu0 0
        %511 = vmatpush1.bf16.msra.mxu0 0
        %512 = vmatprep.subr.bf16.mxu0 0
        %513 = vmatpush1.bf16.msra.mxu0 0
        %514 = vmatprep.mubr.bf16.mxu0 0
        %515 = vmatmul.mubr.bf16.gmra.mrb[0].mxu0 %v411
        %v516 = vpop.f32.mrb[0].mxu0
        %v517 = vadd.f32 0.0, %v516
        %v518 = vpop.f32.mrb[0].mxu0
        %v519 = vpop.f32.mrb[0].mxu0
        %v520 = vadd.f32 0.0, %v519
        %v521 = vpop.f32.mrb[0].mxu0
        %522 = vmatprep.mubr.bf16.mxu0 0
        %523 = vmatmul.mubr.bf16.gmra.mrb[0].mxu0 %v412
        %v524 = vpop.f32.mrb[0].mxu0
        %v525 = vadd.f32 0.0, %v524
        %v526 = vpop.f32.mrb[0].mxu0
        %v527 = vpop.f32.mrb[0].mxu0
        %v528 = vadd.f32 0.0, %v527
        %v529 = vpop.f32.mrb[0].mxu0
        %530 = vmatprep.mubr.bf16.mxu0 0
        %531 = vmatmul.mubr.bf16.gmra.mrb[0].mxu0 %v413
        %v532 = vpop.f32.mrb[0].mxu0
        %v533 = vadd.f32 0.0, %v532
        %v534 = vpop.f32.mrb[0].mxu0
        %v535 = vpop.f32.mrb[0].mxu0
        %v536 = vadd.f32 0.0, %v535
        %v537 = vpop.f32.mrb[0].mxu0
        %538 = vmatprep.mubr.bf16.mxu0 0
        %539 = vmatmul.mubr.bf16.gmra.mrb[0].mxu0 %v414
        %v540 = vpop.f32.mrb[0].mxu0
        %v541 = vadd.f32 0.0, %v540
        %v542 = vpop.f32.mrb[0].mxu0
        %v543 = vpop.f32.mrb[0].mxu0
        %v544 = vadd.f32 0.0, %v543
        %v545 = vpop.f32.mrb[0].mxu0
        %546 = vmatprep.mubr.bf16.mxu0 0
        %547 = vmatmul.mubr.bf16.gmra.mrb[0].mxu0 %v415
        %v548 = vpop.f32.mrb[0].mxu0
        %v549 = vadd.f32 0.0, %v548
        %v550 = vpop.f32.mrb[0].mxu0
        %v551 = vpop.f32.mrb[0].mxu0
        %v552 = vadd.f32 0.0, %v551
        %v553 = vpop.f32.mrb[0].mxu0
        %554 = vmatprep.mubr.bf16.mxu0 0
        %555 = vmatmul.mubr.bf16.gmra.mrb[0].mxu0 %v416
        %v556 = vpop.f32.mrb[0].mxu0
        %v557 = vadd.f32 0.0, %v556
        %v558 = vpop.f32.mrb[0].mxu0
        %v559 = vpop.f32.mrb[0].mxu0
        %v560 = vpop.f32.mrb[0].mxu0
        %561 = vdwg.mxu0
        %v578 = vunpack.c.l.b16 %v384
        %v579 = vunpack.c.l.b16 %v385
        %v580 = vunpack.c.l.b16 %v386
        %v581 = vunpack.c.l.b16 %v387
        %v582 = vunpack.c.l.b16 %v388
        %v583 = vunpack.c.l.b16 %v389
        %v584 = vunpack.c.l.b16 %v390
        %v585 = vunpack.c.l.b16 %v391
        %v586 = vunpack.c.l.b16 %v392
        %v587 = vunpack.c.l.b16 %v393
        %v588 = vunpack.c.l.b16 %v394
        %v589 = vunpack.c.l.b16 %v395
        %v590 = vunpack.c.l.b16 %v396
        %v591 = vunpack.c.l.b16 %v397
        %v592 = vunpack.c.l.b16 %v398
        %v593 = vunpack.c.l.b16 %v399
        %v594 = vpack.c.b16 %v579, %v578
        %v595 = vpack.c.b16 %v581, %v580
        %v596 = vpack.c.b16 %v583, %v582
        %v597 = vpack.c.b16 %v585, %v584
        %v598 = vpack.c.b16 %v587, %v586
        %v599 = vpack.c.b16 %v589, %v588
        %v600 = vpack.c.b16 %v591, %v590
        %v601 = vpack.c.b16 %v593, %v592
        %610 = vmatprep.subr.bf16.mxu0 0
        %611 = vmatpush1.bf16.msra.mxu0 %v594
        %612 = vmatprep.subr.bf16.mxu0 0
        %613 = vmatpush1.bf16.msra.mxu0 %v595
        %614 = vmatprep.subr.bf16.mxu0 0
        %615 = vmatpush1.bf16.msra.mxu0 %v596
        %616 = vmatprep.subr.bf16.mxu0 0
        %617 = vmatpush1.bf16.msra.mxu0 %v597
        %618 = vmatprep.subr.bf16.mxu0 0
        %619 = vmatpush1.bf16.msra.mxu0 %v598
        %620 = vmatprep.subr.bf16.mxu0 0
        %621 = vmatpush1.bf16.msra.mxu0 %v599
        %622 = vmatprep.subr.bf16.mxu0 0
        %623 = vmatpush1.bf16.msra.mxu0 %v600
        %624 = vmatprep.subr.bf16.mxu0 0
        %625 = vmatpush1.bf16.msra.mxu0 %v601
        %626 = vmatprep.subr.bf16.mxu0 0
        %627 = vmatpush1.bf16.msra.mxu0 0
        %628 = vmatprep.subr.bf16.mxu0 0
        %629 = vmatpush1.bf16.msra.mxu0 0
        %630 = vmatprep.subr.bf16.mxu0 0
        %631 = vmatpush1.bf16.msra.mxu0 0
        %632 = vmatprep.subr.bf16.mxu0 0
        %633 = vmatpush1.bf16.msra.mxu0 0
        %634 = vmatprep.subr.bf16.mxu0 0
        %635 = vmatpush1.bf16.msra.mxu0 0
        %636 = vmatprep.subr.bf16.mxu0 0
        %637 = vmatpush1.bf16.msra.mxu0 0
        %638 = vmatprep.subr.bf16.mxu0 0
        %639 = vmatpush1.bf16.msra.mxu0 0
        %640 = vmatprep.subr.bf16.mxu0 0
        %641 = vmatpush1.bf16.msra.mxu0 0
        %642 = vmatprep.mubr.bf16.mxu0 0
        %643 = vmatmul.mubr.bf16.gmra.mrb[0].mxu0 %v378
        %v644 = vpop.f32.mrb[0].mxu0
        %v645 = vadd.f32 %v517, %v644
        %v646 = vpop.f32.mrb[0].mxu0
        %v647 = vpop.f32.mrb[0].mxu0
        %v648 = vadd.f32 %v520, %v647
        %v649 = vpop.f32.mrb[0].mxu0
        %650 = vmatprep.mubr.bf16.mxu0 0
        %651 = vmatmul.mubr.bf16.gmra.mrb[0].mxu0 %v379
        %v652 = vpop.f32.mrb[0].mxu0
        %v653 = vadd.f32 %v525, %v652
        %v654 = vpop.f32.mrb[0].mxu0
        %v655 = vpop.f32.mrb[0].mxu0
        %v656 = vadd.f32 %v528, %v655
        %v657 = vpop.f32.mrb[0].mxu0
        %658 = vmatprep.mubr.bf16.mxu0 0
        %659 = vmatmul.mubr.bf16.gmra.mrb[0].mxu0 %v380
        %v660 = vpop.f32.mrb[0].mxu0
        %v661 = vadd.f32 %v533, %v660
        %v662 = vpop.f32.mrb[0].mxu0
        %v663 = vpop.f32.mrb[0].mxu0
        %v664 = vadd.f32 %v536, %v663
        %v665 = vpop.f32.mrb[0].mxu0
        %666 = vmatprep.mubr.bf16.mxu0 0
        %667 = vmatmul.mubr.bf16.gmra.mrb[0].mxu0 %v381
        %v668 = vpop.f32.mrb[0].mxu0
        %v669 = vadd.f32 %v541, %v668
        %v670 = vpop.f32.mrb[0].mxu0
        %v671 = vpop.f32.mrb[0].mxu0
        %v672 = vadd.f32 %v544, %v671
        %v673 = vpop.f32.mrb[0].mxu0
        %674 = vmatprep.mubr.bf16.mxu0 0
        %675 = vmatmul.mubr.bf16.gmra.mrb[0].mxu0 %v382
        %v676 = vpop.f32.mrb[0].mxu0
        %v677 = vadd.f32 %v549, %v676
        %v678 = vpop.f32.mrb[0].mxu0
        %v679 = vpop.f32.mrb[0].mxu0
        %v680 = vadd.f32 %v552, %v679
        %v681 = vpop.f32.mrb[0].mxu0
        %682 = vmatprep.mubr.bf16.mxu0 0
        %683 = vmatmul.mubr.bf16.gmra.mrb[0].mxu0 %v383
        %v684 = vpop.f32.mrb[0].mxu0
        %v685 = vadd.f32 %v557, %v684
        %v686 = vpop.f32.mrb[0].mxu0
        %v687 = vpop.f32.mrb[0].mxu0
        %v688 = vpop.f32.mrb[0].mxu0
        %689 = vdwg.mxu0
        %v690 = vld [vmem:[#allocation3 + $0x9] sm:$0xff]
        %v691 = vld [vmem:[#allocation3 + $0x11] sm:$0xff]
        %v692 = vld [vmem:[#allocation3 + $0x19] sm:$0xff]
        %v693 = vld [vmem:[#allocation3 + $0x21] sm:$0xff]
        %v694 = vld [vmem:[#allocation3 + $0x29] sm:$0xff]
        %v695 = vld [vmem:[#allocation3 + $0x31] sm:$0xff]
        %v696 = vld [vmem:[#allocation3 + $0x39] sm:$0xff]
        %v697 = vld [vmem:[#allocation3 + $0x41] sm:$0xff]
        %v698 = vld [vmem:[#allocation3 + $0x49] sm:$0xff]
        %v699 = vld [vmem:[#allocation3 + $0x51] sm:$0xff]
        %v700 = vld [vmem:[#allocation3 + $0x59] sm:$0xff]
        %v701 = vpack.c.bf16 %v691, %v690
        %v702 = vpack.c.bf16 %v693, %v692
        %v703 = vpack.c.bf16 %v695, %v694
        %v704 = vpack.c.bf16 %v697, %v696
        %v705 = vpack.c.bf16 %v699, %v698
        %v706 = vpack.c.bf16 %v700, %v700
        %s707 = scalar_lea.vmem [#allocation5], 128
        %v708 = vld [vmem:[%s707] sm:$0xf]
        %v709 = vld [vmem:[%s707 + $0x4] sm:$0xf]
        %v710 = vld [vmem:[%s707 + $0x8] sm:$0xf]
        %v711 = vld [vmem:[%s707 + $0xc] sm:$0xf]
        %v712 = vld [vmem:[%s707 + $0x10] sm:$0xf]
        %v713 = vld [vmem:[%s707 + $0x14] sm:$0xf]
        %v714 = vld [vmem:[%s707 + $0x18] sm:$0xf]
        %v715 = vld [vmem:[%s707 + $0x1c] sm:$0xf]
        %v716 = vld [vmem:[%s707 + $0x20] sm:$0xf]
        %v717 = vld [vmem:[%s707 + $0x24] sm:$0xf]
        %v718 = vld [vmem:[%s707 + $0x28] sm:$0xf]
        %v719 = vld [vmem:[%s707 + $0x2c] sm:$0xf]
        %v720 = vld [vmem:[%s707 + $0x30] sm:$0xf]
        %v721 = vld [vmem:[%s707 + $0x34] sm:$0xf]
        %v722 = vld [vmem:[%s707 + $0x38] sm:$0xf]
        %v723 = vld [vmem:[%s707 + $0x3c] sm:$0xf]
        %v740 = vunpack.c.l.b16 %v708
        %v741 = vunpack.c.l.b16 %v709
        %v742 = vunpack.c.l.b16 %v710
        %v743 = vunpack.c.l.b16 %v711
        %v744 = vunpack.c.l.b16 %v712
        %v745 = vunpack.c.l.b16 %v713
        %v746 = vunpack.c.l.b16 %v714
        %v747 = vunpack.c.l.b16 %v715
        %v748 = vunpack.c.l.b16 %v716
        %v749 = vunpack.c.l.b16 %v717
        %v750 = vunpack.c.l.b16 %v718
        %v751 = vunpack.c.l.b16 %v719
        %v752 = vunpack.c.l.b16 %v720
        %v753 = vunpack.c.l.b16 %v721
        %v754 = vunpack.c.l.b16 %v722
        %v755 = vunpack.c.l.b16 %v723
        %v756 = vpack.c.b16 %v741, %v740
        %v757 = vpack.c.b16 %v743, %v742
        %v758 = vpack.c.b16 %v745, %v744
        %v759 = vpack.c.b16 %v747, %v746
        %v760 = vpack.c.b16 %v749, %v748
        %v761 = vpack.c.b16 %v751, %v750
        %v762 = vpack.c.b16 %v753, %v752
        %v763 = vpack.c.b16 %v755, %v754
        %772 = vmatprep.subr.bf16.mxu0 0
        %773 = vmatpush1.bf16.msra.mxu0 %v756
        %774 = vmatprep.subr.bf16.mxu0 0
        %775 = vmatpush1.bf16.msra.mxu0 %v757
        %776 = vmatprep.subr.bf16.mxu0 0
        %777 = vmatpush1.bf16.msra.mxu0 %v758
        %778 = vmatprep.subr.bf16.mxu0 0
        %779 = vmatpush1.bf16.msra.mxu0 %v759
        %780 = vmatprep.subr.bf16.mxu0 0
        %781 = vmatpush1.bf16.msra.mxu0 %v760
        %782 = vmatprep.subr.bf16.mxu0 0
        %783 = vmatpush1.bf16.msra.mxu0 %v761
        %784 = vmatprep.subr.bf16.mxu0 0
        %785 = vmatpush1.bf16.msra.mxu0 %v762
        %786 = vmatprep.subr.bf16.mxu0 0
        %787 = vmatpush1.bf16.msra.mxu0 %v763
        %788 = vmatprep.subr.bf16.mxu0 0
        %789 = vmatpush1.bf16.msra.mxu0 0
        %790 = vmatprep.subr.bf16.mxu0 0
        %791 = vmatpush1.bf16.msra.mxu0 0
        %792 = vmatprep.subr.bf16.mxu0 0
        %793 = vmatpush1.bf16.msra.mxu0 0
        %794 = vmatprep.subr.bf16.mxu0 0
        %795 = vmatpush1.bf16.msra.mxu0 0
        %796 = vmatprep.subr.bf16.mxu0 0
        %797 = vmatpush1.bf16.msra.mxu0 0
        %798 = vmatprep.subr.bf16.mxu0 0
        %799 = vmatpush1.bf16.msra.mxu0 0
        %800 = vmatprep.subr.bf16.mxu0 0
        %801 = vmatpush1.bf16.msra.mxu0 0
        %802 = vmatprep.subr.bf16.mxu0 0
        %803 = vmatpush1.bf16.msra.mxu0 0
        %804 = vmatprep.mubr.bf16.mxu0 0
        %805 = vmatmul.mubr.bf16.gmra.mrb[0].mxu0 %v701
        %v806 = vpop.f32.mrb[0].mxu0
        %v807 = vadd.f32 0.0, %v806
        %v808 = vpop.f32.mrb[0].mxu0
        %v809 = vpop.f32.mrb[0].mxu0
        %v810 = vadd.f32 0.0, %v809
        %v811 = vpop.f32.mrb[0].mxu0
        %812 = vmatprep.mubr.bf16.mxu0 0
        %813 = vmatmul.mubr.bf16.gmra.mrb[0].mxu0 %v702
        %v814 = vpop.f32.mrb[0].mxu0
        %v815 = vadd.f32 0.0, %v814
        %v816 = vpop.f32.mrb[0].mxu0
        %v817 = vpop.f32.mrb[0].mxu0
        %v818 = vadd.f32 0.0, %v817
        %v819 = vpop.f32.mrb[0].mxu0
        %820 = vmatprep.mubr.bf16.mxu0 0
        %821 = vmatmul.mubr.bf16.gmra.mrb[0].mxu0 %v703
        %v822 = vpop.f32.mrb[0].mxu0
        %v823 = vadd.f32 0.0, %v822
        %v824 = vpop.f32.mrb[0].mxu0
        %v825 = vpop.f32.mrb[0].mxu0
        %v826 = vadd.f32 0.0, %v825
        %v827 = vpop.f32.mrb[0].mxu0
        %828 = vmatprep.mubr.bf16.mxu0 0
        %829 = vmatmul.mubr.bf16.gmra.mrb[0].mxu0 %v704
        %v830 = vpop.f32.mrb[0].mxu0
        %v831 = vadd.f32 0.0, %v830
        %v832 = vpop.f32.mrb[0].mxu0
        %v833 = vpop.f32.mrb[0].mxu0
        %v834 = vadd.f32 0.0, %v833
        %v835 = vpop.f32.mrb[0].mxu0
        %836 = vmatprep.mubr.bf16.mxu0 0
        %837 = vmatmul.mubr.bf16.gmra.mrb[0].mxu0 %v705
        %v838 = vpop.f32.mrb[0].mxu0
        %v839 = vadd.f32 0.0, %v838
        %v840 = vpop.f32.mrb[0].mxu0
        %v841 = vpop.f32.mrb[0].mxu0
        %v842 = vadd.f32 0.0, %v841
        %v843 = vpop.f32.mrb[0].mxu0
        %844 = vmatprep.mubr.bf16.mxu0 0
        %845 = vmatmul.mubr.bf16.gmra.mrb[0].mxu0 %v706
        %v846 = vpop.f32.mrb[0].mxu0
        %v847 = vadd.f32 0.0, %v846
        %v848 = vpop.f32.mrb[0].mxu0
        %v849 = vpop.f32.mrb[0].mxu0
        %v850 = vpop.f32.mrb[0].mxu0
        %851 = vdwg.mxu0
        %v852 = vadd.f32 %v645, %v807
        %v853 = vadd.f32 %v648, %v810
        %v854 = vadd.f32 %v653, %v815
        %v855 = vadd.f32 %v656, %v818
        %v856 = vadd.f32 %v661, %v823
        %v857 = vadd.f32 %v664, %v826
        %v858 = vadd.f32 %v669, %v831
        %v859 = vadd.f32 %v672, %v834
        %v860 = vadd.f32 %v677, %v839
        %v861 = vadd.f32 %v680, %v842
        %v862 = vadd.f32 %v685, %v847
        %v863 = vld [vmem:[#allocation8] sm:$0x1]
        %v865 = vlaneseq
        %v866 = vshrl.u32 %v865, 7
        %v867 = vsub.s32 0, %v866
        %v868 = vrot.slane %v863, %v867
        %v870 = vadd.f32 %v852, %v868
        %v871 = vadd.f32 %v853, %v868
        %v872 = vadd.f32 %v854, %v868
        %v873 = vadd.f32 %v855, %v868
        %v874 = vadd.f32 %v856, %v868
        %v875 = vadd.f32 %v857, %v868
        %v876 = vadd.f32 %v858, %v868
        %v877 = vadd.f32 %v859, %v868
        %v878 = vadd.f32 %v860, %v868
        %v879 = vadd.f32 %v861, %v868
        %v880 = vadd.f32 %v862, %v868
        %v881 = vmul.f32 %v870, 0.1
        %v882 = vmul.f32 %v871, 0.1
        %v883 = vmul.f32 %v872, 0.1
        %v884 = vmul.f32 %v873, 0.1
        %v885 = vmul.f32 %v874, 0.1
        %v886 = vmul.f32 %v875, 0.1
        %v887 = vmul.f32 %v876, 0.1
        %v888 = vmul.f32 %v877, 0.1
        %v889 = vmul.f32 %v878, 0.1
        %v890 = vmul.f32 %v879, 0.1
        %v891 = vmul.f32 %v880, 0.1
        %v892 = vmax.f32 %v870, %v881
        %v893 = vmax.f32 %v871, %v882
        %v894 = vmax.f32 %v872, %v883
        %v895 = vmax.f32 %v873, %v884
        %v896 = vmax.f32 %v874, %v885
        %v897 = vmax.f32 %v875, %v886
        %v898 = vmax.f32 %v876, %v887
        %v899 = vmax.f32 %v877, %v888
        %v900 = vmax.f32 %v878, %v889
        %v901 = vmax.f32 %v879, %v890
        %v902 = vmax.f32 %v880, %v891
        %v903 = vsel %vm334, %v892, 0.0
        %v904 = vsel %vm335, %v893, 0.0
        %v905 = vsel %vm336, %v894, 0.0
        %v906 = vsel %vm337, %v895, 0.0
        %v907 = vsel %vm338, %v896, 0.0
        %v908 = vsel %vm339, %v897, 0.0
        %v909 = vsel %vm340, %v898, 0.0
        %v910 = vsel %vm341, %v899, 0.0
        %v911 = vsel %vm342, %v900, 0.0
        %v912 = vsel %vm343, %v901, 0.0
        %v913 = vsel %vm344, %v902, 0.0
        %914 = vst [vmem:[#allocation3 + $0x8] sm:$0xff] %v903
        %915 = vst [vmem:[#allocation3 + $0x10] sm:$0xff] %v904
        %916 = vst [vmem:[#allocation3 + $0x18] sm:$0xff] %v905
        %917 = vst [vmem:[#allocation3 + $0x20] sm:$0xff] %v906
        %918 = vst [vmem:[#allocation3 + $0x28] sm:$0xff] %v907
        %919 = vst [vmem:[#allocation3 + $0x30] sm:$0xff] %v908
        %920 = vst [vmem:[#allocation3 + $0x38] sm:$0xff] %v909
        %921 = vst [vmem:[#allocation3 + $0x40] sm:$0xff] %v910
        %922 = vst [vmem:[#allocation3 + $0x48] sm:$0xff] %v911
        %923 = vst [vmem:[#allocation3 + $0x50] sm:$0xff] %v912
        %924 = vst [vmem:[#allocation3 + $0x58] sm:$0xff] %v913
        %v925 = vld [vmem:[#allocation3 + $0x7] sm:$0xff]
        %v926 = vld [vmem:[#allocation3 + $0xf] sm:$0xff]
        %v927 = vld [vmem:[#allocation3 + $0x17] sm:$0xff]
        %v928 = vld [vmem:[#allocation3 + $0x1f] sm:$0xff]
        %v929 = vld [vmem:[#allocation3 + $0x27] sm:$0xff]
        %v930 = vld [vmem:[#allocation3 + $0x2f] sm:$0xff]
        %v931 = vld [vmem:[#allocation3 + $0x37] sm:$0xff]
        %v932 = vld [vmem:[#allocation3 + $0x3f] sm:$0xff]
        %v933 = vld [vmem:[#allocation3 + $0x47] sm:$0xff]
        %v934 = vld [vmem:[#allocation3 + $0x4f] sm:$0xff]
        %v935 = vld [vmem:[#allocation3 + $0x57] sm:$0xff]
        %v936 = vpack.c.bf16 %v926, %v925
        %v937 = vpack.c.bf16 %v928, %v927
        %v938 = vpack.c.bf16 %v930, %v929
        %v939 = vpack.c.bf16 %v932, %v931
        %v940 = vpack.c.bf16 %v934, %v933
        %v941 = vpack.c.bf16 %v935, %v935
        %s942 = scalar_lea.vmem [#allocation5], 192
        %v943 = vld [vmem:[%s942] sm:$0xf]
        %v944 = vld [vmem:[%s942 + $0x4] sm:$0xf]
        %v945 = vld [vmem:[%s942 + $0x8] sm:$0xf]
        %v946 = vld [vmem:[%s942 + $0xc] sm:$0xf]
        %v947 = vld [vmem:[%s942 + $0x10] sm:$0xf]
        %v948 = vld [vmem:[%s942 + $0x14] sm:$0xf]
        %v949 = vld [vmem:[%s942 + $0x18] sm:$0xf]
        %v950 = vld [vmem:[%s942 + $0x1c] sm:$0xf]
        %v951 = vld [vmem:[%s942 + $0x20] sm:$0xf]
        %v952 = vld [vmem:[%s942 + $0x24] sm:$0xf]
        %v953 = vld [vmem:[%s942 + $0x28] sm:$0xf]
        %v954 = vld [vmem:[%s942 + $0x2c] sm:$0xf]
        %v955 = vld [vmem:[%s942 + $0x30] sm:$0xf]
        %v956 = vld [vmem:[%s942 + $0x34] sm:$0xf]
        %v957 = vld [vmem:[%s942 + $0x38] sm:$0xf]
        %v958 = vld [vmem:[%s942 + $0x3c] sm:$0xf]
        %v959 = vld [vmem:[#allocation3 + $0x8] sm:$0xff]
        %v960 = vld [vmem:[#allocation3 + $0x10] sm:$0xff]
        %v961 = vld [vmem:[#allocation3 + $0x18] sm:$0xff]
        %v962 = vld [vmem:[#allocation3 + $0x20] sm:$0xff]
        %v963 = vld [vmem:[#allocation3 + $0x28] sm:$0xff]
        %v964 = vld [vmem:[#allocation3 + $0x30] sm:$0xff]
        %v965 = vld [vmem:[#allocation3 + $0x38] sm:$0xff]
        %v966 = vld [vmem:[#allocation3 + $0x40] sm:$0xff]
        %v967 = vld [vmem:[#allocation3 + $0x48] sm:$0xff]
        %v968 = vld [vmem:[#allocation3 + $0x50] sm:$0xff]
        %v969 = vld [vmem:[#allocation3 + $0x58] sm:$0xff]
        %v970 = vpack.c.bf16 %v960, %v959
        %v971 = vpack.c.bf16 %v962, %v961
        %v972 = vpack.c.bf16 %v964, %v963
        %v973 = vpack.c.bf16 %v966, %v965
        %v974 = vpack.c.bf16 %v968, %v967
        %v975 = vpack.c.bf16 %v969, %v969
        %s976 = scalar_lea.vmem [#allocation5], 256
        %v977 = vld [vmem:[%s976] sm:$0xf]
        %v978 = vld [vmem:[%s976 + $0x4] sm:$0xf]
        %v979 = vld [vmem:[%s976 + $0x8] sm:$0xf]
        %v980 = vld [vmem:[%s976 + $0xc] sm:$0xf]
        %v981 = vld [vmem:[%s976 + $0x10] sm:$0xf]
        %v982 = vld [vmem:[%s976 + $0x14] sm:$0xf]
        %v983 = vld [vmem:[%s976 + $0x18] sm:$0xf]
        %v984 = vld [vmem:[%s976 + $0x1c] sm:$0xf]
        %v985 = vld [vmem:[%s976 + $0x20] sm:$0xf]
        %v986 = vld [vmem:[%s976 + $0x24] sm:$0xf]
        %v987 = vld [vmem:[%s976 + $0x28] sm:$0xf]
        %v988 = vld [vmem:[%s976 + $0x2c] sm:$0xf]
        %v989 = vld [vmem:[%s976 + $0x30] sm:$0xf]
        %v990 = vld [vmem:[%s976 + $0x34] sm:$0xf]
        %v991 = vld [vmem:[%s976 + $0x38] sm:$0xf]
        %v992 = vld [vmem:[%s976 + $0x3c] sm:$0xf]
        %v1009 = vunpack.c.l.b16 %v977
        %v1010 = vunpack.c.l.b16 %v978
        %v1011 = vunpack.c.l.b16 %v979
        %v1012 = vunpack.c.l.b16 %v980
        %v1013 = vunpack.c.l.b16 %v981
        %v1014 = vunpack.c.l.b16 %v982
        %v1015 = vunpack.c.l.b16 %v983
        %v1016 = vunpack.c.l.b16 %v984
        %v1017 = vunpack.c.l.b16 %v985
        %v1018 = vunpack.c.l.b16 %v986
        %v1019 = vunpack.c.l.b16 %v987
        %v1020 = vunpack.c.l.b16 %v988
        %v1021 = vunpack.c.l.b16 %v989
        %v1022 = vunpack.c.l.b16 %v990
        %v1023 = vunpack.c.l.b16 %v991
        %v1024 = vunpack.c.l.b16 %v992
        %v1025 = vpack.c.b16 %v1010, %v1009
        %v1026 = vpack.c.b16 %v1012, %v1011
        %v1027 = vpack.c.b16 %v1014, %v1013
        %v1028 = vpack.c.b16 %v1016, %v1015
        %v1029 = vpack.c.b16 %v1018, %v1017
        %v1030 = vpack.c.b16 %v1020, %v1019
        %v1031 = vpack.c.b16 %v1022, %v1021
        %v1032 = vpack.c.b16 %v1024, %v1023
        %1041 = vmatprep.subr.bf16.mxu0 0
        %1042 = vmatpush1.bf16.msra.mxu0 %v1025
        %1043 = vmatprep.subr.bf16.mxu0 0
        %1044 = vmatpush1.bf16.msra.mxu0 %v1026
        %1045 = vmatprep.subr.bf16.mxu0 0
        %1046 = vmatpush1.bf16.msra.mxu0 %v1027
        %1047 = vmatprep.subr.bf16.mxu0 0
        %1048 = vmatpush1.bf16.msra.mxu0 %v1028
        %1049 = vmatprep.subr.bf16.mxu0 0
        %1050 = vmatpush1.bf16.msra.mxu0 %v1029
        %1051 = vmatprep.subr.bf16.mxu0 0
        %1052 = vmatpush1.bf16.msra.mxu0 %v1030
        %1053 = vmatprep.subr.bf16.mxu0 0
        %1054 = vmatpush1.bf16.msra.mxu0 %v1031
        %1055 = vmatprep.subr.bf16.mxu0 0
        %1056 = vmatpush1.bf16.msra.mxu0 %v1032
        %1057 = vmatprep.subr.bf16.mxu0 0
        %1058 = vmatpush1.bf16.msra.mxu0 0
        %1059 = vmatprep.subr.bf16.mxu0 0
        %1060 = vmatpush1.bf16.msra.mxu0 0
        %1061 = vmatprep.subr.bf16.mxu0 0
        %1062 = vmatpush1.bf16.msra.mxu0 0
        %1063 = vmatprep.subr.bf16.mxu0 0
        %1064 = vmatpush1.bf16.msra.mxu0 0
        %1065 = vmatprep.subr.bf16.mxu0 0
        %1066 = vmatpush1.bf16.msra.mxu0 0
        %1067 = vmatprep.subr.bf16.mxu0 0
        %1068 = vmatpush1.bf16.msra.mxu0 0
        %1069 = vmatprep.subr.bf16.mxu0 0
        %1070 = vmatpush1.bf16.msra.mxu0 0
        %1071 = vmatprep.subr.bf16.mxu0 0
        %1072 = vmatpush1.bf16.msra.mxu0 0
        %1073 = vmatprep.mubr.bf16.mxu0 0
        %1074 = vmatmul.mubr.bf16.gmra.mrb[0].mxu0 %v970
        %v1075 = vpop.f32.mrb[0].mxu0
        %v1076 = vadd.f32 0.0, %v1075
        %v1077 = vpop.f32.mrb[0].mxu0
        %v1078 = vpop.f32.mrb[0].mxu0
        %v1079 = vadd.f32 0.0, %v1078
        %v1080 = vpop.f32.mrb[0].mxu0
        %1081 = vmatprep.mubr.bf16.mxu0 0
        %1082 = vmatmul.mubr.bf16.gmra.mrb[0].mxu0 %v971
        %v1083 = vpop.f32.mrb[0].mxu0
        %v1084 = vadd.f32 0.0, %v1083
        %v1085 = vpop.f32.mrb[0].mxu0
        %v1086 = vpop.f32.mrb[0].mxu0
        %v1087 = vadd.f32 0.0, %v1086
        %v1088 = vpop.f32.mrb[0].mxu0
        %1089 = vmatprep.mubr.bf16.mxu0 0
        %1090 = vmatmul.mubr.bf16.gmra.mrb[0].mxu0 %v972
        %v1091 = vpop.f32.mrb[0].mxu0
        %v1092 = vadd.f32 0.0, %v1091
        %v1093 = vpop.f32.mrb[0].mxu0
        %v1094 = vpop.f32.mrb[0].mxu0
        %v1095 = vadd.f32 0.0, %v1094
        %v1096 = vpop.f32.mrb[0].mxu0
        %1097 = vmatprep.mubr.bf16.mxu0 0
        %1098 = vmatmul.mubr.bf16.gmra.mrb[0].mxu0 %v973
        %v1099 = vpop.f32.mrb[0].mxu0
        %v1100 = vadd.f32 0.0, %v1099
        %v1101 = vpop.f32.mrb[0].mxu0
        %v1102 = vpop.f32.mrb[0].mxu0
        %v1103 = vadd.f32 0.0, %v1102
        %v1104 = vpop.f32.mrb[0].mxu0
        %1105 = vmatprep.mubr.bf16.mxu0 0
        %1106 = vmatmul.mubr.bf16.gmra.mrb[0].mxu0 %v974
        %v1107 = vpop.f32.mrb[0].mxu0
        %v1108 = vadd.f32 0.0, %v1107
        %v1109 = vpop.f32.mrb[0].mxu0
        %v1110 = vpop.f32.mrb[0].mxu0
        %v1111 = vadd.f32 0.0, %v1110
        %v1112 = vpop.f32.mrb[0].mxu0
        %1113 = vmatprep.mubr.bf16.mxu0 0
        %1114 = vmatmul.mubr.bf16.gmra.mrb[0].mxu0 %v975
        %v1115 = vpop.f32.mrb[0].mxu0
        %v1116 = vadd.f32 0.0, %v1115
        %v1117 = vpop.f32.mrb[0].mxu0
        %v1118 = vpop.f32.mrb[0].mxu0
        %v1119 = vpop.f32.mrb[0].mxu0
        %1120 = vdwg.mxu0
        %v1137 = vunpack.c.l.b16 %v943
        %v1138 = vunpack.c.l.b16 %v944
        %v1139 = vunpack.c.l.b16 %v945
        %v1140 = vunpack.c.l.b16 %v946
        %v1141 = vunpack.c.l.b16 %v947
        %v1142 = vunpack.c.l.b16 %v948
        %v1143 = vunpack.c.l.b16 %v949
        %v1144 = vunpack.c.l.b16 %v950
        %v1145 = vunpack.c.l.b16 %v951
        %v1146 = vunpack.c.l.b16 %v952
        %v1147 = vunpack.c.l.b16 %v953
        %v1148 = vunpack.c.l.b16 %v954
        %v1149 = vunpack.c.l.b16 %v955
        %v1150 = vunpack.c.l.b16 %v956
        %v1151 = vunpack.c.l.b16 %v957
        %v1152 = vunpack.c.l.b16 %v958
        %v1153 = vpack.c.b16 %v1138, %v1137
        %v1154 = vpack.c.b16 %v1140, %v1139
        %v1155 = vpack.c.b16 %v1142, %v1141
        %v1156 = vpack.c.b16 %v1144, %v1143
        %v1157 = vpack.c.b16 %v1146, %v1145
        %v1158 = vpack.c.b16 %v1148, %v1147
        %v1159 = vpack.c.b16 %v1150, %v1149
        %v1160 = vpack.c.b16 %v1152, %v1151
        %1169 = vmatprep.subr.bf16.mxu0 0
        %1170 = vmatpush1.bf16.msra.mxu0 %v1153
        %1171 = vmatprep.subr.bf16.mxu0 0
        %1172 = vmatpush1.bf16.msra.mxu0 %v1154
        %1173 = vmatprep.subr.bf16.mxu0 0
        %1174 = vmatpush1.bf16.msra.mxu0 %v1155
        %1175 = vmatprep.subr.bf16.mxu0 0
        %1176 = vmatpush1.bf16.msra.mxu0 %v1156
        %1177 = vmatprep.subr.bf16.mxu0 0
        %1178 = vmatpush1.bf16.msra.mxu0 %v1157
        %1179 = vmatprep.subr.bf16.mxu0 0
        %1180 = vmatpush1.bf16.msra.mxu0 %v1158
        %1181 = vmatprep.subr.bf16.mxu0 0
        %1182 = vmatpush1.bf16.msra.mxu0 %v1159
        %1183 = vmatprep.subr.bf16.mxu0 0
        %1184 = vmatpush1.bf16.msra.mxu0 %v1160
        %1185 = vmatprep.subr.bf16.mxu0 0
        %1186 = vmatpush1.bf16.msra.mxu0 0
        %1187 = vmatprep.subr.bf16.mxu0 0
        %1188 = vmatpush1.bf16.msra.mxu0 0
        %1189 = vmatprep.subr.bf16.mxu0 0
        %1190 = vmatpush1.bf16.msra.mxu0 0
        %1191 = vmatprep.subr.bf16.mxu0 0
        %1192 = vmatpush1.bf16.msra.mxu0 0
        %1193 = vmatprep.subr.bf16.mxu0 0
        %1194 = vmatpush1.bf16.msra.mxu0 0
        %1195 = vmatprep.subr.bf16.mxu0 0
        %1196 = vmatpush1.bf16.msra.mxu0 0
        %1197 = vmatprep.subr.bf16.mxu0 0
        %1198 = vmatpush1.bf16.msra.mxu0 0
        %1199 = vmatprep.subr.bf16.mxu0 0
        %1200 = vmatpush1.bf16.msra.mxu0 0
        %1201 = vmatprep.mubr.bf16.mxu0 0
        %1202 = vmatmul.mubr.bf16.gmra.mrb[0].mxu0 %v936
        %v1203 = vpop.f32.mrb[0].mxu0
        %v1204 = vadd.f32 %v1076, %v1203
        %v1205 = vpop.f32.mrb[0].mxu0
        %v1206 = vpop.f32.mrb[0].mxu0
        %v1207 = vadd.f32 %v1079, %v1206
        %v1208 = vpop.f32.mrb[0].mxu0
        %1209 = vmatprep.mubr.bf16.mxu0 0
        %1210 = vmatmul.mubr.bf16.gmra.mrb[0].mxu0 %v937
        %v1211 = vpop.f32.mrb[0].mxu0
        %v1212 = vadd.f32 %v1084, %v1211
        %v1213 = vpop.f32.mrb[0].mxu0
        %v1214 = vpop.f32.mrb[0].mxu0
        %v1215 = vadd.f32 %v1087, %v1214
        %v1216 = vpop.f32.mrb[0].mxu0
        %1217 = vmatprep.mubr.bf16.mxu0 0
        %1218 = vmatmul.mubr.bf16.gmra.mrb[0].mxu0 %v938
        %v1219 = vpop.f32.mrb[0].mxu0
        %v1220 = vadd.f32 %v1092, %v1219
        %v1221 = vpop.f32.mrb[0].mxu0
        %v1222 = vpop.f32.mrb[0].mxu0
        %v1223 = vadd.f32 %v1095, %v1222
        %v1224 = vpop.f32.mrb[0].mxu0
        %1225 = vmatprep.mubr.bf16.mxu0 0
        %1226 = vmatmul.mubr.bf16.gmra.mrb[0].mxu0 %v939
        %v1227 = vpop.f32.mrb[0].mxu0
        %v1228 = vadd.f32 %v1100, %v1227
        %v1229 = vpop.f32.mrb[0].mxu0
        %v1230 = vpop.f32.mrb[0].mxu0
        %v1231 = vadd.f32 %v1103, %v1230
        %v1232 = vpop.f32.mrb[0].mxu0
        %1233 = vmatprep.mubr.bf16.mxu0 0
        %1234 = vmatmul.mubr.bf16.gmra.mrb[0].mxu0 %v940
        %v1235 = vpop.f32.mrb[0].mxu0
        %v1236 = vadd.f32 %v1108, %v1235
        %v1237 = vpop.f32.mrb[0].mxu0
        %v1238 = vpop.f32.mrb[0].mxu0
        %v1239 = vadd.f32 %v1111, %v1238
        %v1240 = vpop.f32.mrb[0].mxu0
        %1241 = vmatprep.mubr.bf16.mxu0 0
        %1242 = vmatmul.mubr.bf16.gmra.mrb[0].mxu0 %v941
        %v1243 = vpop.f32.mrb[0].mxu0
        %v1244 = vadd.f32 %v1116, %v1243
        %v1245 = vpop.f32.mrb[0].mxu0
        %v1246 = vpop.f32.mrb[0].mxu0
        %v1247 = vpop.f32.mrb[0].mxu0
        %1248 = vdwg.mxu0
        %v1249 = vld [vmem:[#allocation3 + $0x9] sm:$0xff]
        %v1250 = vld [vmem:[#allocation3 + $0x11] sm:$0xff]
        %v1251 = vld [vmem:[#allocation3 + $0x19] sm:$0xff]
        %v1252 = vld [vmem:[#allocation3 + $0x21] sm:$0xff]
        %v1253 = vld [vmem:[#allocation3 + $0x29] sm:$0xff]
        %v1254 = vld [vmem:[#allocation3 + $0x31] sm:$0xff]
        %v1255 = vld [vmem:[#allocation3 + $0x39] sm:$0xff]
        %v1256 = vld [vmem:[#allocation3 + $0x41] sm:$0xff]
        %v1257 = vld [vmem:[#allocation3 + $0x49] sm:$0xff]
        %v1258 = vld [vmem:[#allocation3 + $0x51] sm:$0xff]
        %v1259 = vld [vmem:[#allocation3 + $0x59] sm:$0xff]
        %v1260 = vpack.c.bf16 %v1250, %v1249
        %v1261 = vpack.c.bf16 %v1252, %v1251
        %v1262 = vpack.c.bf16 %v1254, %v1253
        %v1263 = vpack.c.bf16 %v1256, %v1255
        %v1264 = vpack.c.bf16 %v1258, %v1257
        %v1265 = vpack.c.bf16 %v1259, %v1259
        %s1266 = scalar_lea.vmem [#allocation5], 320
        %v1267 = vld [vmem:[%s1266] sm:$0xf]
        %v1268 = vld [vmem:[%s1266 + $0x4] sm:$0xf]
        %v1269 = vld [vmem:[%s1266 + $0x8] sm:$0xf]
        %v1270 = vld [vmem:[%s1266 + $0xc] sm:$0xf]
        %v1271 = vld [vmem:[%s1266 + $0x10] sm:$0xf]
        %v1272 = vld [vmem:[%s1266 + $0x14] sm:$0xf]
        %v1273 = vld [vmem:[%s1266 + $0x18] sm:$0xf]
        %v1274 = vld [vmem:[%s1266 + $0x1c] sm:$0xf]
        %v1275 = vld [vmem:[%s1266 + $0x20] sm:$0xf]
        %v1276 = vld [vmem:[%s1266 + $0x24] sm:$0xf]
        %v1277 = vld [vmem:[%s1266 + $0x28] sm:$0xf]
        %v1278 = vld [vmem:[%s1266 + $0x2c] sm:$0xf]
        %v1279 = vld [vmem:[%s1266 + $0x30] sm:$0xf]
        %v1280 = vld [vmem:[%s1266 + $0x34] sm:$0xf]
        %v1281 = vld [vmem:[%s1266 + $0x38] sm:$0xf]
        %v1282 = vld [vmem:[%s1266 + $0x3c] sm:$0xf]
        %v1299 = vunpack.c.l.b16 %v1267
        %v1300 = vunpack.c.l.b16 %v1268
        %v1301 = vunpack.c.l.b16 %v1269
        %v1302 = vunpack.c.l.b16 %v1270
        %v1303 = vunpack.c.l.b16 %v1271
        %v1304 = vunpack.c.l.b16 %v1272
        %v1305 = vunpack.c.l.b16 %v1273
        %v1306 = vunpack.c.l.b16 %v1274
        %v1307 = vunpack.c.l.b16 %v1275
        %v1308 = vunpack.c.l.b16 %v1276
        %v1309 = vunpack.c.l.b16 %v1277
        %v1310 = vunpack.c.l.b16 %v1278
        %v1311 = vunpack.c.l.b16 %v1279
        %v1312 = vunpack.c.l.b16 %v1280
        %v1313 = vunpack.c.l.b16 %v1281
        %v1314 = vunpack.c.l.b16 %v1282
        %v1315 = vpack.c.b16 %v1300, %v1299
        %v1316 = vpack.c.b16 %v1302, %v1301
        %v1317 = vpack.c.b16 %v1304, %v1303
        %v1318 = vpack.c.b16 %v1306, %v1305
        %v1319 = vpack.c.b16 %v1308, %v1307
        %v1320 = vpack.c.b16 %v1310, %v1309
        %v1321 = vpack.c.b16 %v1312, %v1311
        %v1322 = vpack.c.b16 %v1314, %v1313
        %1331 = vmatprep.subr.bf16.mxu0 0
        %1332 = vmatpush1.bf16.msra.mxu0 %v1315
        %1333 = vmatprep.subr.bf16.mxu0 0
        %1334 = vmatpush1.bf16.msra.mxu0 %v1316
        %1335 = vmatprep.subr.bf16.mxu0 0
        %1336 = vmatpush1.bf16.msra.mxu0 %v1317
        %1337 = vmatprep.subr.bf16.mxu0 0
        %1338 = vmatpush1.bf16.msra.mxu0 %v1318
        %1339 = vmatprep.subr.bf16.mxu0 0
        %1340 = vmatpush1.bf16.msra.mxu0 %v1319
        %1341 = vmatprep.subr.bf16.mxu0 0
        %1342 = vmatpush1.bf16.msra.mxu0 %v1320
        %1343 = vmatprep.subr.bf16.mxu0 0
        %1344 = vmatpush1.bf16.msra.mxu0 %v1321
        %1345 = vmatprep.subr.bf16.mxu0 0
        %1346 = vmatpush1.bf16.msra.mxu0 %v1322
        %1347 = vmatprep.subr.bf16.mxu0 0
        %1348 = vmatpush1.bf16.msra.mxu0 0
        %1349 = vmatprep.subr.bf16.mxu0 0
        %1350 = vmatpush1.bf16.msra.mxu0 0
        %1351 = vmatprep.subr.bf16.mxu0 0
        %1352 = vmatpush1.bf16.msra.mxu0 0
        %1353 = vmatprep.subr.bf16.mxu0 0
        %1354 = vmatpush1.bf16.msra.mxu0 0
        %1355 = vmatprep.subr.bf16.mxu0 0
        %1356 = vmatpush1.bf16.msra.mxu0 0
        %1357 = vmatprep.subr.bf16.mxu0 0
        %1358 = vmatpush1.bf16.msra.mxu0 0
        %1359 = vmatprep.subr.bf16.mxu0 0
        %1360 = vmatpush1.bf16.msra.mxu0 0
        %1361 = vmatprep.subr.bf16.mxu0 0
        %1362 = vmatpush1.bf16.msra.mxu0 0
        %1363 = vmatprep.mubr.bf16.mxu0 0
        %1364 = vmatmul.mubr.bf16.gmra.mrb[0].mxu0 %v1260
        %v1365 = vpop.f32.mrb[0].mxu0
        %v1366 = vadd.f32 0.0, %v1365
        %v1367 = vpop.f32.mrb[0].mxu0
        %v1368 = vpop.f32.mrb[0].mxu0
        %v1369 = vadd.f32 0.0, %v1368
        %v1370 = vpop.f32.mrb[0].mxu0
        %1371 = vmatprep.mubr.bf16.mxu0 0
        %1372 = vmatmul.mubr.bf16.gmra.mrb[0].mxu0 %v1261
        %v1373 = vpop.f32.mrb[0].mxu0
        %v1374 = vadd.f32 0.0, %v1373
        %v1375 = vpop.f32.mrb[0].mxu0
        %v1376 = vpop.f32.mrb[0].mxu0
        %v1377 = vadd.f32 0.0, %v1376
        %v1378 = vpop.f32.mrb[0].mxu0
        %1379 = vmatprep.mubr.bf16.mxu0 0
        %1380 = vmatmul.mubr.bf16.gmra.mrb[0].mxu0 %v1262
        %v1381 = vpop.f32.mrb[0].mxu0
        %v1382 = vadd.f32 0.0, %v1381
        %v1383 = vpop.f32.mrb[0].mxu0
        %v1384 = vpop.f32.mrb[0].mxu0
        %v1385 = vadd.f32 0.0, %v1384
        %v1386 = vpop.f32.mrb[0].mxu0
        %1387 = vmatprep.mubr.bf16.mxu0 0
        %1388 = vmatmul.mubr.bf16.gmra.mrb[0].mxu0 %v1263
        %v1389 = vpop.f32.mrb[0].mxu0
        %v1390 = vadd.f32 0.0, %v1389
        %v1391 = vpop.f32.mrb[0].mxu0
        %v1392 = vpop.f32.mrb[0].mxu0
        %v1393 = vadd.f32 0.0, %v1392
        %v1394 = vpop.f32.mrb[0].mxu0
        %1395 = vmatprep.mubr.bf16.mxu0 0
        %1396 = vmatmul.mubr.bf16.gmra.mrb[0].mxu0 %v1264
        %v1397 = vpop.f32.mrb[0].mxu0
        %v1398 = vadd.f32 0.0, %v1397
        %v1399 = vpop.f32.mrb[0].mxu0
        %v1400 = vpop.f32.mrb[0].mxu0
        %v1401 = vadd.f32 0.0, %v1400
        %v1402 = vpop.f32.mrb[0].mxu0
        %1403 = vmatprep.mubr.bf16.mxu0 0
        %1404 = vmatmul.mubr.bf16.gmra.mrb[0].mxu0 %v1265
        %v1405 = vpop.f32.mrb[0].mxu0
        %v1406 = vadd.f32 0.0, %v1405
        %v1407 = vpop.f32.mrb[0].mxu0
        %v1408 = vpop.f32.mrb[0].mxu0
        %v1409 = vpop.f32.mrb[0].mxu0
        %1410 = vdwg.mxu0
        %v1411 = vadd.f32 %v1204, %v1366
        %v1412 = vadd.f32 %v1207, %v1369
        %v1413 = vadd.f32 %v1212, %v1374
        %v1414 = vadd.f32 %v1215, %v1377
        %v1415 = vadd.f32 %v1220, %v1382
        %v1416 = vadd.f32 %v1223, %v1385
        %v1417 = vadd.f32 %v1228, %v1390
        %v1418 = vadd.f32 %v1231, %v1393
        %v1419 = vadd.f32 %v1236, %v1398
        %v1420 = vadd.f32 %v1239, %v1401
        %v1421 = vadd.f32 %v1244, %v1406
        %s1422 = scalar_lea.vmem [#allocation8], 1
        %v1423 = vld [vmem:[%s1422] sm:$0x1]
        %v1425 = vlaneseq
        %v1426 = vshrl.u32 %v1425, 7
        %v1427 = vsub.s32 0, %v1426
        %v1428 = vrot.slane %v1423, %v1427
        %v1430 = vadd.f32 %v1411, %v1428
        %v1431 = vadd.f32 %v1412, %v1428
        %v1432 = vadd.f32 %v1413, %v1428
        %v1433 = vadd.f32 %v1414, %v1428
        %v1434 = vadd.f32 %v1415, %v1428
        %v1435 = vadd.f32 %v1416, %v1428
        %v1436 = vadd.f32 %v1417, %v1428
        %v1437 = vadd.f32 %v1418, %v1428
        %v1438 = vadd.f32 %v1419, %v1428
        %v1439 = vadd.f32 %v1420, %v1428
        %v1440 = vadd.f32 %v1421, %v1428
        %v1441 = vadd.f32 %v290, %v1430
        %v1442 = vadd.f32 %v291, %v1431
        %v1443 = vadd.f32 %v292, %v1432
        %v1444 = vadd.f32 %v293, %v1433
        %v1445 = vadd.f32 %v294, %v1434
        %v1446 = vadd.f32 %v295, %v1435
        %v1447 = vadd.f32 %v296, %v1436
        %v1448 = vadd.f32 %v297, %v1437
        %v1449 = vadd.f32 %v298, %v1438
        %v1450 = vadd.f32 %v299, %v1439
        %v1451 = vadd.f32 %v300, %v1440
        %v1452 = vmul.f32 %v1441, 0.1
        %v1453 = vmul.f32 %v1442, 0.1
        %v1454 = vmul.f32 %v1443, 0.1
        %v1455 = vmul.f32 %v1444, 0.1
        %v1456 = vmul.f32 %v1445, 0.1
        %v1457 = vmul.f32 %v1446, 0.1
        %v1458 = vmul.f32 %v1447, 0.1
        %v1459 = vmul.f32 %v1448, 0.1
        %v1460 = vmul.f32 %v1449, 0.1
        %v1461 = vmul.f32 %v1450, 0.1
        %v1462 = vmul.f32 %v1451, 0.1
        %v1463 = vmax.f32 %v1441, %v1452
        %v1464 = vmax.f32 %v1442, %v1453
        %v1465 = vmax.f32 %v1443, %v1454
        %v1466 = vmax.f32 %v1444, %v1455
        %v1467 = vmax.f32 %v1445, %v1456
        %v1468 = vmax.f32 %v1446, %v1457
        %v1469 = vmax.f32 %v1447, %v1458
        %v1470 = vmax.f32 %v1448, %v1459
        %v1471 = vmax.f32 %v1449, %v1460
        %v1472 = vmax.f32 %v1450, %v1461
        %v1473 = vmax.f32 %v1451, %v1462
        %v1474 = vsel %vm334, %v1463, 0.0
        %v1475 = vsel %vm335, %v1464, 0.0
        %v1476 = vsel %vm336, %v1465, 0.0
        %v1477 = vsel %vm337, %v1466, 0.0
        %v1478 = vsel %vm338, %v1467, 0.0
        %v1479 = vsel %vm339, %v1468, 0.0
        %v1480 = vsel %vm340, %v1469, 0.0
        %v1481 = vsel %vm341, %v1470, 0.0
        %v1482 = vsel %vm342, %v1471, 0.0
        %v1483 = vsel %vm343, %v1472, 0.0
        %v1484 = vsel %vm344, %v1473, 0.0
        %1485 = vst [vmem:[#allocation3 + $0x8] sm:$0xff] %v1474
        %1486 = vst [vmem:[#allocation3 + $0x10] sm:$0xff] %v1475
        %1487 = vst [vmem:[#allocation3 + $0x18] sm:$0xff] %v1476
        %1488 = vst [vmem:[#allocation3 + $0x20] sm:$0xff] %v1477
        %1489 = vst [vmem:[#allocation3 + $0x28] sm:$0xff] %v1478
        %1490 = vst [vmem:[#allocation3 + $0x30] sm:$0xff] %v1479
        %1491 = vst [vmem:[#allocation3 + $0x38] sm:$0xff] %v1480
        %1492 = vst [vmem:[#allocation3 + $0x40] sm:$0xff] %v1481
        %1493 = vst [vmem:[#allocation3 + $0x48] sm:$0xff] %v1482
        %1494 = vst [vmem:[#allocation3 + $0x50] sm:$0xff] %v1483
        %1495 = vst [vmem:[#allocation3 + $0x58] sm:$0xff] %v1484
        %v1496 = vld [vmem:[#allocation3 + $0x5] sm:$0xff]
        %v1497 = vld [vmem:[#allocation3 + $0xd] sm:$0xff]
        %v1498 = vld [vmem:[#allocation3 + $0x15] sm:$0xff]
        %v1499 = vld [vmem:[#allocation3 + $0x1d] sm:$0xff]
        %v1500 = vld [vmem:[#allocation3 + $0x25] sm:$0xff]
        %v1501 = vld [vmem:[#allocation3 + $0x2d] sm:$0xff]
        %v1502 = vld [vmem:[#allocation3 + $0x35] sm:$0xff]
        %v1503 = vld [vmem:[#allocation3 + $0x3d] sm:$0xff]
        %v1504 = vld [vmem:[#allocation3 + $0x45] sm:$0xff]
        %v1505 = vld [vmem:[#allocation3 + $0x4d] sm:$0xff]
        %v1506 = vld [vmem:[#allocation3 + $0x55] sm:$0xff]
        %v1507 = vpack.c.bf16 %v1497, %v1496
        %v1508 = vpack.c.bf16 %v1499, %v1498
        %v1509 = vpack.c.bf16 %v1501, %v1500
        %v1510 = vpack.c.bf16 %v1503, %v1502
        %v1511 = vpack.c.bf16 %v1505, %v1504
        %v1512 = vpack.c.bf16 %v1506, %v1506
        %s1513 = scalar_lea.vmem [#allocation5], 384
        %v1514 = vld [vmem:[%s1513] sm:$0xf]
        %v1515 = vld [vmem:[%s1513 + $0x4] sm:$0xf]
        %v1516 = vld [vmem:[%s1513 + $0x8] sm:$0xf]
        %v1517 = vld [vmem:[%s1513 + $0xc] sm:$0xf]
        %v1518 = vld [vmem:[%s1513 + $0x10] sm:$0xf]
        %v1519 = vld [vmem:[%s1513 + $0x14] sm:$0xf]
        %v1520 = vld [vmem:[%s1513 + $0x18] sm:$0xf]
        %v1521 = vld [vmem:[%s1513 + $0x1c] sm:$0xf]
        %v1522 = vld [vmem:[%s1513 + $0x20] sm:$0xf]
        %v1523 = vld [vmem:[%s1513 + $0x24] sm:$0xf]
        %v1524 = vld [vmem:[%s1513 + $0x28] sm:$0xf]
        %v1525 = vld [vmem:[%s1513 + $0x2c] sm:$0xf]
        %v1526 = vld [vmem:[%s1513 + $0x30] sm:$0xf]
        %v1527 = vld [vmem:[%s1513 + $0x34] sm:$0xf]
        %v1528 = vld [vmem:[%s1513 + $0x38] sm:$0xf]
        %v1529 = vld [vmem:[%s1513 + $0x3c] sm:$0xf]
        %v1530 = vld [vmem:[#allocation3 + $0x8] sm:$0xff]
        %v1531 = vld [vmem:[#allocation3 + $0x10] sm:$0xff]
        %v1532 = vld [vmem:[#allocation3 + $0x18] sm:$0xff]
        %v1533 = vld [vmem:[#allocation3 + $0x20] sm:$0xff]
        %v1534 = vld [vmem:[#allocation3 + $0x28] sm:$0xff]
        %v1535 = vld [vmem:[#allocation3 + $0x30] sm:$0xff]
        %v1536 = vld [vmem:[#allocation3 + $0x38] sm:$0xff]
        %v1537 = vld [vmem:[#allocation3 + $0x40] sm:$0xff]
        %v1538 = vld [vmem:[#allocation3 + $0x48] sm:$0xff]
        %v1539 = vld [vmem:[#allocation3 + $0x50] sm:$0xff]
        %v1540 = vld [vmem:[#allocation3 + $0x58] sm:$0xff]
        %v1541 = vpack.c.bf16 %v1531, %v1530
        %v1542 = vpack.c.bf16 %v1533, %v1532
        %v1543 = vpack.c.bf16 %v1535, %v1534
        %v1544 = vpack.c.bf16 %v1537, %v1536
        %v1545 = vpack.c.bf16 %v1539, %v1538
        %v1546 = vpack.c.bf16 %v1540, %v1540
        %s1547 = scalar_lea.vmem [#allocation5], 448
        %v1548 = vld [vmem:[%s1547] sm:$0xf]
        %v1549 = vld [vmem:[%s1547 + $0x4] sm:$0xf]
        %v1550 = vld [vmem:[%s1547 + $0x8] sm:$0xf]
        %v1551 = vld [vmem:[%s1547 + $0xc] sm:$0xf]
        %v1552 = vld [vmem:[%s1547 + $0x10] sm:$0xf]
        %v1553 = vld [vmem:[%s1547 + $0x14] sm:$0xf]
        %v1554 = vld [vmem:[%s1547 + $0x18] sm:$0xf]
        %v1555 = vld [vmem:[%s1547 + $0x1c] sm:$0xf]
        %v1556 = vld [vmem:[%s1547 + $0x20] sm:$0xf]
        %v1557 = vld [vmem:[%s1547 + $0x24] sm:$0xf]
        %v1558 = vld [vmem:[%s1547 + $0x28] sm:$0xf]
        %v1559 = vld [vmem:[%s1547 + $0x2c] sm:$0xf]
        %v1560 = vld [vmem:[%s1547 + $0x30] sm:$0xf]
        %v1561 = vld [vmem:[%s1547 + $0x34] sm:$0xf]
        %v1562 = vld [vmem:[%s1547 + $0x38] sm:$0xf]
        %v1563 = vld [vmem:[%s1547 + $0x3c] sm:$0xf]
        %v1580 = vunpack.c.l.b16 %v1548
        %v1581 = vunpack.c.l.b16 %v1549
        %v1582 = vunpack.c.l.b16 %v1550
        %v1583 = vunpack.c.l.b16 %v1551
        %v1584 = vunpack.c.l.b16 %v1552
        %v1585 = vunpack.c.l.b16 %v1553
        %v1586 = vunpack.c.l.b16 %v1554
        %v1587 = vunpack.c.l.b16 %v1555
        %v1588 = vunpack.c.l.b16 %v1556
        %v1589 = vunpack.c.l.b16 %v1557
        %v1590 = vunpack.c.l.b16 %v1558
        %v1591 = vunpack.c.l.b16 %v1559
        %v1592 = vunpack.c.l.b16 %v1560
        %v1593 = vunpack.c.l.b16 %v1561
        %v1594 = vunpack.c.l.b16 %v1562
        %v1595 = vunpack.c.l.b16 %v1563
        %v1596 = vpack.c.b16 %v1581, %v1580
        %v1597 = vpack.c.b16 %v1583, %v1582
        %v1598 = vpack.c.b16 %v1585, %v1584
        %v1599 = vpack.c.b16 %v1587, %v1586
        %v1600 = vpack.c.b16 %v1589, %v1588
        %v1601 = vpack.c.b16 %v1591, %v1590
        %v1602 = vpack.c.b16 %v1593, %v1592
        %v1603 = vpack.c.b16 %v1595, %v1594
        %1612 = vmatprep.subr.bf16.mxu0 0
        %1613 = vmatpush1.bf16.msra.mxu0 %v1596
        %1614 = vmatprep.subr.bf16.mxu0 0
        %1615 = vmatpush1.bf16.msra.mxu0 %v1597
        %1616 = vmatprep.subr.bf16.mxu0 0
        %1617 = vmatpush1.bf16.msra.mxu0 %v1598
        %1618 = vmatprep.subr.bf16.mxu0 0
        %1619 = vmatpush1.bf16.msra.mxu0 %v1599
        %1620 = vmatprep.subr.bf16.mxu0 0
        %1621 = vmatpush1.bf16.msra.mxu0 %v1600
        %1622 = vmatprep.subr.bf16.mxu0 0
        %1623 = vmatpush1.bf16.msra.mxu0 %v1601
        %1624 = vmatprep.subr.bf16.mxu0 0
        %1625 = vmatpush1.bf16.msra.mxu0 %v1602
        %1626 = vmatprep.subr.bf16.mxu0 0
        %1627 = vmatpush1.bf16.msra.mxu0 %v1603
        %1628 = vmatprep.subr.bf16.mxu0 0
        %1629 = vmatpush1.bf16.msra.mxu0 0
        %1630 = vmatprep.subr.bf16.mxu0 0
        %1631 = vmatpush1.bf16.msra.mxu0 0
        %1632 = vmatprep.subr.bf16.mxu0 0
        %1633 = vmatpush1.bf16.msra.mxu0 0
        %1634 = vmatprep.subr.bf16.mxu0 0
        %1635 = vmatpush1.bf16.msra.mxu0 0
        %1636 = vmatprep.subr.bf16.mxu0 0
        %1637 = vmatpush1.bf16.msra.mxu0 0
        %1638 = vmatprep.subr.bf16.mxu0 0
        %1639 = vmatpush1.bf16.msra.mxu0 0
        %1640 = vmatprep.subr.bf16.mxu0 0
        %1641 = vmatpush1.bf16.msra.mxu0 0
        %1642 = vmatprep.subr.bf16.mxu0 0
        %1643 = vmatpush1.bf16.msra.mxu0 0
        %1644 = vmatprep.mubr.bf16.mxu0 0
        %1645 = vmatmul.mubr.bf16.gmra.mrb[0].mxu0 %v1541
        %v1646 = vpop.f32.mrb[0].mxu0
        %v1647 = vadd.f32 0.0, %v1646
        %v1648 = vpop.f32.mrb[0].mxu0
        %v1649 = vpop.f32.mrb[0].mxu0
        %v1650 = vadd.f32 0.0, %v1649
        %v1651 = vpop.f32.mrb[0].mxu0
        %1652 = vmatprep.mubr.bf16.mxu0 0
        %1653 = vmatmul.mubr.bf16.gmra.mrb[0].mxu0 %v1542
        %v1654 = vpop.f32.mrb[0].mxu0
        %v1655 = vadd.f32 0.0, %v1654
        %v1656 = vpop.f32.mrb[0].mxu0
        %v1657 = vpop.f32.mrb[0].mxu0
        %v1658 = vadd.f32 0.0, %v1657
        %v1659 = vpop.f32.mrb[0].mxu0
        %1660 = vmatprep.mubr.bf16.mxu0 0
        %1661 = vmatmul.mubr.bf16.gmra.mrb[0].mxu0 %v1543
        %v1662 = vpop.f32.mrb[0].mxu0
        %v1663 = vadd.f32 0.0, %v1662
        %v1664 = vpop.f32.mrb[0].mxu0
        %v1665 = vpop.f32.mrb[0].mxu0
        %v1666 = vadd.f32 0.0, %v1665
        %v1667 = vpop.f32.mrb[0].mxu0
        %1668 = vmatprep.mubr.bf16.mxu0 0
        %1669 = vmatmul.mubr.bf16.gmra.mrb[0].mxu0 %v1544
        %v1670 = vpop.f32.mrb[0].mxu0
        %v1671 = vadd.f32 0.0, %v1670
        %v1672 = vpop.f32.mrb[0].mxu0
        %v1673 = vpop.f32.mrb[0].mxu0
        %v1674 = vadd.f32 0.0, %v1673
        %v1675 = vpop.f32.mrb[0].mxu0
        %1676 = vmatprep.mubr.bf16.mxu0 0
        %1677 = vmatmul.mubr.bf16.gmra.mrb[0].mxu0 %v1545
        %v1678 = vpop.f32.mrb[0].mxu0
        %v1679 = vadd.f32 0.0, %v1678
        %v1680 = vpop.f32.mrb[0].mxu0
        %v1681 = vpop.f32.mrb[0].mxu0
        %v1682 = vadd.f32 0.0, %v1681
        %v1683 = vpop.f32.mrb[0].mxu0
        %1684 = vmatprep.mubr.bf16.mxu0 0
        %1685 = vmatmul.mubr.bf16.gmra.mrb[0].mxu0 %v1546
        %v1686 = vpop.f32.mrb[0].mxu0
        %v1687 = vadd.f32 0.0, %v1686
        %v1688 = vpop.f32.mrb[0].mxu0
        %v1689 = vpop.f32.mrb[0].mxu0
        %v1690 = vpop.f32.mrb[0].mxu0
        %1691 = vdwg.mxu0
        %v1708 = vunpack.c.l.b16 %v1514
        %v1709 = vunpack.c.l.b16 %v1515
        %v1710 = vunpack.c.l.b16 %v1516
        %v1711 = vunpack.c.l.b16 %v1517
        %v1712 = vunpack.c.l.b16 %v1518
        %v1713 = vunpack.c.l.b16 %v1519
        %v1714 = vunpack.c.l.b16 %v1520
        %v1715 = vunpack.c.l.b16 %v1521
        %v1716 = vunpack.c.l.b16 %v1522
        %v1717 = vunpack.c.l.b16 %v1523
        %v1718 = vunpack.c.l.b16 %v1524
        %v1719 = vunpack.c.l.b16 %v1525
        %v1720 = vunpack.c.l.b16 %v1526
        %v1721 = vunpack.c.l.b16 %v1527
        %v1722 = vunpack.c.l.b16 %v1528
        %v1723 = vunpack.c.l.b16 %v1529
        %v1724 = vpack.c.b16 %v1709, %v1708
        %v1725 = vpack.c.b16 %v1711, %v1710
        %v1726 = vpack.c.b16 %v1713, %v1712
        %v1727 = vpack.c.b16 %v1715, %v1714
        %v1728 = vpack.c.b16 %v1717, %v1716
        %v1729 = vpack.c.b16 %v1719, %v1718
        %v1730 = vpack.c.b16 %v1721, %v1720
        %v1731 = vpack.c.b16 %v1723, %v1722
        %1740 = vmatprep.subr.bf16.mxu0 0
        %1741 = vmatpush1.bf16.msra.mxu0 %v1724
        %1742 = vmatprep.subr.bf16.mxu0 0
        %1743 = vmatpush1.bf16.msra.mxu0 %v1725
        %1744 = vmatprep.subr.bf16.mxu0 0
        %1745 = vmatpush1.bf16.msra.mxu0 %v1726
        %1746 = vmatprep.subr.bf16.mxu0 0
        %1747 = vmatpush1.bf16.msra.mxu0 %v1727
        %1748 = vmatprep.subr.bf16.mxu0 0
        %1749 = vmatpush1.bf16.msra.mxu0 %v1728
        %1750 = vmatprep.subr.bf16.mxu0 0
        %1751 = vmatpush1.bf16.msra.mxu0 %v1729
        %1752 = vmatprep.subr.bf16.mxu0 0
        %1753 = vmatpush1.bf16.msra.mxu0 %v1730
        %1754 = vmatprep.subr.bf16.mxu0 0
        %1755 = vmatpush1.bf16.msra.mxu0 %v1731
        %1756 = vmatprep.subr.bf16.mxu0 0
        %1757 = vmatpush1.bf16.msra.mxu0 0
        %1758 = vmatprep.subr.bf16.mxu0 0
        %1759 = vmatpush1.bf16.msra.mxu0 0
        %1760 = vmatprep.subr.bf16.mxu0 0
        %1761 = vmatpush1.bf16.msra.mxu0 0
        %1762 = vmatprep.subr.bf16.mxu0 0
        %1763 = vmatpush1.bf16.msra.mxu0 0
        %1764 = vmatprep.subr.bf16.mxu0 0
        %1765 = vmatpush1.bf16.msra.mxu0 0
        %1766 = vmatprep.subr.bf16.mxu0 0
        %1767 = vmatpush1.bf16.msra.mxu0 0
        %1768 = vmatprep.subr.bf16.mxu0 0
        %1769 = vmatpush1.bf16.msra.mxu0 0
        %1770 = vmatprep.subr.bf16.mxu0 0
        %1771 = vmatpush1.bf16.msra.mxu0 0
        %1772 = vmatprep.mubr.bf16.mxu0 0
        %1773 = vmatmul.mubr.bf16.gmra.mrb[0].mxu0 %v1507
        %v1774 = vpop.f32.mrb[0].mxu0
        %v1775 = vadd.f32 %v1647, %v1774
        %v1776 = vpop.f32.mrb[0].mxu0
        %v1777 = vpop.f32.mrb[0].mxu0
        %v1778 = vadd.f32 %v1650, %v1777
        %v1779 = vpop.f32.mrb[0].mxu0
        %1780 = vmatprep.mubr.bf16.mxu0 0
        %1781 = vmatmul.mubr.bf16.gmra.mrb[0].mxu0 %v1508
        %v1782 = vpop.f32.mrb[0].mxu0
        %v1783 = vadd.f32 %v1655, %v1782
        %v1784 = vpop.f32.mrb[0].mxu0
        %v1785 = vpop.f32.mrb[0].mxu0
        %v1786 = vadd.f32 %v1658, %v1785
        %v1787 = vpop.f32.mrb[0].mxu0
        %1788 = vmatprep.mubr.bf16.mxu0 0
        %1789 = vmatmul.mubr.bf16.gmra.mrb[0].mxu0 %v1509
        %v1790 = vpop.f32.mrb[0].mxu0
        %v1791 = vadd.f32 %v1663, %v1790
        %v1792 = vpop.f32.mrb[0].mxu0
        %v1793 = vpop.f32.mrb[0].mxu0
        %v1794 = vadd.f32 %v1666, %v1793
        %v1795 = vpop.f32.mrb[0].mxu0
        %1796 = vmatprep.mubr.bf16.mxu0 0
        %1797 = vmatmul.mubr.bf16.gmra.mrb[0].mxu0 %v1510
        %v1798 = vpop.f32.mrb[0].mxu0
        %v1799 = vadd.f32 %v1671, %v1798
        %v1800 = vpop.f32.mrb[0].mxu0
        %v1801 = vpop.f32.mrb[0].mxu0
        %v1802 = vadd.f32 %v1674, %v1801
        %v1803 = vpop.f32.mrb[0].mxu0
        %1804 = vmatprep.mubr.bf16.mxu0 0
        %1805 = vmatmul.mubr.bf16.gmra.mrb[0].mxu0 %v1511
        %v1806 = vpop.f32.mrb[0].mxu0
        %v1807 = vadd.f32 %v1679, %v1806
        %v1808 = vpop.f32.mrb[0].mxu0
        %v1809 = vpop.f32.mrb[0].mxu0
        %v1810 = vadd.f32 %v1682, %v1809
        %v1811 = vpop.f32.mrb[0].mxu0
        %1812 = vmatprep.mubr.bf16.mxu0 0
        %1813 = vmatmul.mubr.bf16.gmra.mrb[0].mxu0 %v1512
        %v1814 = vpop.f32.mrb[0].mxu0
        %v1815 = vadd.f32 %v1687, %v1814
        %v1816 = vpop.f32.mrb[0].mxu0
        %v1817 = vpop.f32.mrb[0].mxu0
        %v1818 = vpop.f32.mrb[0].mxu0
        %1819 = vdwg.mxu0
        %v1820 = vld [vmem:[#allocation3 + $0xb] sm:$0xff]
        %v1821 = vld [vmem:[#allocation3 + $0x13] sm:$0xff]
        %v1822 = vld [vmem:[#allocation3 + $0x1b] sm:$0xff]
        %v1823 = vld [vmem:[#allocation3 + $0x23] sm:$0xff]
        %v1824 = vld [vmem:[#allocation3 + $0x2b] sm:$0xff]
        %v1825 = vld [vmem:[#allocation3 + $0x33] sm:$0xff]
        %v1826 = vld [vmem:[#allocation3 + $0x3b] sm:$0xff]
        %v1827 = vld [vmem:[#allocation3 + $0x43] sm:$0xff]
        %v1828 = vld [vmem:[#allocation3 + $0x4b] sm:$0xff]
        %v1829 = vld [vmem:[#allocation3 + $0x53] sm:$0xff]
        %v1830 = vld [vmem:[#allocation3 + $0x5b] sm:$0xff]
        %v1831 = vpack.c.bf16 %v1821, %v1820
        %v1832 = vpack.c.bf16 %v1823, %v1822
        %v1833 = vpack.c.bf16 %v1825, %v1824
        %v1834 = vpack.c.bf16 %v1827, %v1826
        %v1835 = vpack.c.bf16 %v1829, %v1828
        %v1836 = vpack.c.bf16 %v1830, %v1830
        %s1837 = scalar_lea.vmem [#allocation5], 512
        %v1838 = vld [vmem:[%s1837] sm:$0xf]
        %v1839 = vld [vmem:[%s1837 + $0x4] sm:$0xf]
        %v1840 = vld [vmem:[%s1837 + $0x8] sm:$0xf]
        %v1841 = vld [vmem:[%s1837 + $0xc] sm:$0xf]
        %v1842 = vld [vmem:[%s1837 + $0x10] sm:$0xf]
        %v1843 = vld [vmem:[%s1837 + $0x14] sm:$0xf]
        %v1844 = vld [vmem:[%s1837 + $0x18] sm:$0xf]
        %v1845 = vld [vmem:[%s1837 + $0x1c] sm:$0xf]
        %v1846 = vld [vmem:[%s1837 + $0x20] sm:$0xf]
        %v1847 = vld [vmem:[%s1837 + $0x24] sm:$0xf]
        %v1848 = vld [vmem:[%s1837 + $0x28] sm:$0xf]
        %v1849 = vld [vmem:[%s1837 + $0x2c] sm:$0xf]
        %v1850 = vld [vmem:[%s1837 + $0x30] sm:$0xf]
        %v1851 = vld [vmem:[%s1837 + $0x34] sm:$0xf]
        %v1852 = vld [vmem:[%s1837 + $0x38] sm:$0xf]
        %v1853 = vld [vmem:[%s1837 + $0x3c] sm:$0xf]
        %v1870 = vunpack.c.l.b16 %v1838
        %v1871 = vunpack.c.l.b16 %v1839
        %v1872 = vunpack.c.l.b16 %v1840
        %v1873 = vunpack.c.l.b16 %v1841
        %v1874 = vunpack.c.l.b16 %v1842
        %v1875 = vunpack.c.l.b16 %v1843
        %v1876 = vunpack.c.l.b16 %v1844
        %v1877 = vunpack.c.l.b16 %v1845
        %v1878 = vunpack.c.l.b16 %v1846
        %v1879 = vunpack.c.l.b16 %v1847
        %v1880 = vunpack.c.l.b16 %v1848
        %v1881 = vunpack.c.l.b16 %v1849
        %v1882 = vunpack.c.l.b16 %v1850
        %v1883 = vunpack.c.l.b16 %v1851
        %v1884 = vunpack.c.l.b16 %v1852
        %v1885 = vunpack.c.l.b16 %v1853
        %v1886 = vpack.c.b16 %v1871, %v1870
        %v1887 = vpack.c.b16 %v1873, %v1872
        %v1888 = vpack.c.b16 %v1875, %v1874
        %v1889 = vpack.c.b16 %v1877, %v1876
        %v1890 = vpack.c.b16 %v1879, %v1878
        %v1891 = vpack.c.b16 %v1881, %v1880
        %v1892 = vpack.c.b16 %v1883, %v1882
        %v1893 = vpack.c.b16 %v1885, %v1884
        %1902 = vmatprep.subr.bf16.mxu0 0
        %1903 = vmatpush1.bf16.msra.mxu0 %v1886
        %1904 = vmatprep.subr.bf16.mxu0 0
        %1905 = vmatpush1.bf16.msra.mxu0 %v1887
        %1906 = vmatprep.subr.bf16.mxu0 0
        %1907 = vmatpush1.bf16.msra.mxu0 %v1888
        %1908 = vmatprep.subr.bf16.mxu0 0
        %1909 = vmatpush1.bf16.msra.mxu0 %v1889
        %1910 = vmatprep.subr.bf16.mxu0 0
        %1911 = vmatpush1.bf16.msra.mxu0 %v1890
        %1912 = vmatprep.subr.bf16.mxu0 0
        %1913 = vmatpush1.bf16.msra.mxu0 %v1891
        %1914 = vmatprep.subr.bf16.mxu0 0
        %1915 = vmatpush1.bf16.msra.mxu0 %v1892
        %1916 = vmatprep.subr.bf16.mxu0 0
        %1917 = vmatpush1.bf16.msra.mxu0 %v1893
        %1918 = vmatprep.subr.bf16.mxu0 0
        %1919 = vmatpush1.bf16.msra.mxu0 0
        %1920 = vmatprep.subr.bf16.mxu0 0
        %1921 = vmatpush1.bf16.msra.mxu0 0
        %1922 = vmatprep.subr.bf16.mxu0 0
        %1923 = vmatpush1.bf16.msra.mxu0 0
        %1924 = vmatprep.subr.bf16.mxu0 0
        %1925 = vmatpush1.bf16.msra.mxu0 0
        %1926 = vmatprep.subr.bf16.mxu0 0
        %1927 = vmatpush1.bf16.msra.mxu0 0
        %1928 = vmatprep.subr.bf16.mxu0 0
        %1929 = vmatpush1.bf16.msra.mxu0 0
        %1930 = vmatprep.subr.bf16.mxu0 0
        %1931 = vmatpush1.bf16.msra.mxu0 0
        %1932 = vmatprep.subr.bf16.mxu0 0
        %1933 = vmatpush1.bf16.msra.mxu0 0
        %1934 = vmatprep.mubr.bf16.mxu0 0
        %1935 = vmatmul.mubr.bf16.gmra.mrb[0].mxu0 %v1831
        %v1936 = vpop.f32.mrb[0].mxu0
        %v1937 = vadd.f32 0.0, %v1936
        %v1938 = vpop.f32.mrb[0].mxu0
        %v1939 = vpop.f32.mrb[0].mxu0
        %v1940 = vadd.f32 0.0, %v1939
        %v1941 = vpop.f32.mrb[0].mxu0
        %1942 = vmatprep.mubr.bf16.mxu0 0
        %1943 = vmatmul.mubr.bf16.gmra.mrb[0].mxu0 %v1832
        %v1944 = vpop.f32.mrb[0].mxu0
        %v1945 = vadd.f32 0.0, %v1944
        %v1946 = vpop.f32.mrb[0].mxu0
        %v1947 = vpop.f32.mrb[0].mxu0
        %v1948 = vadd.f32 0.0, %v1947
        %v1949 = vpop.f32.mrb[0].mxu0
        %1950 = vmatprep.mubr.bf16.mxu0 0
        %1951 = vmatmul.mubr.bf16.gmra.mrb[0].mxu0 %v1833
        %v1952 = vpop.f32.mrb[0].mxu0
        %v1953 = vadd.f32 0.0, %v1952
        %v1954 = vpop.f32.mrb[0].mxu0
        %v1955 = vpop.f32.mrb[0].mxu0
        %v1956 = vadd.f32 0.0, %v1955
        %v1957 = vpop.f32.mrb[0].mxu0
        %1958 = vmatprep.mubr.bf16.mxu0 0
        %1959 = vmatmul.mubr.bf16.gmra.mrb[0].mxu0 %v1834
        %v1960 = vpop.f32.mrb[0].mxu0
        %v1961 = vadd.f32 0.0, %v1960
        %v1962 = vpop.f32.mrb[0].mxu0
        %v1963 = vpop.f32.mrb[0].mxu0
        %v1964 = vadd.f32 0.0, %v1963
        %v1965 = vpop.f32.mrb[0].mxu0
        %1966 = vmatprep.mubr.bf16.mxu0 0
        %1967 = vmatmul.mubr.bf16.gmra.mrb[0].mxu0 %v1835
        %v1968 = vpop.f32.mrb[0].mxu0
        %v1969 = vadd.f32 0.0, %v1968
        %v1970 = vpop.f32.mrb[0].mxu0
        %v1971 = vpop.f32.mrb[0].mxu0
        %v1972 = vadd.f32 0.0, %v1971
        %v1973 = vpop.f32.mrb[0].mxu0
        %1974 = vmatprep.mubr.bf16.mxu0 0
        %1975 = vmatmul.mubr.bf16.gmra.mrb[0].mxu0 %v1836
        %v1976 = vpop.f32.mrb[0].mxu0
        %v1977 = vadd.f32 0.0, %v1976
        %v1978 = vpop.f32.mrb[0].mxu0
        %v1979 = vpop.f32.mrb[0].mxu0
        %v1980 = vpop.f32.mrb[0].mxu0
        %1981 = vdwg.mxu0
        %v1982 = vadd.f32 %v1775, %v1937
        %v1983 = vadd.f32 %v1778, %v1940
        %v1984 = vadd.f32 %v1783, %v1945
        %v1985 = vadd.f32 %v1786, %v1948
        %v1986 = vadd.f32 %v1791, %v1953
        %v1987 = vadd.f32 %v1794, %v1956
        %v1988 = vadd.f32 %v1799, %v1961
        %v1989 = vadd.f32 %v1802, %v1964
        %v1990 = vadd.f32 %v1807, %v1969
        %v1991 = vadd.f32 %v1810, %v1972
        %v1992 = vadd.f32 %v1815, %v1977
        %s1993 = scalar_lea.vmem [#allocation8], 2
        %v1994 = vld [vmem:[%s1993] sm:$0x1]
        %v1996 = vlaneseq
        %v1997 = vshrl.u32 %v1996, 7
        %v1998 = vsub.s32 0, %v1997
        %v1999 = vrot.slane %v1994, %v1998
        %v2001 = vadd.f32 %v1982, %v1999
        %v2002 = vadd.f32 %v1983, %v1999
        %v2003 = vadd.f32 %v1984, %v1999
        %v2004 = vadd.f32 %v1985, %v1999
        %v2005 = vadd.f32 %v1986, %v1999
        %v2006 = vadd.f32 %v1987, %v1999
        %v2007 = vadd.f32 %v1988, %v1999
        %v2008 = vadd.f32 %v1989, %v1999
        %v2009 = vadd.f32 %v1990, %v1999
        %v2010 = vadd.f32 %v1991, %v1999
        %v2011 = vadd.f32 %v1992, %v1999
        %v2012 = vmul.f32 %v2001, 0.1
        %v2013 = vmul.f32 %v2002, 0.1
        %v2014 = vmul.f32 %v2003, 0.1
        %v2015 = vmul.f32 %v2004, 0.1
        %v2016 = vmul.f32 %v2005, 0.1
        %v2017 = vmul.f32 %v2006, 0.1
        %v2018 = vmul.f32 %v2007, 0.1
        %v2019 = vmul.f32 %v2008, 0.1
        %v2020 = vmul.f32 %v2009, 0.1
        %v2021 = vmul.f32 %v2010, 0.1
        %v2022 = vmul.f32 %v2011, 0.1
        %v2023 = vmax.f32 %v2001, %v2012
        %v2024 = vmax.f32 %v2002, %v2013
        %v2025 = vmax.f32 %v2003, %v2014
        %v2026 = vmax.f32 %v2004, %v2015
        %v2027 = vmax.f32 %v2005, %v2016
        %v2028 = vmax.f32 %v2006, %v2017
        %v2029 = vmax.f32 %v2007, %v2018
        %v2030 = vmax.f32 %v2008, %v2019
        %v2031 = vmax.f32 %v2009, %v2020
        %v2032 = vmax.f32 %v2010, %v2021
        %v2033 = vmax.f32 %v2011, %v2022
        %v2034 = vsel %vm334, %v2023, 0.0
        %v2035 = vsel %vm335, %v2024, 0.0
        %v2036 = vsel %vm336, %v2025, 0.0
        %v2037 = vsel %vm337, %v2026, 0.0
        %v2038 = vsel %vm338, %v2027, 0.0
        %v2039 = vsel %vm339, %v2028, 0.0
        %v2040 = vsel %vm340, %v2029, 0.0
        %v2041 = vsel %vm341, %v2030, 0.0
        %v2042 = vsel %vm342, %v2031, 0.0
        %v2043 = vsel %vm343, %v2032, 0.0
        %v2044 = vsel %vm344, %v2033, 0.0
        %2045 = vst [vmem:[#allocation3 + $0x8] sm:$0xff] %v2034
        %2046 = vst [vmem:[#allocation3 + $0x10] sm:$0xff] %v2035
        %2047 = vst [vmem:[#allocation3 + $0x18] sm:$0xff] %v2036
        %2048 = vst [vmem:[#allocation3 + $0x20] sm:$0xff] %v2037
        %2049 = vst [vmem:[#allocation3 + $0x28] sm:$0xff] %v2038
        %2050 = vst [vmem:[#allocation3 + $0x30] sm:$0xff] %v2039
        %2051 = vst [vmem:[#allocation3 + $0x38] sm:$0xff] %v2040
        %2052 = vst [vmem:[#allocation3 + $0x40] sm:$0xff] %v2041
        %2053 = vst [vmem:[#allocation3 + $0x48] sm:$0xff] %v2042
        %2054 = vst [vmem:[#allocation3 + $0x50] sm:$0xff] %v2043
        %2055 = vst [vmem:[#allocation3 + $0x58] sm:$0xff] %v2044
        %v2056 = vld [vmem:[#allocation3 + $0x7] sm:$0xff]
        %v2057 = vld [vmem:[#allocation3 + $0xf] sm:$0xff]
        %v2058 = vld [vmem:[#allocation3 + $0x17] sm:$0xff]
        %v2059 = vld [vmem:[#allocation3 + $0x1f] sm:$0xff]
        %v2060 = vld [vmem:[#allocation3 + $0x27] sm:$0xff]
        %v2061 = vld [vmem:[#allocation3 + $0x2f] sm:$0xff]
        %v2062 = vld [vmem:[#allocation3 + $0x37] sm:$0xff]
        %v2063 = vld [vmem:[#allocation3 + $0x3f] sm:$0xff]
        %v2064 = vld [vmem:[#allocation3 + $0x47] sm:$0xff]
        %v2065 = vld [vmem:[#allocation3 + $0x4f] sm:$0xff]
        %v2066 = vld [vmem:[#allocation3 + $0x57] sm:$0xff]
        %v2067 = vpack.c.bf16 %v2057, %v2056
        %v2068 = vpack.c.bf16 %v2059, %v2058
        %v2069 = vpack.c.bf16 %v2061, %v2060
        %v2070 = vpack.c.bf16 %v2063, %v2062
        %v2071 = vpack.c.bf16 %v2065, %v2064
        %v2072 = vpack.c.bf16 %v2066, %v2066
        %s2073 = scalar_lea.vmem [#allocation5], 576
        %v2074 = vld [vmem:[%s2073] sm:$0xf]
        %v2075 = vld [vmem:[%s2073 + $0x4] sm:$0xf]
        %v2076 = vld [vmem:[%s2073 + $0x8] sm:$0xf]
        %v2077 = vld [vmem:[%s2073 + $0xc] sm:$0xf]
        %v2078 = vld [vmem:[%s2073 + $0x10] sm:$0xf]
        %v2079 = vld [vmem:[%s2073 + $0x14] sm:$0xf]
        %v2080 = vld [vmem:[%s2073 + $0x18] sm:$0xf]
        %v2081 = vld [vmem:[%s2073 + $0x1c] sm:$0xf]
        %v2082 = vld [vmem:[%s2073 + $0x20] sm:$0xf]
        %v2083 = vld [vmem:[%s2073 + $0x24] sm:$0xf]
        %v2084 = vld [vmem:[%s2073 + $0x28] sm:$0xf]
        %v2085 = vld [vmem:[%s2073 + $0x2c] sm:$0xf]
        %v2086 = vld [vmem:[%s2073 + $0x30] sm:$0xf]
        %v2087 = vld [vmem:[%s2073 + $0x34] sm:$0xf]
        %v2088 = vld [vmem:[%s2073 + $0x38] sm:$0xf]
        %v2089 = vld [vmem:[%s2073 + $0x3c] sm:$0xf]
        %v2090 = vld [vmem:[#allocation3 + $0x8] sm:$0xff]
        %v2091 = vld [vmem:[#allocation3 + $0x10] sm:$0xff]
        %v2092 = vld [vmem:[#allocation3 + $0x18] sm:$0xff]
        %v2093 = vld [vmem:[#allocation3 + $0x20] sm:$0xff]
        %v2094 = vld [vmem:[#allocation3 + $0x28] sm:$0xff]
        %v2095 = vld [vmem:[#allocation3 + $0x30] sm:$0xff]
        %v2096 = vld [vmem:[#allocation3 + $0x38] sm:$0xff]
        %v2097 = vld [vmem:[#allocation3 + $0x40] sm:$0xff]
        %v2098 = vld [vmem:[#allocation3 + $0x48] sm:$0xff]
        %v2099 = vld [vmem:[#allocation3 + $0x50] sm:$0xff]
        %v2100 = vld [vmem:[#allocation3 + $0x58] sm:$0xff]
        %v2101 = vpack.c.bf16 %v2091, %v2090
        %v2102 = vpack.c.bf16 %v2093, %v2092
        %v2103 = vpack.c.bf16 %v2095, %v2094
        %v2104 = vpack.c.bf16 %v2097, %v2096
        %v2105 = vpack.c.bf16 %v2099, %v2098
        %v2106 = vpack.c.bf16 %v2100, %v2100
        %s2107 = scalar_lea.vmem [#allocation5], 640
        %v2108 = vld [vmem:[%s2107] sm:$0xf]
        %v2109 = vld [vmem:[%s2107 + $0x4] sm:$0xf]
        %v2110 = vld [vmem:[%s2107 + $0x8] sm:$0xf]
        %v2111 = vld [vmem:[%s2107 + $0xc] sm:$0xf]
        %v2112 = vld [vmem:[%s2107 + $0x10] sm:$0xf]
        %v2113 = vld [vmem:[%s2107 + $0x14] sm:$0xf]
        %v2114 = vld [vmem:[%s2107 + $0x18] sm:$0xf]
        %v2115 = vld [vmem:[%s2107 + $0x1c] sm:$0xf]
        %v2116 = vld [vmem:[%s2107 + $0x20] sm:$0xf]
        %v2117 = vld [vmem:[%s2107 + $0x24] sm:$0xf]
        %v2118 = vld [vmem:[%s2107 + $0x28] sm:$0xf]
        %v2119 = vld [vmem:[%s2107 + $0x2c] sm:$0xf]
        %v2120 = vld [vmem:[%s2107 + $0x30] sm:$0xf]
        %v2121 = vld [vmem:[%s2107 + $0x34] sm:$0xf]
        %v2122 = vld [vmem:[%s2107 + $0x38] sm:$0xf]
        %v2123 = vld [vmem:[%s2107 + $0x3c] sm:$0xf]
        %v2140 = vunpack.c.l.b16 %v2108
        %v2141 = vunpack.c.l.b16 %v2109
        %v2142 = vunpack.c.l.b16 %v2110
        %v2143 = vunpack.c.l.b16 %v2111
        %v2144 = vunpack.c.l.b16 %v2112
        %v2145 = vunpack.c.l.b16 %v2113
        %v2146 = vunpack.c.l.b16 %v2114
        %v2147 = vunpack.c.l.b16 %v2115
        %v2148 = vunpack.c.l.b16 %v2116
        %v2149 = vunpack.c.l.b16 %v2117
        %v2150 = vunpack.c.l.b16 %v2118
        %v2151 = vunpack.c.l.b16 %v2119
        %v2152 = vunpack.c.l.b16 %v2120
        %v2153 = vunpack.c.l.b16 %v2121
        %v2154 = vunpack.c.l.b16 %v2122
        %v2155 = vunpack.c.l.b16 %v2123
        %v2156 = vpack.c.b16 %v2141, %v2140
        %v2157 = vpack.c.b16 %v2143, %v2142
        %v2158 = vpack.c.b16 %v2145, %v2144
        %v2159 = vpack.c.b16 %v2147, %v2146
        %v2160 = vpack.c.b16 %v2149, %v2148
        %v2161 = vpack.c.b16 %v2151, %v2150
        %v2162 = vpack.c.b16 %v2153, %v2152
        %v2163 = vpack.c.b16 %v2155, %v2154
        %2172 = vmatprep.subr.bf16.mxu0 0
        %2173 = vmatpush1.bf16.msra.mxu0 %v2156
        %2174 = vmatprep.subr.bf16.mxu0 0
        %2175 = vmatpush1.bf16.msra.mxu0 %v2157
        %2176 = vmatprep.subr.bf16.mxu0 0
        %2177 = vmatpush1.bf16.msra.mxu0 %v2158
        %2178 = vmatprep.subr.bf16.mxu0 0
        %2179 = vmatpush1.bf16.msra.mxu0 %v2159
        %2180 = vmatprep.subr.bf16.mxu0 0
        %2181 = vmatpush1.bf16.msra.mxu0 %v2160
        %2182 = vmatprep.subr.bf16.mxu0 0
        %2183 = vmatpush1.bf16.msra.mxu0 %v2161
        %2184 = vmatprep.subr.bf16.mxu0 0
        %2185 = vmatpush1.bf16.msra.mxu0 %v2162
        %2186 = vmatprep.subr.bf16.mxu0 0
        %2187 = vmatpush1.bf16.msra.mxu0 %v2163
        %2188 = vmatprep.subr.bf16.mxu0 0
        %2189 = vmatpush1.bf16.msra.mxu0 0
        %2190 = vmatprep.subr.bf16.mxu0 0
        %2191 = vmatpush1.bf16.msra.mxu0 0
        %2192 = vmatprep.subr.bf16.mxu0 0
        %2193 = vmatpush1.bf16.msra.mxu0 0
        %2194 = vmatprep.subr.bf16.mxu0 0
        %2195 = vmatpush1.bf16.msra.mxu0 0
        %2196 = vmatprep.subr.bf16.mxu0 0
        %2197 = vmatpush1.bf16.msra.mxu0 0
        %2198 = vmatprep.subr.bf16.mxu0 0
        %2199 = vmatpush1.bf16.msra.mxu0 0
        %2200 = vmatprep.subr.bf16.mxu0 0
        %2201 = vmatpush1.bf16.msra.mxu0 0
        %2202 = vmatprep.subr.bf16.mxu0 0
        %2203 = vmatpush1.bf16.msra.mxu0 0
        %2204 = vmatprep.mubr.bf16.mxu0 0
        %2205 = vmatmul.mubr.bf16.gmra.mrb[0].mxu0 %v2101
        %v2206 = vpop.f32.mrb[0].mxu0
        %v2207 = vadd.f32 0.0, %v2206
        %v2208 = vpop.f32.mrb[0].mxu0
        %v2209 = vpop.f32.mrb[0].mxu0
        %v2210 = vadd.f32 0.0, %v2209
        %v2211 = vpop.f32.mrb[0].mxu0
        %2212 = vmatprep.mubr.bf16.mxu0 0
        %2213 = vmatmul.mubr.bf16.gmra.mrb[0].mxu0 %v2102
        %v2214 = vpop.f32.mrb[0].mxu0
        %v2215 = vadd.f32 0.0, %v2214
        %v2216 = vpop.f32.mrb[0].mxu0
        %v2217 = vpop.f32.mrb[0].mxu0
        %v2218 = vadd.f32 0.0, %v2217
        %v2219 = vpop.f32.mrb[0].mxu0
        %2220 = vmatprep.mubr.bf16.mxu0 0
        %2221 = vmatmul.mubr.bf16.gmra.mrb[0].mxu0 %v2103
        %v2222 = vpop.f32.mrb[0].mxu0
        %v2223 = vadd.f32 0.0, %v2222
        %v2224 = vpop.f32.mrb[0].mxu0
        %v2225 = vpop.f32.mrb[0].mxu0
        %v2226 = vadd.f32 0.0, %v2225
        %v2227 = vpop.f32.mrb[0].mxu0
        %2228 = vmatprep.mubr.bf16.mxu0 0
        %2229 = vmatmul.mubr.bf16.gmra.mrb[0].mxu0 %v2104
        %v2230 = vpop.f32.mrb[0].mxu0
        %v2231 = vadd.f32 0.0, %v2230
        %v2232 = vpop.f32.mrb[0].mxu0
        %v2233 = vpop.f32.mrb[0].mxu0
        %v2234 = vadd.f32 0.0, %v2233
        %v2235 = vpop.f32.mrb[0].mxu0
        %2236 = vmatprep.mubr.bf16.mxu0 0
        %2237 = vmatmul.mubr.bf16.gmra.mrb[0].mxu0 %v2105
        %v2238 = vpop.f32.mrb[0].mxu0
        %v2239 = vadd.f32 0.0, %v2238
        %v2240 = vpop.f32.mrb[0].mxu0
        %v2241 = vpop.f32.mrb[0].mxu0
        %v2242 = vadd.f32 0.0, %v2241
        %v2243 = vpop.f32.mrb[0].mxu0
        %2244 = vmatprep.mubr.bf16.mxu0 0
        %2245 = vmatmul.mubr.bf16.gmra.mrb[0].mxu0 %v2106
        %v2246 = vpop.f32.mrb[0].mxu0
        %v2247 = vadd.f32 0.0, %v2246
        %v2248 = vpop.f32.mrb[0].mxu0
        %v2249 = vpop.f32.mrb[0].mxu0
        %v2250 = vpop.f32.mrb[0].mxu0
        %2251 = vdwg.mxu0
        %v2268 = vunpack.c.l.b16 %v2074
        %v2269 = vunpack.c.l.b16 %v2075
        %v2270 = vunpack.c.l.b16 %v2076
        %v2271 = vunpack.c.l.b16 %v2077
        %v2272 = vunpack.c.l.b16 %v2078
        %v2273 = vunpack.c.l.b16 %v2079
        %v2274 = vunpack.c.l.b16 %v2080
        %v2275 = vunpack.c.l.b16 %v2081
        %v2276 = vunpack.c.l.b16 %v2082
        %v2277 = vunpack.c.l.b16 %v2083
        %v2278 = vunpack.c.l.b16 %v2084
        %v2279 = vunpack.c.l.b16 %v2085
        %v2280 = vunpack.c.l.b16 %v2086
        %v2281 = vunpack.c.l.b16 %v2087
        %v2282 = vunpack.c.l.b16 %v2088
        %v2283 = vunpack.c.l.b16 %v2089
        %v2284 = vpack.c.b16 %v2269, %v2268
        %v2285 = vpack.c.b16 %v2271, %v2270
        %v2286 = vpack.c.b16 %v2273, %v2272
        %v2287 = vpack.c.b16 %v2275, %v2274
        %v2288 = vpack.c.b16 %v2277, %v2276
        %v2289 = vpack.c.b16 %v2279, %v2278
        %v2290 = vpack.c.b16 %v2281, %v2280
        %v2291 = vpack.c.b16 %v2283, %v2282
        %2300 = vmatprep.subr.bf16.mxu0 0
        %2301 = vmatpush1.bf16.msra.mxu0 %v2284
        %2302 = vmatprep.subr.bf16.mxu0 0
        %2303 = vmatpush1.bf16.msra.mxu0 %v2285
        %2304 = vmatprep.subr.bf16.mxu0 0
        %2305 = vmatpush1.bf16.msra.mxu0 %v2286
        %2306 = vmatprep.subr.bf16.mxu0 0
        %2307 = vmatpush1.bf16.msra.mxu0 %v2287
        %2308 = vmatprep.subr.bf16.mxu0 0
        %2309 = vmatpush1.bf16.msra.mxu0 %v2288
        %2310 = vmatprep.subr.bf16.mxu0 0
        %2311 = vmatpush1.bf16.msra.mxu0 %v2289
        %2312 = vmatprep.subr.bf16.mxu0 0
        %2313 = vmatpush1.bf16.msra.mxu0 %v2290
        %2314 = vmatprep.subr.bf16.mxu0 0
        %2315 = vmatpush1.bf16.msra.mxu0 %v2291
        %2316 = vmatprep.subr.bf16.mxu0 0
        %2317 = vmatpush1.bf16.msra.mxu0 0
        %2318 = vmatprep.subr.bf16.mxu0 0
        %2319 = vmatpush1.bf16.msra.mxu0 0
        %2320 = vmatprep.subr.bf16.mxu0 0
        %2321 = vmatpush1.bf16.msra.mxu0 0
        %2322 = vmatprep.subr.bf16.mxu0 0
        %2323 = vmatpush1.bf16.msra.mxu0 0
        %2324 = vmatprep.subr.bf16.mxu0 0
        %2325 = vmatpush1.bf16.msra.mxu0 0
        %2326 = vmatprep.subr.bf16.mxu0 0
        %2327 = vmatpush1.bf16.msra.mxu0 0
        %2328 = vmatprep.subr.bf16.mxu0 0
        %2329 = vmatpush1.bf16.msra.mxu0 0
        %2330 = vmatprep.subr.bf16.mxu0 0
        %2331 = vmatpush1.bf16.msra.mxu0 0
        %2332 = vmatprep.mubr.bf16.mxu0 0
        %2333 = vmatmul.mubr.bf16.gmra.mrb[0].mxu0 %v2067
        %v2334 = vpop.f32.mrb[0].mxu0
        %v2335 = vadd.f32 %v2207, %v2334
        %v2336 = vpop.f32.mrb[0].mxu0
        %v2337 = vpop.f32.mrb[0].mxu0
        %v2338 = vadd.f32 %v2210, %v2337
        %v2339 = vpop.f32.mrb[0].mxu0
        %2340 = vmatprep.mubr.bf16.mxu0 0
        %2341 = vmatmul.mubr.bf16.gmra.mrb[0].mxu0 %v2068
        %v2342 = vpop.f32.mrb[0].mxu0
        %v2343 = vadd.f32 %v2215, %v2342
        %v2344 = vpop.f32.mrb[0].mxu0
        %v2345 = vpop.f32.mrb[0].mxu0
        %v2346 = vadd.f32 %v2218, %v2345
        %v2347 = vpop.f32.mrb[0].mxu0
        %2348 = vmatprep.mubr.bf16.mxu0 0
        %2349 = vmatmul.mubr.bf16.gmra.mrb[0].mxu0 %v2069
        %v2350 = vpop.f32.mrb[0].mxu0
        %v2351 = vadd.f32 %v2223, %v2350
        %v2352 = vpop.f32.mrb[0].mxu0
        %v2353 = vpop.f32.mrb[0].mxu0
        %v2354 = vadd.f32 %v2226, %v2353
        %v2355 = vpop.f32.mrb[0].mxu0
        %2356 = vmatprep.mubr.bf16.mxu0 0
        %2357 = vmatmul.mubr.bf16.gmra.mrb[0].mxu0 %v2070
        %v2358 = vpop.f32.mrb[0].mxu0
        %v2359 = vadd.f32 %v2231, %v2358
        %v2360 = vpop.f32.mrb[0].mxu0
        %v2361 = vpop.f32.mrb[0].mxu0
        %v2362 = vadd.f32 %v2234, %v2361
        %v2363 = vpop.f32.mrb[0].mxu0
        %2364 = vmatprep.mubr.bf16.mxu0 0
        %2365 = vmatmul.mubr.bf16.gmra.mrb[0].mxu0 %v2071
        %v2366 = vpop.f32.mrb[0].mxu0
        %v2367 = vadd.f32 %v2239, %v2366
        %v2368 = vpop.f32.mrb[0].mxu0
        %v2369 = vpop.f32.mrb[0].mxu0
        %v2370 = vadd.f32 %v2242, %v2369
        %v2371 = vpop.f32.mrb[0].mxu0
        %2372 = vmatprep.mubr.bf16.mxu0 0
        %2373 = vmatmul.mubr.bf16.gmra.mrb[0].mxu0 %v2072
        %v2374 = vpop.f32.mrb[0].mxu0
        %v2375 = vadd.f32 %v2247, %v2374
        %v2376 = vpop.f32.mrb[0].mxu0
        %v2377 = vpop.f32.mrb[0].mxu0
        %v2378 = vpop.f32.mrb[0].mxu0
        %2379 = vdwg.mxu0
        %v2380 = vld [vmem:[#allocation3 + $0x9] sm:$0xff]
        %v2381 = vld [vmem:[#allocation3 + $0x11] sm:$0xff]
        %v2382 = vld [vmem:[#allocation3 + $0x19] sm:$0xff]
        %v2383 = vld [vmem:[#allocation3 + $0x21] sm:$0xff]
        %v2384 = vld [vmem:[#allocation3 + $0x29] sm:$0xff]
        %v2385 = vld [vmem:[#allocation3 + $0x31] sm:$0xff]
        %v2386 = vld [vmem:[#allocation3 + $0x39] sm:$0xff]
        %v2387 = vld [vmem:[#allocation3 + $0x41] sm:$0xff]
        %v2388 = vld [vmem:[#allocation3 + $0x49] sm:$0xff]
        %v2389 = vld [vmem:[#allocation3 + $0x51] sm:$0xff]
        %v2390 = vld [vmem:[#allocation3 + $0x59] sm:$0xff]
        %v2391 = vpack.c.bf16 %v2381, %v2380
        %v2392 = vpack.c.bf16 %v2383, %v2382
        %v2393 = vpack.c.bf16 %v2385, %v2384
        %v2394 = vpack.c.bf16 %v2387, %v2386
        %v2395 = vpack.c.bf16 %v2389, %v2388
        %v2396 = vpack.c.bf16 %v2390, %v2390
        %s2397 = scalar_lea.vmem [#allocation5], 704
        %v2398 = vld [vmem:[%s2397] sm:$0xf]
        %v2399 = vld [vmem:[%s2397 + $0x4] sm:$0xf]
        %v2400 = vld [vmem:[%s2397 + $0x8] sm:$0xf]
        %v2401 = vld [vmem:[%s2397 + $0xc] sm:$0xf]
        %v2402 = vld [vmem:[%s2397 + $0x10] sm:$0xf]
        %v2403 = vld [vmem:[%s2397 + $0x14] sm:$0xf]
        %v2404 = vld [vmem:[%s2397 + $0x18] sm:$0xf]
        %v2405 = vld [vmem:[%s2397 + $0x1c] sm:$0xf]
        %v2406 = vld [vmem:[%s2397 + $0x20] sm:$0xf]
        %v2407 = vld [vmem:[%s2397 + $0x24] sm:$0xf]
        %v2408 = vld [vmem:[%s2397 + $0x28] sm:$0xf]
        %v2409 = vld [vmem:[%s2397 + $0x2c] sm:$0xf]
        %v2410 = vld [vmem:[%s2397 + $0x30] sm:$0xf]
        %v2411 = vld [vmem:[%s2397 + $0x34] sm:$0xf]
        %v2412 = vld [vmem:[%s2397 + $0x38] sm:$0xf]
        %v2413 = vld [vmem:[%s2397 + $0x3c] sm:$0xf]
        %v2430 = vunpack.c.l.b16 %v2398
        %v2431 = vunpack.c.l.b16 %v2399
        %v2432 = vunpack.c.l.b16 %v2400
        %v2433 = vunpack.c.l.b16 %v2401
        %v2434 = vunpack.c.l.b16 %v2402
        %v2435 = vunpack.c.l.b16 %v2403
        %v2436 = vunpack.c.l.b16 %v2404
        %v2437 = vunpack.c.l.b16 %v2405
        %v2438 = vunpack.c.l.b16 %v2406
        %v2439 = vunpack.c.l.b16 %v2407
        %v2440 = vunpack.c.l.b16 %v2408
        %v2441 = vunpack.c.l.b16 %v2409
        %v2442 = vunpack.c.l.b16 %v2410
        %v2443 = vunpack.c.l.b16 %v2411
        %v2444 = vunpack.c.l.b16 %v2412
        %v2445 = vunpack.c.l.b16 %v2413
        %v2446 = vpack.c.b16 %v2431, %v2430
        %v2447 = vpack.c.b16 %v2433, %v2432
        %v2448 = vpack.c.b16 %v2435, %v2434
        %v2449 = vpack.c.b16 %v2437, %v2436
        %v2450 = vpack.c.b16 %v2439, %v2438
        %v2451 = vpack.c.b16 %v2441, %v2440
        %v2452 = vpack.c.b16 %v2443, %v2442
        %v2453 = vpack.c.b16 %v2445, %v2444
        %2462 = vmatprep.subr.bf16.mxu0 0
        %2463 = vmatpush1.bf16.msra.mxu0 %v2446
        %2464 = vmatprep.subr.bf16.mxu0 0
        %2465 = vmatpush1.bf16.msra.mxu0 %v2447
        %2466 = vmatprep.subr.bf16.mxu0 0
        %2467 = vmatpush1.bf16.msra.mxu0 %v2448
        %2468 = vmatprep.subr.bf16.mxu0 0
        %2469 = vmatpush1.bf16.msra.mxu0 %v2449
        %2470 = vmatprep.subr.bf16.mxu0 0
        %2471 = vmatpush1.bf16.msra.mxu0 %v2450
        %2472 = vmatprep.subr.bf16.mxu0 0
        %2473 = vmatpush1.bf16.msra.mxu0 %v2451
        %2474 = vmatprep.subr.bf16.mxu0 0
        %2475 = vmatpush1.bf16.msra.mxu0 %v2452
        %2476 = vmatprep.subr.bf16.mxu0 0
        %2477 = vmatpush1.bf16.msra.mxu0 %v2453
        %2478 = vmatprep.subr.bf16.mxu0 0
        %2479 = vmatpush1.bf16.msra.mxu0 0
        %2480 = vmatprep.subr.bf16.mxu0 0
        %2481 = vmatpush1.bf16.msra.mxu0 0
        %2482 = vmatprep.subr.bf16.mxu0 0
        %2483 = vmatpush1.bf16.msra.mxu0 0
        %2484 = vmatprep.subr.bf16.mxu0 0
        %2485 = vmatpush1.bf16.msra.mxu0 0
        %2486 = vmatprep.subr.bf16.mxu0 0
        %2487 = vmatpush1.bf16.msra.mxu0 0
        %2488 = vmatprep.subr.bf16.mxu0 0
        %2489 = vmatpush1.bf16.msra.mxu0 0
        %2490 = vmatprep.subr.bf16.mxu0 0
        %2491 = vmatpush1.bf16.msra.mxu0 0
        %2492 = vmatprep.subr.bf16.mxu0 0
        %2493 = vmatpush1.bf16.msra.mxu0 0
        %2494 = vmatprep.mubr.bf16.mxu0 0
        %2495 = vmatmul.mubr.bf16.gmra.mrb[0].mxu0 %v2391
        %v2496 = vpop.f32.mrb[0].mxu0
        %v2497 = vadd.f32 0.0, %v2496
        %v2498 = vpop.f32.mrb[0].mxu0
        %v2499 = vpop.f32.mrb[0].mxu0
        %v2500 = vadd.f32 0.0, %v2499
        %v2501 = vpop.f32.mrb[0].mxu0
        %2502 = vmatprep.mubr.bf16.mxu0 0
        %2503 = vmatmul.mubr.bf16.gmra.mrb[0].mxu0 %v2392
        %v2504 = vpop.f32.mrb[0].mxu0
        %v2505 = vadd.f32 0.0, %v2504
        %v2506 = vpop.f32.mrb[0].mxu0
        %v2507 = vpop.f32.mrb[0].mxu0
        %v2508 = vadd.f32 0.0, %v2507
        %v2509 = vpop.f32.mrb[0].mxu0
        %2510 = vmatprep.mubr.bf16.mxu0 0
        %2511 = vmatmul.mubr.bf16.gmra.mrb[0].mxu0 %v2393
        %v2512 = vpop.f32.mrb[0].mxu0
        %v2513 = vadd.f32 0.0, %v2512
        %v2514 = vpop.f32.mrb[0].mxu0
        %v2515 = vpop.f32.mrb[0].mxu0
        %v2516 = vadd.f32 0.0, %v2515
        %v2517 = vpop.f32.mrb[0].mxu0
        %2518 = vmatprep.mubr.bf16.mxu0 0
        %2519 = vmatmul.mubr.bf16.gmra.mrb[0].mxu0 %v2394
        %v2520 = vpop.f32.mrb[0].mxu0
        %v2521 = vadd.f32 0.0, %v2520
        %v2522 = vpop.f32.mrb[0].mxu0
        %v2523 = vpop.f32.mrb[0].mxu0
        %v2524 = vadd.f32 0.0, %v2523
        %v2525 = vpop.f32.mrb[0].mxu0
        %2526 = vmatprep.mubr.bf16.mxu0 0
        %2527 = vmatmul.mubr.bf16.gmra.mrb[0].mxu0 %v2395
        %v2528 = vpop.f32.mrb[0].mxu0
        %v2529 = vadd.f32 0.0, %v2528
        %v2530 = vpop.f32.mrb[0].mxu0
        %v2531 = vpop.f32.mrb[0].mxu0
        %v2532 = vadd.f32 0.0, %v2531
        %v2533 = vpop.f32.mrb[0].mxu0
        %2534 = vmatprep.mubr.bf16.mxu0 0
        %2535 = vmatmul.mubr.bf16.gmra.mrb[0].mxu0 %v2396
        %v2536 = vpop.f32.mrb[0].mxu0
        %v2537 = vadd.f32 0.0, %v2536
        %v2538 = vpop.f32.mrb[0].mxu0
        %v2539 = vpop.f32.mrb[0].mxu0
        %v2540 = vpop.f32.mrb[0].mxu0
        %2541 = vdwg.mxu0
        %v2542 = vadd.f32 %v2335, %v2497
        %v2543 = vadd.f32 %v2338, %v2500
        %v2544 = vadd.f32 %v2343, %v2505
        %v2545 = vadd.f32 %v2346, %v2508
        %v2546 = vadd.f32 %v2351, %v2513
        %v2547 = vadd.f32 %v2354, %v2516
        %v2548 = vadd.f32 %v2359, %v2521
        %v2549 = vadd.f32 %v2362, %v2524
        %v2550 = vadd.f32 %v2367, %v2529
        %v2551 = vadd.f32 %v2370, %v2532
        %v2552 = vadd.f32 %v2375, %v2537
        %s2553 = scalar_lea.vmem [#allocation8], 3
        %v2554 = vld [vmem:[%s2553] sm:$0x1]
        %v2556 = vlaneseq
        %v2557 = vshrl.u32 %v2556, 7
        %v2558 = vsub.s32 0, %v2557
        %v2559 = vrot.slane %v2554, %v2558
        %v2561 = vadd.f32 %v2542, %v2559
        %v2562 = vadd.f32 %v2543, %v2559
        %v2563 = vadd.f32 %v2544, %v2559
        %v2564 = vadd.f32 %v2545, %v2559
        %v2565 = vadd.f32 %v2546, %v2559
        %v2566 = vadd.f32 %v2547, %v2559
        %v2567 = vadd.f32 %v2548, %v2559
        %v2568 = vadd.f32 %v2549, %v2559
        %v2569 = vadd.f32 %v2550, %v2559
        %v2570 = vadd.f32 %v2551, %v2559
        %v2571 = vadd.f32 %v2552, %v2559
        %v2572 = vadd.f32 %v1441, %v2561
        %v2573 = vadd.f32 %v1442, %v2562
        %v2574 = vadd.f32 %v1443, %v2563
        %v2575 = vadd.f32 %v1444, %v2564
        %v2576 = vadd.f32 %v1445, %v2565
        %v2577 = vadd.f32 %v1446, %v2566
        %v2578 = vadd.f32 %v1447, %v2567
        %v2579 = vadd.f32 %v1448, %v2568
        %v2580 = vadd.f32 %v1449, %v2569
        %v2581 = vadd.f32 %v1450, %v2570
        %v2582 = vadd.f32 %v1451, %v2571
        %v2583 = vmul.f32 %v2572, 0.1
        %v2584 = vmul.f32 %v2573, 0.1
        %v2585 = vmul.f32 %v2574, 0.1
        %v2586 = vmul.f32 %v2575, 0.1
        %v2587 = vmul.f32 %v2576, 0.1
        %v2588 = vmul.f32 %v2577, 0.1
        %v2589 = vmul.f32 %v2578, 0.1
        %v2590 = vmul.f32 %v2579, 0.1
        %v2591 = vmul.f32 %v2580, 0.1
        %v2592 = vmul.f32 %v2581, 0.1
        %v2593 = vmul.f32 %v2582, 0.1
        %v2594 = vmax.f32 %v2572, %v2583
        %v2595 = vmax.f32 %v2573, %v2584
        %v2596 = vmax.f32 %v2574, %v2585
        %v2597 = vmax.f32 %v2575, %v2586
        %v2598 = vmax.f32 %v2576, %v2587
        %v2599 = vmax.f32 %v2577, %v2588
        %v2600 = vmax.f32 %v2578, %v2589
        %v2601 = vmax.f32 %v2579, %v2590
        %v2602 = vmax.f32 %v2580, %v2591
        %v2603 = vmax.f32 %v2581, %v2592
        %v2604 = vmax.f32 %v2582, %v2593
        %v2605 = vsel %vm334, %v2594, 0.0
        %v2606 = vsel %vm335, %v2595, 0.0
        %v2607 = vsel %vm336, %v2596, 0.0
        %v2608 = vsel %vm337, %v2597, 0.0
        %v2609 = vsel %vm338, %v2598, 0.0
        %v2610 = vsel %vm339, %v2599, 0.0
        %v2611 = vsel %vm340, %v2600, 0.0
        %v2612 = vsel %vm341, %v2601, 0.0
        %v2613 = vsel %vm342, %v2602, 0.0
        %v2614 = vsel %vm343, %v2603, 0.0
        %v2615 = vsel %vm344, %v2604, 0.0
        %2616 = vst [vmem:[#allocation3 + $0x8] sm:$0xff] %v2605
        %2617 = vst [vmem:[#allocation3 + $0x10] sm:$0xff] %v2606
        %2618 = vst [vmem:[#allocation3 + $0x18] sm:$0xff] %v2607
        %2619 = vst [vmem:[#allocation3 + $0x20] sm:$0xff] %v2608
        %2620 = vst [vmem:[#allocation3 + $0x28] sm:$0xff] %v2609
        %2621 = vst [vmem:[#allocation3 + $0x30] sm:$0xff] %v2610
        %2622 = vst [vmem:[#allocation3 + $0x38] sm:$0xff] %v2611
        %2623 = vst [vmem:[#allocation3 + $0x40] sm:$0xff] %v2612
        %2624 = vst [vmem:[#allocation3 + $0x48] sm:$0xff] %v2613
        %2625 = vst [vmem:[#allocation3 + $0x50] sm:$0xff] %v2614
        %2626 = vst [vmem:[#allocation3 + $0x58] sm:$0xff] %v2615
        %v2627 = vld [vmem:[#allocation3 + $0x3] sm:$0xff]
        %v2628 = vld [vmem:[#allocation3 + $0xb] sm:$0xff]
        %v2629 = vld [vmem:[#allocation3 + $0x13] sm:$0xff]
        %v2630 = vld [vmem:[#allocation3 + $0x1b] sm:$0xff]
        %v2631 = vld [vmem:[#allocation3 + $0x23] sm:$0xff]
        %v2632 = vld [vmem:[#allocation3 + $0x2b] sm:$0xff]
        %v2633 = vld [vmem:[#allocation3 + $0x33] sm:$0xff]
        %v2634 = vld [vmem:[#allocation3 + $0x3b] sm:$0xff]
        %v2635 = vld [vmem:[#allocation3 + $0x43] sm:$0xff]
        %v2636 = vld [vmem:[#allocation3 + $0x4b] sm:$0xff]
        %v2637 = vld [vmem:[#allocation3 + $0x53] sm:$0xff]
        %v2638 = vpack.c.bf16 %v2628, %v2627
        %v2639 = vpack.c.bf16 %v2630, %v2629
        %v2640 = vpack.c.bf16 %v2632, %v2631
        %v2641 = vpack.c.bf16 %v2634, %v2633
        %v2642 = vpack.c.bf16 %v2636, %v2635
        %v2643 = vpack.c.bf16 %v2637, %v2637
        %s2644 = scalar_lea.vmem [#allocation5], 768
        %v2645 = vld [vmem:[%s2644] sm:$0xf]
        %v2646 = vld [vmem:[%s2644 + $0x4] sm:$0xf]
        %v2647 = vld [vmem:[%s2644 + $0x8] sm:$0xf]
        %v2648 = vld [vmem:[%s2644 + $0xc] sm:$0xf]
        %v2649 = vld [vmem:[%s2644 + $0x10] sm:$0xf]
        %v2650 = vld [vmem:[%s2644 + $0x14] sm:$0xf]
        %v2651 = vld [vmem:[%s2644 + $0x18] sm:$0xf]
        %v2652 = vld [vmem:[%s2644 + $0x1c] sm:$0xf]
        %v2653 = vld [vmem:[%s2644 + $0x20] sm:$0xf]
        %v2654 = vld [vmem:[%s2644 + $0x24] sm:$0xf]
        %v2655 = vld [vmem:[%s2644 + $0x28] sm:$0xf]
        %v2656 = vld [vmem:[%s2644 + $0x2c] sm:$0xf]
        %v2657 = vld [vmem:[%s2644 + $0x30] sm:$0xf]
        %v2658 = vld [vmem:[%s2644 + $0x34] sm:$0xf]
        %v2659 = vld [vmem:[%s2644 + $0x38] sm:$0xf]
        %v2660 = vld [vmem:[%s2644 + $0x3c] sm:$0xf]
        %v2661 = vld [vmem:[#allocation3 + $0x8] sm:$0xff]
        %v2662 = vld [vmem:[#allocation3 + $0x10] sm:$0xff]
        %v2663 = vld [vmem:[#allocation3 + $0x18] sm:$0xff]
        %v2664 = vld [vmem:[#allocation3 + $0x20] sm:$0xff]
        %v2665 = vld [vmem:[#allocation3 + $0x28] sm:$0xff]
        %v2666 = vld [vmem:[#allocation3 + $0x30] sm:$0xff]
        %v2667 = vld [vmem:[#allocation3 + $0x38] sm:$0xff]
        %v2668 = vld [vmem:[#allocation3 + $0x40] sm:$0xff]
        %v2669 = vld [vmem:[#allocation3 + $0x48] sm:$0xff]
        %v2670 = vld [vmem:[#allocation3 + $0x50] sm:$0xff]
        %v2671 = vld [vmem:[#allocation3 + $0x58] sm:$0xff]
        %v2672 = vpack.c.bf16 %v2662, %v2661
        %v2673 = vpack.c.bf16 %v2664, %v2663
        %v2674 = vpack.c.bf16 %v2666, %v2665
        %v2675 = vpack.c.bf16 %v2668, %v2667
        %v2676 = vpack.c.bf16 %v2670, %v2669
        %v2677 = vpack.c.bf16 %v2671, %v2671
        %s2678 = scalar_lea.vmem [#allocation5], 832
        %v2679 = vld [vmem:[%s2678] sm:$0xf]
        %v2680 = vld [vmem:[%s2678 + $0x4] sm:$0xf]
        %v2681 = vld [vmem:[%s2678 + $0x8] sm:$0xf]
        %v2682 = vld [vmem:[%s2678 + $0xc] sm:$0xf]
        %v2683 = vld [vmem:[%s2678 + $0x10] sm:$0xf]
        %v2684 = vld [vmem:[%s2678 + $0x14] sm:$0xf]
        %v2685 = vld [vmem:[%s2678 + $0x18] sm:$0xf]
        %v2686 = vld [vmem:[%s2678 + $0x1c] sm:$0xf]
        %v2687 = vld [vmem:[%s2678 + $0x20] sm:$0xf]
        %v2688 = vld [vmem:[%s2678 + $0x24] sm:$0xf]
        %v2689 = vld [vmem:[%s2678 + $0x28] sm:$0xf]
        %v2690 = vld [vmem:[%s2678 + $0x2c] sm:$0xf]
        %v2691 = vld [vmem:[%s2678 + $0x30] sm:$0xf]
        %v2692 = vld [vmem:[%s2678 + $0x34] sm:$0xf]
        %v2693 = vld [vmem:[%s2678 + $0x38] sm:$0xf]
        %v2694 = vld [vmem:[%s2678 + $0x3c] sm:$0xf]
        %v2711 = vunpack.c.l.b16 %v2679
        %v2712 = vunpack.c.l.b16 %v2680
        %v2713 = vunpack.c.l.b16 %v2681
        %v2714 = vunpack.c.l.b16 %v2682
        %v2715 = vunpack.c.l.b16 %v2683
        %v2716 = vunpack.c.l.b16 %v2684
        %v2717 = vunpack.c.l.b16 %v2685
        %v2718 = vunpack.c.l.b16 %v2686
        %v2719 = vunpack.c.l.b16 %v2687
        %v2720 = vunpack.c.l.b16 %v2688
        %v2721 = vunpack.c.l.b16 %v2689
        %v2722 = vunpack.c.l.b16 %v2690
        %v2723 = vunpack.c.l.b16 %v2691
        %v2724 = vunpack.c.l.b16 %v2692
        %v2725 = vunpack.c.l.b16 %v2693
        %v2726 = vunpack.c.l.b16 %v2694
        %v2727 = vpack.c.b16 %v2712, %v2711
        %v2728 = vpack.c.b16 %v2714, %v2713
        %v2729 = vpack.c.b16 %v2716, %v2715
        %v2730 = vpack.c.b16 %v2718, %v2717
        %v2731 = vpack.c.b16 %v2720, %v2719
        %v2732 = vpack.c.b16 %v2722, %v2721
        %v2733 = vpack.c.b16 %v2724, %v2723
        %v2734 = vpack.c.b16 %v2726, %v2725
        %2743 = vmatprep.subr.bf16.mxu0 0
        %2744 = vmatpush1.bf16.msra.mxu0 %v2727
        %2745 = vmatprep.subr.bf16.mxu0 0
        %2746 = vmatpush1.bf16.msra.mxu0 %v2728
        %2747 = vmatprep.subr.bf16.mxu0 0
        %2748 = vmatpush1.bf16.msra.mxu0 %v2729
        %2749 = vmatprep.subr.bf16.mxu0 0
        %2750 = vmatpush1.bf16.msra.mxu0 %v2730
        %2751 = vmatprep.subr.bf16.mxu0 0
        %2752 = vmatpush1.bf16.msra.mxu0 %v2731
        %2753 = vmatprep.subr.bf16.mxu0 0
        %2754 = vmatpush1.bf16.msra.mxu0 %v2732
        %2755 = vmatprep.subr.bf16.mxu0 0
        %2756 = vmatpush1.bf16.msra.mxu0 %v2733
        %2757 = vmatprep.subr.bf16.mxu0 0
        %2758 = vmatpush1.bf16.msra.mxu0 %v2734
        %2759 = vmatprep.subr.bf16.mxu0 0
        %2760 = vmatpush1.bf16.msra.mxu0 0
        %2761 = vmatprep.subr.bf16.mxu0 0
        %2762 = vmatpush1.bf16.msra.mxu0 0
        %2763 = vmatprep.subr.bf16.mxu0 0
        %2764 = vmatpush1.bf16.msra.mxu0 0
        %2765 = vmatprep.subr.bf16.mxu0 0
        %2766 = vmatpush1.bf16.msra.mxu0 0
        %2767 = vmatprep.subr.bf16.mxu0 0
        %2768 = vmatpush1.bf16.msra.mxu0 0
        %2769 = vmatprep.subr.bf16.mxu0 0
        %2770 = vmatpush1.bf16.msra.mxu0 0
        %2771 = vmatprep.subr.bf16.mxu0 0
        %2772 = vmatpush1.bf16.msra.mxu0 0
        %2773 = vmatprep.subr.bf16.mxu0 0
        %2774 = vmatpush1.bf16.msra.mxu0 0
        %2775 = vmatprep.mubr.bf16.mxu0 0
        %2776 = vmatmul.mubr.bf16.gmra.mrb[0].mxu0 %v2672
        %v2777 = vpop.f32.mrb[0].mxu0
        %v2778 = vadd.f32 0.0, %v2777
        %v2779 = vpop.f32.mrb[0].mxu0
        %v2780 = vpop.f32.mrb[0].mxu0
        %v2781 = vadd.f32 0.0, %v2780
        %v2782 = vpop.f32.mrb[0].mxu0
        %2783 = vmatprep.mubr.bf16.mxu0 0
        %2784 = vmatmul.mubr.bf16.gmra.mrb[0].mxu0 %v2673
        %v2785 = vpop.f32.mrb[0].mxu0
        %v2786 = vadd.f32 0.0, %v2785
        %v2787 = vpop.f32.mrb[0].mxu0
        %v2788 = vpop.f32.mrb[0].mxu0
        %v2789 = vadd.f32 0.0, %v2788
        %v2790 = vpop.f32.mrb[0].mxu0
        %2791 = vmatprep.mubr.bf16.mxu0 0
        %2792 = vmatmul.mubr.bf16.gmra.mrb[0].mxu0 %v2674
        %v2793 = vpop.f32.mrb[0].mxu0
        %v2794 = vadd.f32 0.0, %v2793
        %v2795 = vpop.f32.mrb[0].mxu0
        %v2796 = vpop.f32.mrb[0].mxu0
        %v2797 = vadd.f32 0.0, %v2796
        %v2798 = vpop.f32.mrb[0].mxu0
        %2799 = vmatprep.mubr.bf16.mxu0 0
        %2800 = vmatmul.mubr.bf16.gmra.mrb[0].mxu0 %v2675
        %v2801 = vpop.f32.mrb[0].mxu0
        %v2802 = vadd.f32 0.0, %v2801
        %v2803 = vpop.f32.mrb[0].mxu0
        %v2804 = vpop.f32.mrb[0].mxu0
        %v2805 = vadd.f32 0.0, %v2804
        %v2806 = vpop.f32.mrb[0].mxu0
        %2807 = vmatprep.mubr.bf16.mxu0 0
        %2808 = vmatmul.mubr.bf16.gmra.mrb[0].mxu0 %v2676
        %v2809 = vpop.f32.mrb[0].mxu0
        %v2810 = vadd.f32 0.0, %v2809
        %v2811 = vpop.f32.mrb[0].mxu0
        %v2812 = vpop.f32.mrb[0].mxu0
        %v2813 = vadd.f32 0.0, %v2812
        %v2814 = vpop.f32.mrb[0].mxu0
        %2815 = vmatprep.mubr.bf16.mxu0 0
        %2816 = vmatmul.mubr.bf16.gmra.mrb[0].mxu0 %v2677
        %v2817 = vpop.f32.mrb[0].mxu0
        %v2818 = vadd.f32 0.0, %v2817
        %v2819 = vpop.f32.mrb[0].mxu0
        %v2820 = vpop.f32.mrb[0].mxu0
        %v2821 = vpop.f32.mrb[0].mxu0
        %2822 = vdwg.mxu0
        %v2839 = vunpack.c.l.b16 %v2645
        %v2840 = vunpack.c.l.b16 %v2646
        %v2841 = vunpack.c.l.b16 %v2647
        %v2842 = vunpack.c.l.b16 %v2648
        %v2843 = vunpack.c.l.b16 %v2649
        %v2844 = vunpack.c.l.b16 %v2650
        %v2845 = vunpack.c.l.b16 %v2651
        %v2846 = vunpack.c.l.b16 %v2652
        %v2847 = vunpack.c.l.b16 %v2653
        %v2848 = vunpack.c.l.b16 %v2654
        %v2849 = vunpack.c.l.b16 %v2655
        %v2850 = vunpack.c.l.b16 %v2656
        %v2851 = vunpack.c.l.b16 %v2657
        %v2852 = vunpack.c.l.b16 %v2658
        %v2853 = vunpack.c.l.b16 %v2659
        %v2854 = vunpack.c.l.b16 %v2660
        %v2855 = vpack.c.b16 %v2840, %v2839
        %v2856 = vpack.c.b16 %v2842, %v2841
        %v2857 = vpack.c.b16 %v2844, %v2843
        %v2858 = vpack.c.b16 %v2846, %v2845
        %v2859 = vpack.c.b16 %v2848, %v2847
        %v2860 = vpack.c.b16 %v2850, %v2849
        %v2861 = vpack.c.b16 %v2852, %v2851
        %v2862 = vpack.c.b16 %v2854, %v2853
        %2871 = vmatprep.subr.bf16.mxu0 0
        %2872 = vmatpush1.bf16.msra.mxu0 %v2855
        %2873 = vmatprep.subr.bf16.mxu0 0
        %2874 = vmatpush1.bf16.msra.mxu0 %v2856
        %2875 = vmatprep.subr.bf16.mxu0 0
        %2876 = vmatpush1.bf16.msra.mxu0 %v2857
        %2877 = vmatprep.subr.bf16.mxu0 0
        %2878 = vmatpush1.bf16.msra.mxu0 %v2858
        %2879 = vmatprep.subr.bf16.mxu0 0
        %2880 = vmatpush1.bf16.msra.mxu0 %v2859
        %2881 = vmatprep.subr.bf16.mxu0 0
        %2882 = vmatpush1.bf16.msra.mxu0 %v2860
        %2883 = vmatprep.subr.bf16.mxu0 0
        %2884 = vmatpush1.bf16.msra.mxu0 %v2861
        %2885 = vmatprep.subr.bf16.mxu0 0
        %2886 = vmatpush1.bf16.msra.mxu0 %v2862
        %2887 = vmatprep.subr.bf16.mxu0 0
        %2888 = vmatpush1.bf16.msra.mxu0 0
        %2889 = vmatprep.subr.bf16.mxu0 0
        %2890 = vmatpush1.bf16.msra.mxu0 0
        %2891 = vmatprep.subr.bf16.mxu0 0
        %2892 = vmatpush1.bf16.msra.mxu0 0
        %2893 = vmatprep.subr.bf16.mxu0 0
        %2894 = vmatpush1.bf16.msra.mxu0 0
        %2895 = vmatprep.subr.bf16.mxu0 0
        %2896 = vmatpush1.bf16.msra.mxu0 0
        %2897 = vmatprep.subr.bf16.mxu0 0
        %2898 = vmatpush1.bf16.msra.mxu0 0
        %2899 = vmatprep.subr.bf16.mxu0 0
        %2900 = vmatpush1.bf16.msra.mxu0 0
        %2901 = vmatprep.subr.bf16.mxu0 0
        %2902 = vmatpush1.bf16.msra.mxu0 0
        %2903 = vmatprep.mubr.bf16.mxu0 0
        %2904 = vmatmul.mubr.bf16.gmra.mrb[0].mxu0 %v2638
        %v2905 = vpop.f32.mrb[0].mxu0
        %v2906 = vadd.f32 %v2778, %v2905
        %v2907 = vpop.f32.mrb[0].mxu0
        %v2908 = vpop.f32.mrb[0].mxu0
        %v2909 = vadd.f32 %v2781, %v2908
        %v2910 = vpop.f32.mrb[0].mxu0
        %2911 = vmatprep.mubr.bf16.mxu0 0
        %2912 = vmatmul.mubr.bf16.gmra.mrb[0].mxu0 %v2639
        %v2913 = vpop.f32.mrb[0].mxu0
        %v2914 = vadd.f32 %v2786, %v2913
        %v2915 = vpop.f32.mrb[0].mxu0
        %v2916 = vpop.f32.mrb[0].mxu0
        %v2917 = vadd.f32 %v2789, %v2916
        %v2918 = vpop.f32.mrb[0].mxu0
        %2919 = vmatprep.mubr.bf16.mxu0 0
        %2920 = vmatmul.mubr.bf16.gmra.mrb[0].mxu0 %v2640
        %v2921 = vpop.f32.mrb[0].mxu0
        %v2922 = vadd.f32 %v2794, %v2921
        %v2923 = vpop.f32.mrb[0].mxu0
        %v2924 = vpop.f32.mrb[0].mxu0
        %v2925 = vadd.f32 %v2797, %v2924
        %v2926 = vpop.f32.mrb[0].mxu0
        %2927 = vmatprep.mubr.bf16.mxu0 0
        %2928 = vmatmul.mubr.bf16.gmra.mrb[0].mxu0 %v2641
        %v2929 = vpop.f32.mrb[0].mxu0
        %v2930 = vadd.f32 %v2802, %v2929
        %v2931 = vpop.f32.mrb[0].mxu0
        %v2932 = vpop.f32.mrb[0].mxu0
        %v2933 = vadd.f32 %v2805, %v2932
        %v2934 = vpop.f32.mrb[0].mxu0
        %2935 = vmatprep.mubr.bf16.mxu0 0
        %2936 = vmatmul.mubr.bf16.gmra.mrb[0].mxu0 %v2642
        %v2937 = vpop.f32.mrb[0].mxu0
        %v2938 = vadd.f32 %v2810, %v2937
        %v2939 = vpop.f32.mrb[0].mxu0
        %v2940 = vpop.f32.mrb[0].mxu0
        %v2941 = vadd.f32 %v2813, %v2940
        %v2942 = vpop.f32.mrb[0].mxu0
        %2943 = vmatprep.mubr.bf16.mxu0 0
        %2944 = vmatmul.mubr.bf16.gmra.mrb[0].mxu0 %v2643
        %v2945 = vpop.f32.mrb[0].mxu0
        %v2946 = vadd.f32 %v2818, %v2945
        %v2947 = vpop.f32.mrb[0].mxu0
        %v2948 = vpop.f32.mrb[0].mxu0
        %v2949 = vpop.f32.mrb[0].mxu0
        %2950 = vdwg.mxu0
        %v2951 = vld [vmem:[#allocation3 + $0xd] sm:$0xff]
        %v2952 = vld [vmem:[#allocation3 + $0x15] sm:$0xff]
        %v2953 = vld [vmem:[#allocation3 + $0x1d] sm:$0xff]
        %v2954 = vld [vmem:[#allocation3 + $0x25] sm:$0xff]
        %v2955 = vld [vmem:[#allocation3 + $0x2d] sm:$0xff]
        %v2956 = vld [vmem:[#allocation3 + $0x35] sm:$0xff]
        %v2957 = vld [vmem:[#allocation3 + $0x3d] sm:$0xff]
        %v2958 = vld [vmem:[#allocation3 + $0x45] sm:$0xff]
        %v2959 = vld [vmem:[#allocation3 + $0x4d] sm:$0xff]
        %v2960 = vld [vmem:[#allocation3 + $0x55] sm:$0xff]
        %v2961 = vld [vmem:[#allocation3 + $0x5d] sm:$0xff]
        %v2962 = vpack.c.bf16 %v2952, %v2951
        %v2963 = vpack.c.bf16 %v2954, %v2953
        %v2964 = vpack.c.bf16 %v2956, %v2955
        %v2965 = vpack.c.bf16 %v2958, %v2957
        %v2966 = vpack.c.bf16 %v2960, %v2959
        %v2967 = vpack.c.bf16 %v2961, %v2961
        %s2968 = scalar_lea.vmem [#allocation5], 896
        %v2969 = vld [vmem:[%s2968] sm:$0xf]
        %v2970 = vld [vmem:[%s2968 + $0x4] sm:$0xf]
        %v2971 = vld [vmem:[%s2968 + $0x8] sm:$0xf]
        %v2972 = vld [vmem:[%s2968 + $0xc] sm:$0xf]
        %v2973 = vld [vmem:[%s2968 + $0x10] sm:$0xf]
        %v2974 = vld [vmem:[%s2968 + $0x14] sm:$0xf]
        %v2975 = vld [vmem:[%s2968 + $0x18] sm:$0xf]
        %v2976 = vld [vmem:[%s2968 + $0x1c] sm:$0xf]
        %v2977 = vld [vmem:[%s2968 + $0x20] sm:$0xf]
        %v2978 = vld [vmem:[%s2968 + $0x24] sm:$0xf]
        %v2979 = vld [vmem:[%s2968 + $0x28] sm:$0xf]
        %v2980 = vld [vmem:[%s2968 + $0x2c] sm:$0xf]
        %v2981 = vld [vmem:[%s2968 + $0x30] sm:$0xf]
        %v2982 = vld [vmem:[%s2968 + $0x34] sm:$0xf]
        %v2983 = vld [vmem:[%s2968 + $0x38] sm:$0xf]
        %v2984 = vld [vmem:[%s2968 + $0x3c] sm:$0xf]
        %v3001 = vunpack.c.l.b16 %v2969
        %v3002 = vunpack.c.l.b16 %v2970
        %v3003 = vunpack.c.l.b16 %v2971
        %v3004 = vunpack.c.l.b16 %v2972
        %v3005 = vunpack.c.l.b16 %v2973
        %v3006 = vunpack.c.l.b16 %v2974
        %v3007 = vunpack.c.l.b16 %v2975
        %v3008 = vunpack.c.l.b16 %v2976
        %v3009 = vunpack.c.l.b16 %v2977
        %v3010 = vunpack.c.l.b16 %v2978
        %v3011 = vunpack.c.l.b16 %v2979
        %v3012 = vunpack.c.l.b16 %v2980
        %v3013 = vunpack.c.l.b16 %v2981
        %v3014 = vunpack.c.l.b16 %v2982
        %v3015 = vunpack.c.l.b16 %v2983
        %v3016 = vunpack.c.l.b16 %v2984
        %v3017 = vpack.c.b16 %v3002, %v3001
        %v3018 = vpack.c.b16 %v3004, %v3003
        %v3019 = vpack.c.b16 %v3006, %v3005
        %v3020 = vpack.c.b16 %v3008, %v3007
        %v3021 = vpack.c.b16 %v3010, %v3009
        %v3022 = vpack.c.b16 %v3012, %v3011
        %v3023 = vpack.c.b16 %v3014, %v3013
        %v3024 = vpack.c.b16 %v3016, %v3015
        %3033 = vmatprep.subr.bf16.mxu0 0
        %3034 = vmatpush1.bf16.msra.mxu0 %v3017
        %3035 = vmatprep.subr.bf16.mxu0 0
        %3036 = vmatpush1.bf16.msra.mxu0 %v3018
        %3037 = vmatprep.subr.bf16.mxu0 0
        %3038 = vmatpush1.bf16.msra.mxu0 %v3019
        %3039 = vmatprep.subr.bf16.mxu0 0
        %3040 = vmatpush1.bf16.msra.mxu0 %v3020
        %3041 = vmatprep.subr.bf16.mxu0 0
        %3042 = vmatpush1.bf16.msra.mxu0 %v3021
        %3043 = vmatprep.subr.bf16.mxu0 0
        %3044 = vmatpush1.bf16.msra.mxu0 %v3022
        %3045 = vmatprep.subr.bf16.mxu0 0
        %3046 = vmatpush1.bf16.msra.mxu0 %v3023
        %3047 = vmatprep.subr.bf16.mxu0 0
        %3048 = vmatpush1.bf16.msra.mxu0 %v3024
        %3049 = vmatprep.subr.bf16.mxu0 0
        %3050 = vmatpush1.bf16.msra.mxu0 0
        %3051 = vmatprep.subr.bf16.mxu0 0
        %3052 = vmatpush1.bf16.msra.mxu0 0
        %3053 = vmatprep.subr.bf16.mxu0 0
        %3054 = vmatpush1.bf16.msra.mxu0 0
        %3055 = vmatprep.subr.bf16.mxu0 0
        %3056 = vmatpush1.bf16.msra.mxu0 0
        %3057 = vmatprep.subr.bf16.mxu0 0
        %3058 = vmatpush1.bf16.msra.mxu0 0
        %3059 = vmatprep.subr.bf16.mxu0 0
        %3060 = vmatpush1.bf16.msra.mxu0 0
        %3061 = vmatprep.subr.bf16.mxu0 0
        %3062 = vmatpush1.bf16.msra.mxu0 0
        %3063 = vmatprep.subr.bf16.mxu0 0
        %3064 = vmatpush1.bf16.msra.mxu0 0
        %3065 = vmatprep.mubr.bf16.mxu0 0
        %3066 = vmatmul.mubr.bf16.gmra.mrb[0].mxu0 %v2962
        %v3067 = vpop.f32.mrb[0].mxu0
        %v3068 = vadd.f32 0.0, %v3067
        %v3069 = vpop.f32.mrb[0].mxu0
        %v3070 = vpop.f32.mrb[0].mxu0
        %v3071 = vadd.f32 0.0, %v3070
        %v3072 = vpop.f32.mrb[0].mxu0
        %3073 = vmatprep.mubr.bf16.mxu0 0
        %3074 = vmatmul.mubr.bf16.gmra.mrb[0].mxu0 %v2963
        %v3075 = vpop.f32.mrb[0].mxu0
        %v3076 = vadd.f32 0.0, %v3075
        %v3077 = vpop.f32.mrb[0].mxu0
        %v3078 = vpop.f32.mrb[0].mxu0
        %v3079 = vadd.f32 0.0, %v3078
        %v3080 = vpop.f32.mrb[0].mxu0
        %3081 = vmatprep.mubr.bf16.mxu0 0
        %3082 = vmatmul.mubr.bf16.gmra.mrb[0].mxu0 %v2964
        %v3083 = vpop.f32.mrb[0].mxu0
        %v3084 = vadd.f32 0.0, %v3083
        %v3085 = vpop.f32.mrb[0].mxu0
        %v3086 = vpop.f32.mrb[0].mxu0
        %v3087 = vadd.f32 0.0, %v3086
        %v3088 = vpop.f32.mrb[0].mxu0
        %3089 = vmatprep.mubr.bf16.mxu0 0
        %3090 = vmatmul.mubr.bf16.gmra.mrb[0].mxu0 %v2965
        %v3091 = vpop.f32.mrb[0].mxu0
        %v3092 = vadd.f32 0.0, %v3091
        %v3093 = vpop.f32.mrb[0].mxu0
        %v3094 = vpop.f32.mrb[0].mxu0
        %v3095 = vadd.f32 0.0, %v3094
        %v3096 = vpop.f32.mrb[0].mxu0
        %3097 = vmatprep.mubr.bf16.mxu0 0
        %3098 = vmatmul.mubr.bf16.gmra.mrb[0].mxu0 %v2966
        %v3099 = vpop.f32.mrb[0].mxu0
        %v3100 = vadd.f32 0.0, %v3099
        %v3101 = vpop.f32.mrb[0].mxu0
        %v3102 = vpop.f32.mrb[0].mxu0
        %v3103 = vadd.f32 0.0, %v3102
        %v3104 = vpop.f32.mrb[0].mxu0
        %3105 = vmatprep.mubr.bf16.mxu0 0
        %3106 = vmatmul.mubr.bf16.gmra.mrb[0].mxu0 %v2967
        %v3107 = vpop.f32.mrb[0].mxu0
        %v3108 = vadd.f32 0.0, %v3107
        %v3109 = vpop.f32.mrb[0].mxu0
        %v3110 = vpop.f32.mrb[0].mxu0
        %v3111 = vpop.f32.mrb[0].mxu0
        %3112 = vdwg.mxu0
        %v3113 = vadd.f32 %v2906, %v3068
        %v3114 = vadd.f32 %v2909, %v3071
        %v3115 = vadd.f32 %v2914, %v3076
        %v3116 = vadd.f32 %v2917, %v3079
        %v3117 = vadd.f32 %v2922, %v3084
        %v3118 = vadd.f32 %v2925, %v3087
        %v3119 = vadd.f32 %v2930, %v3092
        %v3120 = vadd.f32 %v2933, %v3095
        %v3121 = vadd.f32 %v2938, %v3100
        %v3122 = vadd.f32 %v2941, %v3103
        %v3123 = vadd.f32 %v2946, %v3108
        %s3124 = scalar_lea.vmem [#allocation8], 4
        %v3125 = vld [vmem:[%s3124] sm:$0x1]
        %v3127 = vlaneseq
        %v3128 = vshrl.u32 %v3127, 7
        %v3129 = vsub.s32 0, %v3128
        %v3130 = vrot.slane %v3125, %v3129
        %v3132 = vadd.f32 %v3113, %v3130
        %v3133 = vadd.f32 %v3114, %v3130
        %v3134 = vadd.f32 %v3115, %v3130
        %v3135 = vadd.f32 %v3116, %v3130
        %v3136 = vadd.f32 %v3117, %v3130
        %v3137 = vadd.f32 %v3118, %v3130
        %v3138 = vadd.f32 %v3119, %v3130
        %v3139 = vadd.f32 %v3120, %v3130
        %v3140 = vadd.f32 %v3121, %v3130
        %v3141 = vadd.f32 %v3122, %v3130
        %v3142 = vadd.f32 %v3123, %v3130
        %v3143 = vmul.f32 %v3132, 0.1
        %v3144 = vmul.f32 %v3133, 0.1
        %v3145 = vmul.f32 %v3134, 0.1
        %v3146 = vmul.f32 %v3135, 0.1
        %v3147 = vmul.f32 %v3136, 0.1
        %v3148 = vmul.f32 %v3137, 0.1
        %v3149 = vmul.f32 %v3138, 0.1
        %v3150 = vmul.f32 %v3139, 0.1
        %v3151 = vmul.f32 %v3140, 0.1
        %v3152 = vmul.f32 %v3141, 0.1
        %v3153 = vmul.f32 %v3142, 0.1
        %v3154 = vmax.f32 %v3132, %v3143
        %v3155 = vmax.f32 %v3133, %v3144
        %v3156 = vmax.f32 %v3134, %v3145
        %v3157 = vmax.f32 %v3135, %v3146
        %v3158 = vmax.f32 %v3136, %v3147
        %v3159 = vmax.f32 %v3137, %v3148
        %v3160 = vmax.f32 %v3138, %v3149
        %v3161 = vmax.f32 %v3139, %v3150
        %v3162 = vmax.f32 %v3140, %v3151
        %v3163 = vmax.f32 %v3141, %v3152
        %v3164 = vmax.f32 %v3142, %v3153
        %v3165 = vsel %vm334, %v3154, 0.0
        %v3166 = vsel %vm335, %v3155, 0.0
        %v3167 = vsel %vm336, %v3156, 0.0
        %v3168 = vsel %vm337, %v3157, 0.0
        %v3169 = vsel %vm338, %v3158, 0.0
        %v3170 = vsel %vm339, %v3159, 0.0
        %v3171 = vsel %vm340, %v3160, 0.0
        %v3172 = vsel %vm341, %v3161, 0.0
        %v3173 = vsel %vm342, %v3162, 0.0
        %v3174 = vsel %vm343, %v3163, 0.0
        %v3175 = vsel %vm344, %v3164, 0.0
        %3176 = vst [vmem:[#allocation3 + $0x8] sm:$0xff] %v3165
        %3177 = vst [vmem:[#allocation3 + $0x10] sm:$0xff] %v3166
        %3178 = vst [vmem:[#allocation3 + $0x18] sm:$0xff] %v3167
        %3179 = vst [vmem:[#allocation3 + $0x20] sm:$0xff] %v3168
        %3180 = vst [vmem:[#allocation3 + $0x28] sm:$0xff] %v3169
        %3181 = vst [vmem:[#allocation3 + $0x30] sm:$0xff] %v3170
        %3182 = vst [vmem:[#allocation3 + $0x38] sm:$0xff] %v3171
        %3183 = vst [vmem:[#allocation3 + $0x40] sm:$0xff] %v3172
        %3184 = vst [vmem:[#allocation3 + $0x48] sm:$0xff] %v3173
        %3185 = vst [vmem:[#allocation3 + $0x50] sm:$0xff] %v3174
        %3186 = vst [vmem:[#allocation3 + $0x58] sm:$0xff] %v3175
        %v3187 = vld [vmem:[#allocation3 + $0x7] sm:$0xff]
        %v3188 = vld [vmem:[#allocation3 + $0xf] sm:$0xff]
        %v3189 = vld [vmem:[#allocation3 + $0x17] sm:$0xff]
        %v3190 = vld [vmem:[#allocation3 + $0x1f] sm:$0xff]
        %v3191 = vld [vmem:[#allocation3 + $0x27] sm:$0xff]
        %v3192 = vld [vmem:[#allocation3 + $0x2f] sm:$0xff]
        %v3193 = vld [vmem:[#allocation3 + $0x37] sm:$0xff]
        %v3194 = vld [vmem:[#allocation3 + $0x3f] sm:$0xff]
        %v3195 = vld [vmem:[#allocation3 + $0x47] sm:$0xff]
        %v3196 = vld [vmem:[#allocation3 + $0x4f] sm:$0xff]
        %v3197 = vld [vmem:[#allocation3 + $0x57] sm:$0xff]
        %v3198 = vpack.c.bf16 %v3188, %v3187
        %v3199 = vpack.c.bf16 %v3190, %v3189
        %v3200 = vpack.c.bf16 %v3192, %v3191
        %v3201 = vpack.c.bf16 %v3194, %v3193
        %v3202 = vpack.c.bf16 %v3196, %v3195
        %v3203 = vpack.c.bf16 %v3197, %v3197
        %s3204 = scalar_lea.vmem [#allocation5], 960
        %v3205 = vld [vmem:[%s3204] sm:$0xf]
        %v3206 = vld [vmem:[%s3204 + $0x4] sm:$0xf]
        %v3207 = vld [vmem:[%s3204 + $0x8] sm:$0xf]
        %v3208 = vld [vmem:[%s3204 + $0xc] sm:$0xf]
        %v3209 = vld [vmem:[%s3204 + $0x10] sm:$0xf]
        %v3210 = vld [vmem:[%s3204 + $0x14] sm:$0xf]
        %v3211 = vld [vmem:[%s3204 + $0x18] sm:$0xf]
        %v3212 = vld [vmem:[%s3204 + $0x1c] sm:$0xf]
        %v3213 = vld [vmem:[%s3204 + $0x20] sm:$0xf]
        %v3214 = vld [vmem:[%s3204 + $0x24] sm:$0xf]
        %v3215 = vld [vmem:[%s3204 + $0x28] sm:$0xf]
        %v3216 = vld [vmem:[%s3204 + $0x2c] sm:$0xf]
        %v3217 = vld [vmem:[%s3204 + $0x30] sm:$0xf]
        %v3218 = vld [vmem:[%s3204 + $0x34] sm:$0xf]
        %v3219 = vld [vmem:[%s3204 + $0x38] sm:$0xf]
        %v3220 = vld [vmem:[%s3204 + $0x3c] sm:$0xf]
        %v3221 = vld [vmem:[#allocation3 + $0x8] sm:$0xff]
        %v3222 = vld [vmem:[#allocation3 + $0x10] sm:$0xff]
        %v3223 = vld [vmem:[#allocation3 + $0x18] sm:$0xff]
        %v3224 = vld [vmem:[#allocation3 + $0x20] sm:$0xff]
        %v3225 = vld [vmem:[#allocation3 + $0x28] sm:$0xff]
        %v3226 = vld [vmem:[#allocation3 + $0x30] sm:$0xff]
        %v3227 = vld [vmem:[#allocation3 + $0x38] sm:$0xff]
        %v3228 = vld [vmem:[#allocation3 + $0x40] sm:$0xff]
        %v3229 = vld [vmem:[#allocation3 + $0x48] sm:$0xff]
        %v3230 = vld [vmem:[#allocation3 + $0x50] sm:$0xff]
        %v3231 = vld [vmem:[#allocation3 + $0x58] sm:$0xff]
        %v3232 = vpack.c.bf16 %v3222, %v3221
        %v3233 = vpack.c.bf16 %v3224, %v3223
        %v3234 = vpack.c.bf16 %v3226, %v3225
        %v3235 = vpack.c.bf16 %v3228, %v3227
        %v3236 = vpack.c.bf16 %v3230, %v3229
        %v3237 = vpack.c.bf16 %v3231, %v3231
        %s3238 = scalar_lea.vmem [#allocation5], 1024
        %v3239 = vld [vmem:[%s3238] sm:$0xf]
        %v3240 = vld [vmem:[%s3238 + $0x4] sm:$0xf]
        %v3241 = vld [vmem:[%s3238 + $0x8] sm:$0xf]
        %v3242 = vld [vmem:[%s3238 + $0xc] sm:$0xf]
        %v3243 = vld [vmem:[%s3238 + $0x10] sm:$0xf]
        %v3244 = vld [vmem:[%s3238 + $0x14] sm:$0xf]
        %v3245 = vld [vmem:[%s3238 + $0x18] sm:$0xf]
        %v3246 = vld [vmem:[%s3238 + $0x1c] sm:$0xf]
        %v3247 = vld [vmem:[%s3238 + $0x20] sm:$0xf]
        %v3248 = vld [vmem:[%s3238 + $0x24] sm:$0xf]
        %v3249 = vld [vmem:[%s3238 + $0x28] sm:$0xf]
        %v3250 = vld [vmem:[%s3238 + $0x2c] sm:$0xf]
        %v3251 = vld [vmem:[%s3238 + $0x30] sm:$0xf]
        %v3252 = vld [vmem:[%s3238 + $0x34] sm:$0xf]
        %v3253 = vld [vmem:[%s3238 + $0x38] sm:$0xf]
        %v3254 = vld [vmem:[%s3238 + $0x3c] sm:$0xf]
        %v3271 = vunpack.c.l.b16 %v3239
        %v3272 = vunpack.c.l.b16 %v3240
        %v3273 = vunpack.c.l.b16 %v3241
        %v3274 = vunpack.c.l.b16 %v3242
        %v3275 = vunpack.c.l.b16 %v3243
        %v3276 = vunpack.c.l.b16 %v3244
        %v3277 = vunpack.c.l.b16 %v3245
        %v3278 = vunpack.c.l.b16 %v3246
        %v3279 = vunpack.c.l.b16 %v3247
        %v3280 = vunpack.c.l.b16 %v3248
        %v3281 = vunpack.c.l.b16 %v3249
        %v3282 = vunpack.c.l.b16 %v3250
        %v3283 = vunpack.c.l.b16 %v3251
        %v3284 = vunpack.c.l.b16 %v3252
        %v3285 = vunpack.c.l.b16 %v3253
        %v3286 = vunpack.c.l.b16 %v3254
        %v3287 = vpack.c.b16 %v3272, %v3271
        %v3288 = vpack.c.b16 %v3274, %v3273
        %v3289 = vpack.c.b16 %v3276, %v3275
        %v3290 = vpack.c.b16 %v3278, %v3277
        %v3291 = vpack.c.b16 %v3280, %v3279
        %v3292 = vpack.c.b16 %v3282, %v3281
        %v3293 = vpack.c.b16 %v3284, %v3283
        %v3294 = vpack.c.b16 %v3286, %v3285
        %3303 = vmatprep.subr.bf16.mxu0 0
        %3304 = vmatpush1.bf16.msra.mxu0 %v3287
        %3305 = vmatprep.subr.bf16.mxu0 0
        %3306 = vmatpush1.bf16.msra.mxu0 %v3288
        %3307 = vmatprep.subr.bf16.mxu0 0
        %3308 = vmatpush1.bf16.msra.mxu0 %v3289
        %3309 = vmatprep.subr.bf16.mxu0 0
        %3310 = vmatpush1.bf16.msra.mxu0 %v3290
        %3311 = vmatprep.subr.bf16.mxu0 0
        %3312 = vmatpush1.bf16.msra.mxu0 %v3291
        %3313 = vmatprep.subr.bf16.mxu0 0
        %3314 = vmatpush1.bf16.msra.mxu0 %v3292
        %3315 = vmatprep.subr.bf16.mxu0 0
        %3316 = vmatpush1.bf16.msra.mxu0 %v3293
        %3317 = vmatprep.subr.bf16.mxu0 0
        %3318 = vmatpush1.bf16.msra.mxu0 %v3294
        %3319 = vmatprep.subr.bf16.mxu0 0
        %3320 = vmatpush1.bf16.msra.mxu0 0
        %3321 = vmatprep.subr.bf16.mxu0 0
        %3322 = vmatpush1.bf16.msra.mxu0 0
        %3323 = vmatprep.subr.bf16.mxu0 0
        %3324 = vmatpush1.bf16.msra.mxu0 0
        %3325 = vmatprep.subr.bf16.mxu0 0
        %3326 = vmatpush1.bf16.msra.mxu0 0
        %3327 = vmatprep.subr.bf16.mxu0 0
        %3328 = vmatpush1.bf16.msra.mxu0 0
        %3329 = vmatprep.subr.bf16.mxu0 0
        %3330 = vmatpush1.bf16.msra.mxu0 0
        %3331 = vmatprep.subr.bf16.mxu0 0
        %3332 = vmatpush1.bf16.msra.mxu0 0
        %3333 = vmatprep.subr.bf16.mxu0 0
        %3334 = vmatpush1.bf16.msra.mxu0 0
        %3335 = vmatprep.mubr.bf16.mxu0 0
        %3336 = vmatmul.mubr.bf16.gmra.mrb[0].mxu0 %v3232
        %v3337 = vpop.f32.mrb[0].mxu0
        %v3338 = vpop.f32.mrb[0].mxu0
        %v3339 = vpop.f32.mrb[0].mxu0
        %v3340 = vadd.f32 0.0, %v3339
        %v3341 = vpop.f32.mrb[0].mxu0
        %3342 = vmatprep.mubr.bf16.mxu0 0
        %3343 = vmatmul.mubr.bf16.gmra.mrb[0].mxu0 %v3233
        %v3344 = vpop.f32.mrb[0].mxu0
        %v3345 = vadd.f32 0.0, %v3344
        %v3346 = vpop.f32.mrb[0].mxu0
        %v3347 = vpop.f32.mrb[0].mxu0
        %v3348 = vadd.f32 0.0, %v3347
        %v3349 = vpop.f32.mrb[0].mxu0
        %3350 = vmatprep.mubr.bf16.mxu0 0
        %3351 = vmatmul.mubr.bf16.gmra.mrb[0].mxu0 %v3234
        %v3352 = vpop.f32.mrb[0].mxu0
        %v3353 = vadd.f32 0.0, %v3352
        %v3354 = vpop.f32.mrb[0].mxu0
        %v3355 = vpop.f32.mrb[0].mxu0
        %v3356 = vadd.f32 0.0, %v3355
        %v3357 = vpop.f32.mrb[0].mxu0
        %3358 = vmatprep.mubr.bf16.mxu0 0
        %3359 = vmatmul.mubr.bf16.gmra.mrb[0].mxu0 %v3235
        %v3360 = vpop.f32.mrb[0].mxu0
        %v3361 = vadd.f32 0.0, %v3360
        %v3362 = vpop.f32.mrb[0].mxu0
        %v3363 = vpop.f32.mrb[0].mxu0
        %v3364 = vadd.f32 0.0, %v3363
        %v3365 = vpop.f32.mrb[0].mxu0
        %3366 = vmatprep.mubr.bf16.mxu0 0
        %3367 = vmatmul.mubr.bf16.gmra.mrb[0].mxu0 %v3236
        %v3368 = vpop.f32.mrb[0].mxu0
        %v3369 = vadd.f32 0.0, %v3368
        %v3370 = vpop.f32.mrb[0].mxu0
        %v3371 = vpop.f32.mrb[0].mxu0
        %v3372 = vadd.f32 0.0, %v3371
        %v3373 = vpop.f32.mrb[0].mxu0
        %3374 = vmatprep.mubr.bf16.mxu0 0
        %3375 = vmatmul.mubr.bf16.gmra.mrb[0].mxu0 %v3237
        %v3376 = vpop.f32.mrb[0].mxu0
        %v3377 = vpop.f32.mrb[0].mxu0
        %v3378 = vpop.f32.mrb[0].mxu0
        %v3379 = vpop.f32.mrb[0].mxu0
        %3380 = vdwg.mxu0
        %v3397 = vunpack.c.l.b16 %v3205
        %v3398 = vunpack.c.l.b16 %v3206
        %v3399 = vunpack.c.l.b16 %v3207
        %v3400 = vunpack.c.l.b16 %v3208
        %v3401 = vunpack.c.l.b16 %v3209
        %v3402 = vunpack.c.l.b16 %v3210
        %v3403 = vunpack.c.l.b16 %v3211
        %v3404 = vunpack.c.l.b16 %v3212
        %v3405 = vunpack.c.l.b16 %v3213
        %v3406 = vunpack.c.l.b16 %v3214
        %v3407 = vunpack.c.l.b16 %v3215
        %v3408 = vunpack.c.l.b16 %v3216
        %v3409 = vunpack.c.l.b16 %v3217
        %v3410 = vunpack.c.l.b16 %v3218
        %v3411 = vunpack.c.l.b16 %v3219
        %v3412 = vunpack.c.l.b16 %v3220
        %v3413 = vpack.c.b16 %v3398, %v3397
        %v3414 = vpack.c.b16 %v3400, %v3399
        %v3415 = vpack.c.b16 %v3402, %v3401
        %v3416 = vpack.c.b16 %v3404, %v3403
        %v3417 = vpack.c.b16 %v3406, %v3405
        %v3418 = vpack.c.b16 %v3408, %v3407
        %v3419 = vpack.c.b16 %v3410, %v3409
        %v3420 = vpack.c.b16 %v3412, %v3411
        %3429 = vmatprep.subr.bf16.mxu0 0
        %3430 = vmatpush1.bf16.msra.mxu0 %v3413
        %3431 = vmatprep.subr.bf16.mxu0 0
        %3432 = vmatpush1.bf16.msra.mxu0 %v3414
        %3433 = vmatprep.subr.bf16.mxu0 0
        %3434 = vmatpush1.bf16.msra.mxu0 %v3415
        %3435 = vmatprep.subr.bf16.mxu0 0
        %3436 = vmatpush1.bf16.msra.mxu0 %v3416
        %3437 = vmatprep.subr.bf16.mxu0 0
        %3438 = vmatpush1.bf16.msra.mxu0 %v3417
        %3439 = vmatprep.subr.bf16.mxu0 0
        %3440 = vmatpush1.bf16.msra.mxu0 %v3418
        %3441 = vmatprep.subr.bf16.mxu0 0
        %3442 = vmatpush1.bf16.msra.mxu0 %v3419
        %3443 = vmatprep.subr.bf16.mxu0 0
        %3444 = vmatpush1.bf16.msra.mxu0 %v3420
        %3445 = vmatprep.subr.bf16.mxu0 0
        %3446 = vmatpush1.bf16.msra.mxu0 0
        %3447 = vmatprep.subr.bf16.mxu0 0
        %3448 = vmatpush1.bf16.msra.mxu0 0
        %3449 = vmatprep.subr.bf16.mxu0 0
        %3450 = vmatpush1.bf16.msra.mxu0 0
        %3451 = vmatprep.subr.bf16.mxu0 0
        %3452 = vmatpush1.bf16.msra.mxu0 0
        %3453 = vmatprep.subr.bf16.mxu0 0
        %3454 = vmatpush1.bf16.msra.mxu0 0
        %3455 = vmatprep.subr.bf16.mxu0 0
        %3456 = vmatpush1.bf16.msra.mxu0 0
        %3457 = vmatprep.subr.bf16.mxu0 0
        %3458 = vmatpush1.bf16.msra.mxu0 0
        %3459 = vmatprep.subr.bf16.mxu0 0
        %3460 = vmatpush1.bf16.msra.mxu0 0
        %3461 = vmatprep.mubr.bf16.mxu0 0
        %3462 = vmatmul.mubr.bf16.gmra.mrb[0].mxu0 %v3198
        %v3463 = vpop.f32.mrb[0].mxu0
        %v3464 = vpop.f32.mrb[0].mxu0
        %v3465 = vpop.f32.mrb[0].mxu0
        %v3466 = vadd.f32 %v3340, %v3465
        %v3467 = vpop.f32.mrb[0].mxu0
        %3468 = vmatprep.mubr.bf16.mxu0 0
        %3469 = vmatmul.mubr.bf16.gmra.mrb[0].mxu0 %v3199
        %v3470 = vpop.f32.mrb[0].mxu0
        %v3471 = vadd.f32 %v3345, %v3470
        %v3472 = vpop.f32.mrb[0].mxu0
        %v3473 = vpop.f32.mrb[0].mxu0
        %v3474 = vadd.f32 %v3348, %v3473
        %v3475 = vpop.f32.mrb[0].mxu0
        %3476 = vmatprep.mubr.bf16.mxu0 0
        %3477 = vmatmul.mubr.bf16.gmra.mrb[0].mxu0 %v3200
        %v3478 = vpop.f32.mrb[0].mxu0
        %v3479 = vadd.f32 %v3353, %v3478
        %v3480 = vpop.f32.mrb[0].mxu0
        %v3481 = vpop.f32.mrb[0].mxu0
        %v3482 = vadd.f32 %v3356, %v3481
        %v3483 = vpop.f32.mrb[0].mxu0
        %3484 = vmatprep.mubr.bf16.mxu0 0
        %3485 = vmatmul.mubr.bf16.gmra.mrb[0].mxu0 %v3201
        %v3486 = vpop.f32.mrb[0].mxu0
        %v3487 = vadd.f32 %v3361, %v3486
        %v3488 = vpop.f32.mrb[0].mxu0
        %v3489 = vpop.f32.mrb[0].mxu0
        %v3490 = vadd.f32 %v3364, %v3489
        %v3491 = vpop.f32.mrb[0].mxu0
        %3492 = vmatprep.mubr.bf16.mxu0 0
        %3493 = vmatmul.mubr.bf16.gmra.mrb[0].mxu0 %v3202
        %v3494 = vpop.f32.mrb[0].mxu0
        %v3495 = vadd.f32 %v3369, %v3494
        %v3496 = vpop.f32.mrb[0].mxu0
        %v3497 = vpop.f32.mrb[0].mxu0
        %v3498 = vadd.f32 %v3372, %v3497
        %v3499 = vpop.f32.mrb[0].mxu0
        %3500 = vmatprep.mubr.bf16.mxu0 0
        %3501 = vmatmul.mubr.bf16.gmra.mrb[0].mxu0 %v3203
        %v3502 = vpop.f32.mrb[0].mxu0
        %v3503 = vpop.f32.mrb[0].mxu0
        %v3504 = vpop.f32.mrb[0].mxu0
        %v3505 = vpop.f32.mrb[0].mxu0
        %3506 = vdwg.mxu0
        %v3507 = vld [vmem:[#allocation3 + $0x9] sm:$0xff]
        %v3508 = vld [vmem:[#allocation3 + $0x11] sm:$0xff]
        %v3509 = vld [vmem:[#allocation3 + $0x19] sm:$0xff]
        %v3510 = vld [vmem:[#allocation3 + $0x21] sm:$0xff]
        %v3511 = vld [vmem:[#allocation3 + $0x29] sm:$0xff]
        %v3512 = vld [vmem:[#allocation3 + $0x31] sm:$0xff]
        %v3513 = vld [vmem:[#allocation3 + $0x39] sm:$0xff]
        %v3514 = vld [vmem:[#allocation3 + $0x41] sm:$0xff]
        %v3515 = vld [vmem:[#allocation3 + $0x49] sm:$0xff]
        %v3516 = vld [vmem:[#allocation3 + $0x51] sm:$0xff]
        %v3517 = vld [vmem:[#allocation3 + $0x59] sm:$0xff]
        %v3518 = vpack.c.bf16 %v3508, %v3507
        %v3519 = vpack.c.bf16 %v3510, %v3509
        %v3520 = vpack.c.bf16 %v3512, %v3511
        %v3521 = vpack.c.bf16 %v3514, %v3513
        %v3522 = vpack.c.bf16 %v3516, %v3515
        %v3523 = vpack.c.bf16 %v3517, %v3517
        %s3524 = scalar_lea.vmem [#allocation5], 1088
        %v3525 = vld [vmem:[%s3524] sm:$0xf]
        %v3526 = vld [vmem:[%s3524 + $0x4] sm:$0xf]
        %v3527 = vld [vmem:[%s3524 + $0x8] sm:$0xf]
        %v3528 = vld [vmem:[%s3524 + $0xc] sm:$0xf]
        %v3529 = vld [vmem:[%s3524 + $0x10] sm:$0xf]
        %v3530 = vld [vmem:[%s3524 + $0x14] sm:$0xf]
        %v3531 = vld [vmem:[%s3524 + $0x18] sm:$0xf]
        %v3532 = vld [vmem:[%s3524 + $0x1c] sm:$0xf]
        %v3533 = vld [vmem:[%s3524 + $0x20] sm:$0xf]
        %v3534 = vld [vmem:[%s3524 + $0x24] sm:$0xf]
        %v3535 = vld [vmem:[%s3524 + $0x28] sm:$0xf]
        %v3536 = vld [vmem:[%s3524 + $0x2c] sm:$0xf]
        %v3537 = vld [vmem:[%s3524 + $0x30] sm:$0xf]
        %v3538 = vld [vmem:[%s3524 + $0x34] sm:$0xf]
        %v3539 = vld [vmem:[%s3524 + $0x38] sm:$0xf]
        %v3540 = vld [vmem:[%s3524 + $0x3c] sm:$0xf]
        %v3557 = vunpack.c.l.b16 %v3525
        %v3558 = vunpack.c.l.b16 %v3526
        %v3559 = vunpack.c.l.b16 %v3527
        %v3560 = vunpack.c.l.b16 %v3528
        %v3561 = vunpack.c.l.b16 %v3529
        %v3562 = vunpack.c.l.b16 %v3530
        %v3563 = vunpack.c.l.b16 %v3531
        %v3564 = vunpack.c.l.b16 %v3532
        %v3565 = vunpack.c.l.b16 %v3533
        %v3566 = vunpack.c.l.b16 %v3534
        %v3567 = vunpack.c.l.b16 %v3535
        %v3568 = vunpack.c.l.b16 %v3536
        %v3569 = vunpack.c.l.b16 %v3537
        %v3570 = vunpack.c.l.b16 %v3538
        %v3571 = vunpack.c.l.b16 %v3539
        %v3572 = vunpack.c.l.b16 %v3540
        %v3573 = vpack.c.b16 %v3558, %v3557
        %v3574 = vpack.c.b16 %v3560, %v3559
        %v3575 = vpack.c.b16 %v3562, %v3561
        %v3576 = vpack.c.b16 %v3564, %v3563
        %v3577 = vpack.c.b16 %v3566, %v3565
        %v3578 = vpack.c.b16 %v3568, %v3567
        %v3579 = vpack.c.b16 %v3570, %v3569
        %v3580 = vpack.c.b16 %v3572, %v3571
        %3589 = vmatprep.subr.bf16.mxu0 0
        %3590 = vmatpush1.bf16.msra.mxu0 %v3573
        %3591 = vmatprep.subr.bf16.mxu0 0
        %3592 = vmatpush1.bf16.msra.mxu0 %v3574
        %3593 = vmatprep.subr.bf16.mxu0 0
        %3594 = vmatpush1.bf16.msra.mxu0 %v3575
        %3595 = vmatprep.subr.bf16.mxu0 0
        %3596 = vmatpush1.bf16.msra.mxu0 %v3576
        %3597 = vmatprep.subr.bf16.mxu0 0
        %3598 = vmatpush1.bf16.msra.mxu0 %v3577
        %3599 = vmatprep.subr.bf16.mxu0 0
        %3600 = vmatpush1.bf16.msra.mxu0 %v3578
        %3601 = vmatprep.subr.bf16.mxu0 0
        %3602 = vmatpush1.bf16.msra.mxu0 %v3579
        %3603 = vmatprep.subr.bf16.mxu0 0
        %3604 = vmatpush1.bf16.msra.mxu0 %v3580
        %3605 = vmatprep.subr.bf16.mxu0 0
        %3606 = vmatpush1.bf16.msra.mxu0 0
        %3607 = vmatprep.subr.bf16.mxu0 0
        %3608 = vmatpush1.bf16.msra.mxu0 0
        %3609 = vmatprep.subr.bf16.mxu0 0
        %3610 = vmatpush1.bf16.msra.mxu0 0
        %3611 = vmatprep.subr.bf16.mxu0 0
        %3612 = vmatpush1.bf16.msra.mxu0 0
        %3613 = vmatprep.subr.bf16.mxu0 0
        %3614 = vmatpush1.bf16.msra.mxu0 0
        %3615 = vmatprep.subr.bf16.mxu0 0
        %3616 = vmatpush1.bf16.msra.mxu0 0
        %3617 = vmatprep.subr.bf16.mxu0 0
        %3618 = vmatpush1.bf16.msra.mxu0 0
        %3619 = vmatprep.subr.bf16.mxu0 0
        %3620 = vmatpush1.bf16.msra.mxu0 0
        %3621 = vmatprep.mubr.bf16.mxu0 0
        %3622 = vmatmul.mubr.bf16.gmra.mrb[0].mxu0 %v3518
        %v3623 = vpop.f32.mrb[0].mxu0
        %v3624 = vpop.f32.mrb[0].mxu0
        %v3625 = vpop.f32.mrb[0].mxu0
        %v3626 = vadd.f32 0.0, %v3625
        %v3627 = vpop.f32.mrb[0].mxu0
        %3628 = vmatprep.mubr.bf16.mxu0 0
        %3629 = vmatmul.mubr.bf16.gmra.mrb[0].mxu0 %v3519
        %v3630 = vpop.f32.mrb[0].mxu0
        %v3631 = vadd.f32 0.0, %v3630
        %v3632 = vpop.f32.mrb[0].mxu0
        %v3633 = vpop.f32.mrb[0].mxu0
        %v3634 = vadd.f32 0.0, %v3633
        %v3635 = vpop.f32.mrb[0].mxu0
        %3636 = vmatprep.mubr.bf16.mxu0 0
        %3637 = vmatmul.mubr.bf16.gmra.mrb[0].mxu0 %v3520
        %v3638 = vpop.f32.mrb[0].mxu0
        %v3639 = vadd.f32 0.0, %v3638
        %v3640 = vpop.f32.mrb[0].mxu0
        %v3641 = vpop.f32.mrb[0].mxu0
        %v3642 = vadd.f32 0.0, %v3641
        %v3643 = vpop.f32.mrb[0].mxu0
        %3644 = vmatprep.mubr.bf16.mxu0 0
        %3645 = vmatmul.mubr.bf16.gmra.mrb[0].mxu0 %v3521
        %v3646 = vpop.f32.mrb[0].mxu0
        %v3647 = vadd.f32 0.0, %v3646
        %v3648 = vpop.f32.mrb[0].mxu0
        %v3649 = vpop.f32.mrb[0].mxu0
        %v3650 = vadd.f32 0.0, %v3649
        %v3651 = vpop.f32.mrb[0].mxu0
        %3652 = vmatprep.mubr.bf16.mxu0 0
        %3653 = vmatmul.mubr.bf16.gmra.mrb[0].mxu0 %v3522
        %v3654 = vpop.f32.mrb[0].mxu0
        %v3655 = vadd.f32 0.0, %v3654
        %v3656 = vpop.f32.mrb[0].mxu0
        %v3657 = vpop.f32.mrb[0].mxu0
        %v3658 = vadd.f32 0.0, %v3657
        %v3659 = vpop.f32.mrb[0].mxu0
        %3660 = vmatprep.mubr.bf16.mxu0 0
        %3661 = vmatmul.mubr.bf16.gmra.mrb[0].mxu0 %v3523
        %v3662 = vpop.f32.mrb[0].mxu0
        %v3663 = vpop.f32.mrb[0].mxu0
        %v3664 = vpop.f32.mrb[0].mxu0
        %v3665 = vpop.f32.mrb[0].mxu0
        %3666 = vdwg.mxu0
        %v3667 = vadd.f32 %v3466, %v3626
        %v3668 = vadd.f32 %v3471, %v3631
        %v3669 = vadd.f32 %v3474, %v3634
        %v3670 = vadd.f32 %v3479, %v3639
        %v3671 = vadd.f32 %v3482, %v3642
        %v3672 = vadd.f32 %v3487, %v3647
        %v3673 = vadd.f32 %v3490, %v3650
        %v3674 = vadd.f32 %v3495, %v3655
        %v3675 = vadd.f32 %v3498, %v3658
        %s3676 = scalar_lea.vmem [#allocation8], 5
        %v3677 = vld [vmem:[%s3676] sm:$0x1]
        %v3679 = vlaneseq
        %v3680 = vshrl.u32 %v3679, 7
        %v3681 = vsub.s32 0, %v3680
        %v3682 = vrot.slane %v3677, %v3681
        %v3684 = vadd.f32 %v3667, %v3682
        %v3685 = vadd.f32 %v3668, %v3682
        %v3686 = vadd.f32 %v3669, %v3682
        %v3687 = vadd.f32 %v3670, %v3682
        %v3688 = vadd.f32 %v3671, %v3682
        %v3689 = vadd.f32 %v3672, %v3682
        %v3690 = vadd.f32 %v3673, %v3682
        %v3691 = vadd.f32 %v3674, %v3682
        %v3692 = vadd.f32 %v3675, %v3682
        %v3693 = vadd.f32 %v2573, %v3684
        %v3694 = vadd.f32 %v2574, %v3685
        %v3695 = vadd.f32 %v2575, %v3686
        %v3696 = vadd.f32 %v2576, %v3687
        %v3697 = vadd.f32 %v2577, %v3688
        %v3698 = vadd.f32 %v2578, %v3689
        %v3699 = vadd.f32 %v2579, %v3690
        %v3700 = vadd.f32 %v2580, %v3691
        %v3701 = vadd.f32 %v2581, %v3692
        %3702 = vst [vmem:[%s166 - $0x4] sm:$0xf0] %v3693
        %3703 = vst [vmem:[%s166 + $0x4] sm:$0xff] %v3694
        %3704 = vst [vmem:[%s166 + $0xc] sm:$0xff] %v3695
        %3705 = vst [vmem:[%s166 + $0x14] sm:$0xff] %v3696
        %3706 = vst [vmem:[%s166 + $0x1c] sm:$0xff] %v3697
        %3707 = vst [vmem:[%s166 + $0x24] sm:$0xff] %v3698
        %3708 = vst [vmem:[%s166 + $0x2c] sm:$0xff] %v3699
        %3709 = vst [vmem:[%s166 + $0x34] sm:$0xff] %v3700
        %3710 = vst [vmem:[%s166 + $0x3c] sm:$0xf] %v3701
        %s3711 = sand.u32 %s83, 1
        %s3712 = scalar_lea.sflag [#allocation7], %s3711
        %s3713 = sand.u32 %s83, 1
        %s3714 = smul.addr %s3713, 64
        %s3715 = scalar_lea.vmem [#allocation10], %s3714
        // Predicated region
        $region53: #{tpu_custom_call.1} parent=27 // pred_check
          %p3716 = pneg %p93
        $region54: #{tpu_custom_call.1} parent=27 // pred_check_branch
          %3718 = sbr.rel (%p3716) target = $region56
        $region55: #{tpu_custom_call.1} parent=27 // pred_region
          %s3719 = smul.u32 8, %s24
          %s3721 = ssub.s32 1024, 1024
          %3722 = vsyncadd %s3712, %s3721
          %s3723 = smul.addr %s23, 16
          %s3724 = sadd.s32 %s3719, %s3723
          %s3725 = smul.addr %s3724, 128
          %s3726 = scalar_lea.hbm %s3, %s3725
          %s3727 = sshll.u32 %s3715, 4
          %s3728 = int_to_ptr.vmem [resolvable:$true] %s3727
          %3733 = dma.vmem_to_hbm [thread:$0]  %s3728, 1024, %s3726, %s3712, 128, 128, 8
        $region56: #{tpu_custom_call.1} parent=27 // pred_fallthru
          _
      $region28: #{tpu_custom_call.1} parent=5 // pred_fallthru
        _
      %p3734 = scmp.le.s32.totalorder 2, %s14
      // Predicated region
      $region57: #{tpu_custom_call.1} parent=5 // pred_check
        %p3735 = pneg %p3734
      $region58: #{tpu_custom_call.1} parent=5 // pred_check_branch
        %3737 = sbr.rel (%p3735) target = $region60
      $region59: #{tpu_custom_call.1} parent=5 // pred_region
        %s3738 = ssub.s32 %s14, 2
        // Predicated region
        $region61: #{tpu_custom_call.1} parent=59 // pred_check
          %p3739 = pneg %p99
        $region62: #{tpu_custom_call.1} parent=59 // pred_check_branch
          %3741 = sbr.rel (%p3739) target = $region64
        $region63: #{tpu_custom_call.1} parent=59 // pred_region
          %s3742 = sand.u32 %s84, 1
          %s3743 = scalar_lea.sflag [#allocation7], %s3742
          %s3744 = sand.u32 %s84, 1
          %s3745 = smul.addr %s3744, 64
          %s3746 = scalar_lea.vmem [#allocation10], %s3745
          %3747 = dma.done %s3743, 1024
        $region64: #{tpu_custom_call.1} parent=59 // pred_fallthru
          _
      $region60: #{tpu_custom_call.1} parent=5 // pred_fallthru
        _
    $region6: #{tpu_custom_call.1} parent=1 // loop_footer
      %s18 = sadd.s32 1, %s14
    $region7: #{tpu_custom_call.1} parent=1 // loop_footer_branch
      %13 = sbr.rel target = $region3
    $region8: #{tpu_custom_call.1} parent=1 // loop_exit
      _
    %3748 = vsyncpa [#allocation6], 1
    %s3749 = scalar_lea.sflag [#allocation6], 1
    %3750 = vsyncpa %s3749, 1
    %3751 = vsyncpa [#allocation9], 1
    %3752 = vsyncpa [#allocation7], 1
    %s3753 = scalar_lea.sflag [#allocation7], 1
    %3754 = vsyncpa %s3753, 1
  %3755 = vsyncmov [#allocation4]
  %s3756 = vpop.sfrf %3755
  %p3757 = scmp.eq.s32.totalorder %s3756, 0
  %p3758 = pneg %p3757
  %3760 = shalt.err (%p3758)
  %s3761 = scalar_lea.sflag [#allocation4], 1
  %3762 = vsyncmov %s3761
  %s3763 = vpop.sfrf %3762
  %p3764 = scmp.eq.s32.totalorder %s3763, 0
  %p3765 = pneg %p3764
  %3767 = shalt.err (%p3765)

</llo_original>
